<compile_context>
chip_gen: v5e
topology: v5e:2x2
jax: 0.10.0
libtpu: 0.0.40
codegen_flags: <defaults>
</compile_context>

<pallas_src>
import jax
import jax.numpy as jnp
from jax.experimental import pallas as pl
from jax.experimental.pallas import tpu as pltpu

LANE = 128
SUBLANE = 8


def mlp_kernel(x_ref,
               w1_ref, b1_ref,
               w2_ref, b2_ref,
               w3_ref, b3_ref,
               w4_ref, b4_ref,
               o_ref):
    # x tile arrives as f32 straight from HBM; cast to bf16 here (VPU, hidden
    # under the fc1 MXU matmul).  Weights are bf16, biases f32, all fully VMEM
    # resident (constant index_map across the grid).
    x = x_ref[...].astype(jnp.bfloat16)

    # fc1 + ReLU  (bf16 MXU matmul, f32 accumulation; ReLU in f32 on the VPU,
    # then cast back to bf16 so layers 2-4 stay on the bf16 MXU path).
    h1 = jnp.dot(x, w1_ref[...], preferred_element_type=jnp.float32) + b1_ref[...]
    h1 = jnp.maximum(h1, 0.0).astype(jnp.bfloat16)
    # TODO(synk): nn.Dropout(0.2) is eval-mode identity here; training-mode
    # stochastic masking would need pltpu.prng_seed / pltpu.prng_random_bits.

    h2 = jnp.dot(h1, w2_ref[...], preferred_element_type=jnp.float32) + b2_ref[...]
    h2 = jnp.maximum(h2, 0.0).astype(jnp.bfloat16)

    h3 = jnp.dot(h2, w3_ref[...], preferred_element_type=jnp.float32) + b3_ref[...]
    h3 = jnp.maximum(h3, 0.0).astype(jnp.bfloat16)

    # fc4 (no activation); w4/b4 are lane-padded to 128 output cols (zeros) so
    # this store is an unmasked, lane-dense vst.
    h4 = jnp.dot(h3, w4_ref[...], preferred_element_type=jnp.float32) + b4_ref[...]
    o_ref[...] = h4.astype(o_ref.dtype)


def _default_batch_tile(B):
    """Pick the batch tile.

    Large enough (up to 512 rows) to amortize per-grid-step overhead and the
    MXU RHS (weight) pushes, but with >= 2 grid steps whenever B allows it so
    that v7x's two TensorCores both get work under the "parallel" grid axis.
    Tiles are sublane-aligned (multiple of 8) unless B itself is < 8, in which
    case the block equals the full batch dim (allowed by the (8,128) rule).
    """
    if B <= SUBLANE:
        return B
    half = pl.cdiv(B, 2)
    tile = min(512, ((half + SUBLANE - 1) // SUBLANE) * SUBLANE)
    return max(SUBLANE, tile)


def mlp_forward(x, params, *, batch_tile=None):
    """x: (B, C, H, W) float32.  params: dict of bf16 weights / f32 biases."""
    B = x.shape[0]
    x_flat = x.reshape(B, -1)            # f32; same row-major order as torch .view
    in_dim = x_flat.shape[1]

    if batch_tile is None:
        batch_tile = _default_batch_tile(B)

    # Lane-pad the final layer: (128, 10) -> (128, 128), bias (1, 10) -> (1, 128).
    w4, b4 = params["w4"], params["b4"]
    out_features = w4.shape[1]
    out_pad = (-out_features) % LANE
    w4p = jnp.pad(w4, ((0, 0), (0, out_pad)))
    b4p = jnp.pad(b4, ((0, 0), (0, out_pad)))
    out_dim = out_features + out_pad

    # Ragged last tile handled by Pallas (masked output writes); no jnp.pad copy of x.
    grid = pl.cdiv(B, batch_tile)

    full = lambda a: pl.BlockSpec(a.shape, lambda i: (0, 0))

    # Advisory cost hint for XLA scheduling around the kernel.
    flops = 2 * B * (in_dim * params["w1"].shape[1]
                     + params["w2"].shape[0] * params["w2"].shape[1]
                     + params["w3"].shape[0] * params["w3"].shape[1]
                     + params["w4"].shape[0] * out_dim)
    bytes_accessed = (
        x_flat.size * x_flat.dtype.itemsize
        + sum(params[f"w{i}"].size * params[f"w{i}"].dtype.itemsize for i in range(1, 5))
        + sum(params[f"b{i}"].size * params[f"b{i}"].dtype.itemsize for i in range(1, 5))
        + B * out_dim * 4)

    out = pl.pallas_call(
        mlp_kernel,
        out_shape=jax.ShapeDtypeStruct((B, out_dim), jnp.float32),
        grid_spec=pltpu.PrefetchScalarGridSpec(
            num_scalar_prefetch=0,
            grid=(grid,),
            in_specs=[
                pl.BlockSpec((batch_tile, in_dim), lambda i: (i, 0)),  # x tile (f32)
                full(params["w1"]), full(params["b1"]),
                full(params["w2"]), full(params["b2"]),
                full(params["w3"]), full(params["b3"]),
                full(w4p), full(b4p),
            ],
            out_specs=pl.BlockSpec((batch_tile, out_dim), lambda i: (i, 0)),
        ),
        compiler_params=pltpu.CompilerParams(
            dimension_semantics=("parallel",),   # shard batch tiles across TCs (v7x)
            vmem_limit_bytes=40 * 1024 * 1024,   # explicit: > v5e's 16 MiB default,
                                                 # < v7x's 64 MiB physical
        ),
        cost_estimate=pl.CostEstimate(flops=flops, transcendentals=0,
                                      bytes_accessed=bytes_accessed),
    )(x_flat,
      params["w1"], params["b1"],
      params["w2"], params["b2"],
      params["w3"], params["b3"],
      w4p, b4p)

    return out[:, :out_features]


def init_params(key, input_size=3072, hidden_sizes=(512, 256, 128), output_size=10):
    """Deterministic PyTorch-style init; weights stored (in, out) in bf16."""
    dims = [input_size, *hidden_sizes, output_size]
    params = {}
    for idx, (fan_in, fan_out) in enumerate(zip(dims[:-1], dims[1:]), start=1):
        key, kw, kb = jax.random.split(key, 3)
        bound = 1.0 / jnp.sqrt(fan_in)
        w = jax.random.uniform(kw, (fan_in, fan_out), jnp.float32,
                               minval=-bound, maxval=bound)
        b = jax.random.uniform(kb, (1, fan_out), jnp.float32,
                               minval=-bound, maxval=bound)
        params[f"w{idx}"] = w.astype(jnp.bfloat16)  # bf16: half HBM traffic, native MXU path
        params[f"b{idx}"] = b                       # biases stay f32 (added post f32-accum)
    return params


def mlp_reference(x, params):
    """Pure-JAX reference with identical bf16/f32-accum semantics."""
    h = x.reshape(x.shape[0], -1).astype(jnp.bfloat16)
    for idx in (1, 2, 3):
        h = jnp.dot(h, params[f"w{idx}"],
                    preferred_element_type=jnp.float32) + params[f"b{idx}"]
        h = jnp.maximum(h, 0.0).astype(jnp.bfloat16)
    return jnp.dot(h, params["w4"],
                   preferred_element_type=jnp.float32) + params["b4"]


if __name__ == "__main__":
    key = jax.random.PRNGKey(0)
    k_param, k_x1, k_x2 = jax.random.split(key, 3)

    params = init_params(k_param)

    # Small CIFAR-like input consistent with input_size=3072: (B, 3, 32, 32).
    B = 8
    x = jax.random.normal(k_x1, (B, 3, 32, 32), dtype=jnp.float32)

    out = jax.block_until_ready(mlp_forward(x, params))
    ref = jax.block_until_ready(mlp_reference(x, params))
    assert out.shape == (B, 10)
    assert jnp.allclose(out, ref, atol=1e-2, rtol=1e-2), "mismatch vs reference"

    # Ragged-batch check (no wrapper-side padding; last tile is partial).
    B2 = 20
    x2 = jax.random.normal(k_x2, (B2, 3, 32, 32), dtype=jnp.float32)
    out2 = jax.block_until_ready(mlp_forward(x2, params))
    ref2 = jax.block_until_ready(mlp_reference(x2, params))
    assert out2.shape == (B2, 10)
    assert jnp.allclose(out2, ref2, atol=1e-2, rtol=1e-2), "ragged-batch mismatch"

    print("KERNEL_OK")
</pallas_src>

<mosaic_0001>
module attributes {stable_mosaic.version = 11 : i64} {
  func.func @mlp_kernel(%arg0: i32, %arg1: memref<8x3072xf32, #tpu.memory_space<vmem>>, %arg2: memref<3072x512xbf16, #tpu.memory_space<vmem>>, %arg3: memref<1x512xf32, #tpu.memory_space<vmem>>, %arg4: memref<512x256xbf16, #tpu.memory_space<vmem>>, %arg5: memref<1x256xf32, #tpu.memory_space<vmem>>, %arg6: memref<256x128xbf16, #tpu.memory_space<vmem>>, %arg7: memref<1x128xf32, #tpu.memory_space<vmem>>, %arg8: memref<128x128xbf16, #tpu.memory_space<vmem>>, %arg9: memref<1x128xf32, #tpu.memory_space<vmem>>, %arg10: memref<8x128xf32, #tpu.memory_space<vmem>>) attributes {dimension_semantics = [#tpu.dimension_semantics<parallel>], iteration_bounds = array<i64: 1>, scalar_prefetch = 0 : i64, scratch_operands = 0 : i64, tpu.core_type = #tpu.core_type<tc>, window_params = [{transform_indices = @transform_0, window_bounds = array<i64: 8, 3072>}, {pipeline_mode = #tpu.pipeline_mode<synchronous>, transform_indices = @transform_1, window_bounds = array<i64: 3072, 512>}, {pipeline_mode = #tpu.pipeline_mode<synchronous>, transform_indices = @transform_2, window_bounds = array<i64: 1, 512>}, {pipeline_mode = #tpu.pipeline_mode<synchronous>, transform_indices = @transform_3, window_bounds = array<i64: 512, 256>}, {pipeline_mode = #tpu.pipeline_mode<synchronous>, transform_indices = @transform_4, window_bounds = array<i64: 1, 256>}, {pipeline_mode = #tpu.pipeline_mode<synchronous>, transform_indices = @transform_5, window_bounds = array<i64: 256, 128>}, {pipeline_mode = #tpu.pipeline_mode<synchronous>, transform_indices = @transform_6, window_bounds = array<i64: 1, 128>}, {pipeline_mode = #tpu.pipeline_mode<synchronous>, transform_indices = @transform_7, window_bounds = array<i64: 128, 128>}, {pipeline_mode = #tpu.pipeline_mode<synchronous>, transform_indices = @transform_8, window_bounds = array<i64: 1, 128>}, {transform_indices = @transform_9, window_bounds = array<i64: 8, 128>}]} {
    %c0 = arith.constant 0 : index
    %c0_0 = arith.constant 0 : index
    %0 = vector.load %arg1[%c0, %c0_0] : memref<8x3072xf32, #tpu.memory_space<vmem>>, vector<8x3072xf32>
    %1 = arith.truncf %0 : vector<8x3072xf32> to vector<8x3072xbf16>
    %c0_1 = arith.constant 0 : index
    %c0_2 = arith.constant 0 : index
    %2 = vector.load %arg2[%c0_1, %c0_2] : memref<3072x512xbf16, #tpu.memory_space<vmem>>, vector<3072x512xbf16>
    %cst = arith.constant dense<0.000000e+00> : vector<8x512xf32>
    %3 = tpu.matmul %1, %2, %cst {dimension_numbers = #tpu.dot_dimension_numbers<[1], [0], [0], [1], [0, 0, 1, 1], [], []>} : vector<8x3072xbf16>, vector<3072x512xbf16>, vector<8x512xf32> -> vector<8x512xf32>
    %c0_3 = arith.constant 0 : index
    %c0_4 = arith.constant 0 : index
    %4 = vector.load %arg3[%c0_3, %c0_4] : memref<1x512xf32, #tpu.memory_space<vmem>>, vector<1x512xf32>
    %5 = vector.broadcast %4 : vector<1x512xf32> to vector<8x512xf32>
    %6 = arith.addf %3, %5 : vector<8x512xf32>
    %cst_5 = arith.constant 0.000000e+00 : f32
    %7 = vector.broadcast %cst_5 : f32 to vector<8x512xf32>
    %8 = arith.maximumf %6, %7 : vector<8x512xf32>
    %9 = arith.truncf %8 : vector<8x512xf32> to vector<8x512xbf16>
    %c0_6 = arith.constant 0 : index
    %c0_7 = arith.constant 0 : index
    %10 = vector.load %arg4[%c0_6, %c0_7] : memref<512x256xbf16, #tpu.memory_space<vmem>>, vector<512x256xbf16>
    %cst_8 = arith.constant dense<0.000000e+00> : vector<8x256xf32>
    %11 = tpu.matmul %9, %10, %cst_8 {dimension_numbers = #tpu.dot_dimension_numbers<[1], [0], [0], [1], [0, 0, 1, 1], [], []>} : vector<8x512xbf16>, vector<512x256xbf16>, vector<8x256xf32> -> vector<8x256xf32>
    %c0_9 = arith.constant 0 : index
    %c0_10 = arith.constant 0 : index
    %12 = vector.load %arg5[%c0_9, %c0_10] : memref<1x256xf32, #tpu.memory_space<vmem>>, vector<1x256xf32>
    %13 = vector.broadcast %12 : vector<1x256xf32> to vector<8x256xf32>
    %14 = arith.addf %11, %13 : vector<8x256xf32>
    %cst_11 = arith.constant 0.000000e+00 : f32
    %15 = vector.broadcast %cst_11 : f32 to vector<8x256xf32>
    %16 = arith.maximumf %14, %15 : vector<8x256xf32>
    %17 = arith.truncf %16 : vector<8x256xf32> to vector<8x256xbf16>
    %c0_12 = arith.constant 0 : index
    %c0_13 = arith.constant 0 : index
    %18 = vector.load %arg6[%c0_12, %c0_13] : memref<256x128xbf16, #tpu.memory_space<vmem>>, vector<256x128xbf16>
    %cst_14 = arith.constant dense<0.000000e+00> : vector<8x128xf32>
    %19 = tpu.matmul %17, %18, %cst_14 {dimension_numbers = #tpu.dot_dimension_numbers<[1], [0], [0], [1], [0, 0, 1, 1], [], []>} : vector<8x256xbf16>, vector<256x128xbf16>, vector<8x128xf32> -> vector<8x128xf32>
    %c0_15 = arith.constant 0 : index
    %c0_16 = arith.constant 0 : index
    %20 = vector.load %arg7[%c0_15, %c0_16] : memref<1x128xf32, #tpu.memory_space<vmem>>, vector<1x128xf32>
    %21 = vector.broadcast %20 : vector<1x128xf32> to vector<8x128xf32>
    %22 = arith.addf %19, %21 : vector<8x128xf32>
    %cst_17 = arith.constant 0.000000e+00 : f32
    %23 = vector.broadcast %cst_17 : f32 to vector<8x128xf32>
    %24 = arith.maximumf %22, %23 : vector<8x128xf32>
    %25 = arith.truncf %24 : vector<8x128xf32> to vector<8x128xbf16>
    %c0_18 = arith.constant 0 : index
    %c0_19 = arith.constant 0 : index
    %26 = vector.load %arg8[%c0_18, %c0_19] : memref<128x128xbf16, #tpu.memory_space<vmem>>, vector<128x128xbf16>
    %cst_20 = arith.constant dense<0.000000e+00> : vector<8x128xf32>
    %27 = tpu.matmul %25, %26, %cst_20 {dimension_numbers = #tpu.dot_dimension_numbers<[1], [0], [0], [1], [0, 0, 1, 1], [], []>} : vector<8x128xbf16>, vector<128x128xbf16>, vector<8x128xf32> -> vector<8x128xf32>
    %c0_21 = arith.constant 0 : index
    %c0_22 = arith.constant 0 : index
    %28 = vector.load %arg9[%c0_21, %c0_22] : memref<1x128xf32, #tpu.memory_space<vmem>>, vector<1x128xf32>
    %29 = vector.broadcast %28 : vector<1x128xf32> to vector<8x128xf32>
    %30 = arith.addf %27, %29 : vector<8x128xf32>
    %c0_23 = arith.constant 0 : index
    %c0_24 = arith.constant 0 : index
    %31 = vector.load %arg10[%c0_23, %c0_24] : memref<8x128xf32, #tpu.memory_space<vmem>>, vector<8x128xf32>
    tpu.vector_store %arg10[%c0_23, %c0_24], %30 {strides = array<i32>} : memref<8x128xf32, #tpu.memory_space<vmem>>, vector<8x128xf32>,
    return
  }
  func.func @transform_0(%arg0: i32) -> (i32, i32) {
    %c0_i32 = arith.constant 0 : i32
    %c0_i32_0 = arith.constant 0 : i32
    return %arg0, %c0_i32 : i32, i32
  }
  func.func @transform_1(%arg0: i32) -> (i32, i32) {
    %c0_i32 = arith.constant 0 : i32
    %c0_i32_0 = arith.constant 0 : i32
    %c0_i32_1 = arith.constant 0 : i32
    return %c0_i32, %c0_i32_0 : i32, i32
  }
  func.func @transform_2(%arg0: i32) -> (i32, i32) {
    %c0_i32 = arith.constant 0 : i32
    %c0_i32_0 = arith.constant 0 : i32
    %c0_i32_1 = arith.constant 0 : i32
    return %c0_i32, %c0_i32_0 : i32, i32
  }
  func.func @transform_3(%arg0: i32) -> (i32, i32) {
    %c0_i32 = arith.constant 0 : i32
    %c0_i32_0 = arith.constant 0 : i32
    %c0_i32_1 = arith.constant 0 : i32
    return %c0_i32, %c0_i32_0 : i32, i32
  }
  func.func @transform_4(%arg0: i32) -> (i32, i32) {
    %c0_i32 = arith.constant 0 : i32
    %c0_i32_0 = arith.constant 0 : i32
    %c0_i32_1 = arith.constant 0 : i32
    return %c0_i32, %c0_i32_0 : i32, i32
  }
  func.func @transform_5(%arg0: i32) -> (i32, i32) {
    %c0_i32 = arith.constant 0 : i32
    %c0_i32_0 = arith.constant 0 : i32
    %c0_i32_1 = arith.constant 0 : i32
    return %c0_i32, %c0_i32_0 : i32, i32
  }
  func.func @transform_6(%arg0: i32) -> (i32, i32) {
    %c0_i32 = arith.constant 0 : i32
    %c0_i32_0 = arith.constant 0 : i32
    %c0_i32_1 = arith.constant 0 : i32
    return %c0_i32, %c0_i32_0 : i32, i32
  }
  func.func @transform_7(%arg0: i32) -> (i32, i32) {
    %c0_i32 = arith.constant 0 : i32
    %c0_i32_0 = arith.constant 0 : i32
    %c0_i32_1 = arith.constant 0 : i32
    return %c0_i32, %c0_i32_0 : i32, i32
  }
  func.func @transform_8(%arg0: i32) -> (i32, i32) {
    %c0_i32 = arith.constant 0 : i32
    %c0_i32_0 = arith.constant 0 : i32
    %c0_i32_1 = arith.constant 0 : i32
    return %c0_i32, %c0_i32_0 : i32, i32
  }
  func.func @transform_9(%arg0: i32) -> (i32, i32) {
    %c0_i32 = arith.constant 0 : i32
    %c0_i32_0 = arith.constant 0 : i32
    return %arg0, %c0_i32 : i32, i32
  }
}

</mosaic_0001>

<llo_original>
// kernel: tpu_custom_call.1
$region0: #{tpu_custom_call.1}
  #allocation0 [shape = 'u32[]', space=smem, size = 0x4, offset = 0x4, fixed_abs, tag = 'smem constant byte address 0x4 - core index']
  #allocation1 [shape = 'u32[72,128]{1,0:T(1,128)}', space=vmem, size = 0x9000, scoped, tag = 'internal scratch']
  %s0 = inlined_call_operand.hbm [shape: f32[8,3072], index: 0, kind: input, shape index: {}]
  %s1 = inlined_call_operand.hbm [shape: bf16[3072,512], index: 1, kind: input, shape index: {}]
  %s2 = inlined_call_operand.hbm [shape: f32[1,512], index: 2, kind: input, shape index: {}]
  %s3 = inlined_call_operand.hbm [shape: bf16[512,256], index: 3, kind: input, shape index: {}]
  %s4 = inlined_call_operand.hbm [shape: f32[1,256], index: 4, kind: input, shape index: {}]
  %s5 = inlined_call_operand.hbm [shape: bf16[256,128], index: 5, kind: input, shape index: {}]
  %s6 = inlined_call_operand.hbm [shape: f32[1,128], index: 6, kind: input, shape index: {}]
  %s7 = inlined_call_operand.hbm [shape: bf16[128,128], index: 7, kind: input, shape index: {}]
  %s8 = inlined_call_operand.hbm [shape: f32[1,128], index: 8, kind: input, shape index: {}]
  %s9 = inlined_call_operand.hbm [shape: f32[8,128], index: 9, kind: output, shape index: {}]
  %s10 = sld [smem:[#allocation0]]
  $region82: #{tpu_custom_call.1} parent=0
    _
  %s12 = ssub.s32 1, %s10
  %s13 = scalar_select 0, %s12, %s10
  $region1: #{tpu_custom_call.1} parent=0
    #allocation2 [shape = 'u8[98304]{0}', space=vmem, size = 0x18000, scoped, tag = 'input window, operand 0, single buffered']
    #allocation3 [shape = 's32[1]{0}', space=sflag, size = 0x4, scoped, tag = 'scoped memory for tpu_custom_call.1']
    #allocation4 [shape = 's32[1]{0}', space=sflag, size = 0x4, scoped, tag = 'scoped memory for tpu_custom_call.1']
    #allocation5 [shape = 'u8[3145728]{0}', space=vmem, size = 0x300000, scoped, tag = 'input window, operand 1, single buffered']
    #allocation6 [shape = 's32[1]{0}', space=sflag, size = 0x4, scoped, tag = 'scoped memory for tpu_custom_call.1']
    #allocation7 [shape = 'u8[2048]{0}', space=vmem, size = 0x800, scoped, tag = 'input window, operand 2, single buffered']
    #allocation8 [shape = 'u8[262144]{0}', space=vmem, size = 0x40000, scoped, tag = 'input window, operand 3, single buffered']
    #allocation9 [shape = 's32[1]{0}', space=sflag, size = 0x4, scoped, tag = 'scoped memory for tpu_custom_call.1']
    #allocation10 [shape = 'u8[1024]{0}', space=vmem, size = 0x400, scoped, tag = 'input window, operand 4, single buffered']
    #allocation11 [shape = 'u8[65536]{0}', space=vmem, size = 0x10000, scoped, tag = 'input window, operand 5, single buffered']
    #allocation12 [shape = 's32[1]{0}', space=sflag, size = 0x4, scoped, tag = 'scoped memory for tpu_custom_call.1']
    #allocation13 [shape = 'u8[512]{0}', space=vmem, size = 0x400, scoped, tag = 'input window, operand 6, single buffered']
    #allocation14 [shape = 'u8[32768]{0}', space=vmem, size = 0x8000, scoped, tag = 'input window, operand 7, single buffered']
    #allocation15 [shape = 's32[1]{0}', space=sflag, size = 0x4, scoped, tag = 'scoped memory for tpu_custom_call.1']
    #allocation16 [shape = 'u8[512]{0}', space=vmem, size = 0x400, scoped, tag = 'input window, operand 8, single buffered']
    #allocation17 [shape = 'u8[4096]{0}', space=vmem, size = 0x1000, scoped, tag = 'output window, operand 0, single buffered']
    %14 = vsyncpa [#allocation3], 0
    %15 = vsyncpa [#allocation6], 0
    %16 = vsyncpa [#allocation9], 0
    %17 = vsyncpa [#allocation12], 0
    %18 = vsyncpa [#allocation15], 0
    %19 = vsyncpa [#allocation4], 0
    // Predicated region
    $region2: #{tpu_custom_call.1} parent=1 // pred_check
      _
    $region3: #{tpu_custom_call.1} parent=1 // pred_check_branch
      %21 = sbr.rel (0) target = $region5
    $region4: #{tpu_custom_call.1} parent=1 // pred_region
      %23 = vsyncadd [#allocation3], 0
      %s25 = sshll.u32 %s0, 4
      %s26 = int_to_ptr.hbm [resolvable:$true] %s25
      %s27 = sshll.u32 [#allocation2], 4
      %s28 = int_to_ptr.vmem [resolvable:$true] %s27
      %30 = dma.hbm_to_vmem [thread:$0]  %s26, 3072, %s28, [#allocation3]
    $region5: #{tpu_custom_call.1} parent=1 // pred_fallthru
      _
    // Predicated region
    $region6: #{tpu_custom_call.1} parent=1 // pred_check
      _
    $region7: #{tpu_custom_call.1} parent=1 // pred_check_branch
      %32 = sbr.rel (0) target = $region9
    $region8: #{tpu_custom_call.1} parent=1 // pred_region
      %34 = vsyncadd [#allocation6], 0
      %s35 = sshll.u32 %s1, 4
      %s36 = int_to_ptr.hbm [resolvable:$true] %s35
      %s37 = sshll.u32 [#allocation5], 4
      %s38 = int_to_ptr.vmem [resolvable:$true] %s37
      %43 = dma.hbm_to_vmem [thread:$0]  %s36, 98304, %s38, [#allocation6], 256, 256, 16
    $region9: #{tpu_custom_call.1} parent=1 // pred_fallthru
      _
    // Predicated region
    $region10: #{tpu_custom_call.1} parent=1 // pred_check
      _
    $region11: #{tpu_custom_call.1} parent=1 // pred_check_branch
      %45 = sbr.rel (0) target = $region13
    $region12: #{tpu_custom_call.1} parent=1 // pred_region
      %47 = vsyncadd [#allocation6], 0
      %s49 = sshll.u32 %s2, 4
      %s50 = int_to_ptr.hbm [resolvable:$true] %s49
      %s51 = sshll.u32 [#allocation7], 4
      %s52 = int_to_ptr.vmem [resolvable:$true] %s51
      %54 = dma.hbm_to_vmem [thread:$0]  %s50, 64, %s52, [#allocation6]
    $region13: #{tpu_custom_call.1} parent=1 // pred_fallthru
      _
    // Predicated region
    $region14: #{tpu_custom_call.1} parent=1 // pred_check
      _
    $region15: #{tpu_custom_call.1} parent=1 // pred_check_branch
      %56 = sbr.rel (0) target = $region17
    $region16: #{tpu_custom_call.1} parent=1 // pred_region
      %58 = vsyncadd [#allocation9], 0
      %s59 = sshll.u32 %s3, 4
      %s60 = int_to_ptr.hbm [resolvable:$true] %s59
      %s61 = sshll.u32 [#allocation8], 4
      %s62 = int_to_ptr.vmem [resolvable:$true] %s61
      %67 = dma.hbm_to_vmem [thread:$0]  %s60, 8192, %s62, [#allocation9], 128, 128, 8
    $region17: #{tpu_custom_call.1} parent=1 // pred_fallthru
      _
    // Predicated region
    $region18: #{tpu_custom_call.1} parent=1 // pred_check
      _
    $region19: #{tpu_custom_call.1} parent=1 // pred_check_branch
      %69 = sbr.rel (0) target = $region21
    $region20: #{tpu_custom_call.1} parent=1 // pred_region
      %71 = vsyncadd [#allocation9], 0
      %s73 = sshll.u32 %s4, 4
      %s74 = int_to_ptr.hbm [resolvable:$true] %s73
      %s75 = sshll.u32 [#allocation10], 4
      %s76 = int_to_ptr.vmem [resolvable:$true] %s75
      %78 = dma.hbm_to_vmem [thread:$0]  %s74, 32, %s76, [#allocation9]
    $region21: #{tpu_custom_call.1} parent=1 // pred_fallthru
      _
    // Predicated region
    $region22: #{tpu_custom_call.1} parent=1 // pred_check
      _
    $region23: #{tpu_custom_call.1} parent=1 // pred_check_branch
      %80 = sbr.rel (0) target = $region25
    $region24: #{tpu_custom_call.1} parent=1 // pred_region
      %82 = vsyncadd [#allocation12], 0
      %s83 = sshll.u32 %s5, 4
      %s84 = int_to_ptr.hbm [resolvable:$true] %s83
      %s85 = sshll.u32 [#allocation11], 4
      %s86 = int_to_ptr.vmem [resolvable:$true] %s85
      %91 = dma.hbm_to_vmem [thread:$0]  %s84, 2048, %s86, [#allocation12], 64, 64, 4
    $region25: #{tpu_custom_call.1} parent=1 // pred_fallthru
      _
    // Predicated region
    $region26: #{tpu_custom_call.1} parent=1 // pred_check
      _
    $region27: #{tpu_custom_call.1} parent=1 // pred_check_branch
      %93 = sbr.rel (0) target = $region29
    $region28: #{tpu_custom_call.1} parent=1 // pred_region
      %95 = vsyncadd [#allocation12], 0
      %s97 = sshll.u32 %s6, 4
      %s98 = int_to_ptr.hbm [resolvable:$true] %s97
      %s99 = sshll.u32 [#allocation13], 4
      %s100 = int_to_ptr.vmem [resolvable:$true] %s99
      %102 = dma.hbm_to_vmem [thread:$0]  %s98, 16, %s100, [#allocation12]
    $region29: #{tpu_custom_call.1} parent=1 // pred_fallthru
      _
    // Predicated region
    $region30: #{tpu_custom_call.1} parent=1 // pred_check
      _
    $region31: #{tpu_custom_call.1} parent=1 // pred_check_branch
      %104 = sbr.rel (0) target = $region33
    $region32: #{tpu_custom_call.1} parent=1 // pred_region
      %106 = vsyncadd [#allocation15], 0
      %s107 = sshll.u32 %s7, 4
      %s108 = int_to_ptr.hbm [resolvable:$true] %s107
      %s109 = sshll.u32 [#allocation14], 4
      %s110 = int_to_ptr.vmem [resolvable:$true] %s109
      %115 = dma.hbm_to_vmem [thread:$0]  %s108, 1024, %s110, [#allocation15], 64, 64, 4
    $region33: #{tpu_custom_call.1} parent=1 // pred_fallthru
      _
    // Predicated region
    $region34: #{tpu_custom_call.1} parent=1 // pred_check
      _
    $region35: #{tpu_custom_call.1} parent=1 // pred_check_branch
      %117 = sbr.rel (0) target = $region37
    $region36: #{tpu_custom_call.1} parent=1 // pred_region
      %119 = vsyncadd [#allocation15], 0
      %s121 = sshll.u32 %s8, 4
      %s122 = int_to_ptr.hbm [resolvable:$true] %s121
      %s123 = sshll.u32 [#allocation16], 4
      %s124 = int_to_ptr.vmem [resolvable:$true] %s123
      %126 = dma.hbm_to_vmem [thread:$0]  %s122, 16, %s124, [#allocation15]
    $region37: #{tpu_custom_call.1} parent=1 // pred_fallthru
      _
    // Predicated region
    $region38: #{tpu_custom_call.1} parent=1 // pred_check
      _
    $region39: #{tpu_custom_call.1} parent=1 // pred_check_branch
      %128 = sbr.rel (0) target = $region41
    $region40: #{tpu_custom_call.1} parent=1 // pred_region
      %130 = dma.done [#allocation3], 3072
    $region41: #{tpu_custom_call.1} parent=1 // pred_fallthru
      _
    // Predicated region
    $region42: #{tpu_custom_call.1} parent=1 // pred_check
      _
    $region43: #{tpu_custom_call.1} parent=1 // pred_check_branch
      %132 = sbr.rel (0) target = $region45
    $region44: #{tpu_custom_call.1} parent=1 // pred_region
      %134 = dma.done [#allocation6], 98304
    $region45: #{tpu_custom_call.1} parent=1 // pred_fallthru
      _
    // Predicated region
    $region46: #{tpu_custom_call.1} parent=1 // pred_check
      _
    $region47: #{tpu_custom_call.1} parent=1 // pred_check_branch
      %136 = sbr.rel (0) target = $region49
    $region48: #{tpu_custom_call.1} parent=1 // pred_region
      %138 = dma.done [#allocation6], 64
    $region49: #{tpu_custom_call.1} parent=1 // pred_fallthru
      _
    // Predicated region
    $region50: #{tpu_custom_call.1} parent=1 // pred_check
      _
    $region51: #{tpu_custom_call.1} parent=1 // pred_check_branch
      %140 = sbr.rel (0) target = $region53
    $region52: #{tpu_custom_call.1} parent=1 // pred_region
      %142 = dma.done [#allocation9], 8192
    $region53: #{tpu_custom_call.1} parent=1 // pred_fallthru
      _
    // Predicated region
    $region54: #{tpu_custom_call.1} parent=1 // pred_check
      _
    $region55: #{tpu_custom_call.1} parent=1 // pred_check_branch
      %144 = sbr.rel (0) target = $region57
    $region56: #{tpu_custom_call.1} parent=1 // pred_region
      %146 = dma.done [#allocation9], 32
    $region57: #{tpu_custom_call.1} parent=1 // pred_fallthru
      _
    // Predicated region
    $region58: #{tpu_custom_call.1} parent=1 // pred_check
      _
    $region59: #{tpu_custom_call.1} parent=1 // pred_check_branch
      %148 = sbr.rel (0) target = $region61
    $region60: #{tpu_custom_call.1} parent=1 // pred_region
      %150 = dma.done [#allocation12], 2048
    $region61: #{tpu_custom_call.1} parent=1 // pred_fallthru
      _
    // Predicated region
    $region62: #{tpu_custom_call.1} parent=1 // pred_check
      _
    $region63: #{tpu_custom_call.1} parent=1 // pred_check_branch
      %152 = sbr.rel (0) target = $region65
    $region64: #{tpu_custom_call.1} parent=1 // pred_region
      %154 = dma.done [#allocation12], 16
    $region65: #{tpu_custom_call.1} parent=1 // pred_fallthru
      _
    // Predicated region
    $region66: #{tpu_custom_call.1} parent=1 // pred_check
      _
    $region67: #{tpu_custom_call.1} parent=1 // pred_check_branch
      %156 = sbr.rel (0) target = $region69
    $region68: #{tpu_custom_call.1} parent=1 // pred_region
      %158 = dma.done [#allocation15], 1024
    $region69: #{tpu_custom_call.1} parent=1 // pred_fallthru
      _
    // Predicated region
    $region70: #{tpu_custom_call.1} parent=1 // pred_check
      _
    $region71: #{tpu_custom_call.1} parent=1 // pred_check_branch
      %160 = sbr.rel (0) target = $region73
    $region72: #{tpu_custom_call.1} parent=1 // pred_region
      %162 = dma.done [#allocation15], 16
    $region73: #{tpu_custom_call.1} parent=1 // pred_fallthru
      _
    %v163 = vld [vmem:[#allocation2] sm:$0xff]
    %v164 = vld [vmem:[#allocation2 + $0x8] sm:$0xff]
    %v165 = vld [vmem:[#allocation2 + $0x10] sm:$0xff]
    %v166 = vld [vmem:[#allocation2 + $0x18] sm:$0xff]
    %v167 = vld [vmem:[#allocation2 + $0x20] sm:$0xff]
    %v168 = vld [vmem:[#allocation2 + $0x28] sm:$0xff]
    %v169 = vld [vmem:[#allocation2 + $0x30] sm:$0xff]
    %v170 = vld [vmem:[#allocation2 + $0x38] sm:$0xff]
    %v171 = vld [vmem:[#allocation2 + $0x40] sm:$0xff]
    %v172 = vld [vmem:[#allocation2 + $0x48] sm:$0xff]
    %v173 = vld [vmem:[#allocation2 + $0x50] sm:$0xff]
    %v174 = vld [vmem:[#allocation2 + $0x58] sm:$0xff]
    %v175 = vld [vmem:[#allocation2 + $0x60] sm:$0xff]
    %v176 = vld [vmem:[#allocation2 + $0x68] sm:$0xff]
    %v177 = vld [vmem:[#allocation2 + $0x70] sm:$0xff]
    %v178 = vld [vmem:[#allocation2 + $0x78] sm:$0xff]
    %v179 = vld [vmem:[#allocation2 + $0x80] sm:$0xff]
    %v180 = vld [vmem:[#allocation2 + $0x88] sm:$0xff]
    %v181 = vld [vmem:[#allocation2 + $0x90] sm:$0xff]
    %v182 = vld [vmem:[#allocation2 + $0x98] sm:$0xff]
    %v183 = vld [vmem:[#allocation2 + $0xa0] sm:$0xff]
    %v184 = vld [vmem:[#allocation2 + $0xa8] sm:$0xff]
    %v185 = vld [vmem:[#allocation2 + $0xb0] sm:$0xff]
    %v186 = vld [vmem:[#allocation2 + $0xb8] sm:$0xff]
    %v187 = vpack.c.bf16 %v163, %v163
    %v188 = vpack.c.bf16 %v164, %v164
    %v189 = vpack.c.bf16 %v165, %v165
    %v190 = vpack.c.bf16 %v166, %v166
    %v191 = vpack.c.bf16 %v167, %v167
    %v192 = vpack.c.bf16 %v168, %v168
    %v193 = vpack.c.bf16 %v169, %v169
    %v194 = vpack.c.bf16 %v170, %v170
    %v195 = vpack.c.bf16 %v171, %v171
    %v196 = vpack.c.bf16 %v172, %v172
    %v197 = vpack.c.bf16 %v173, %v173
    %v198 = vpack.c.bf16 %v174, %v174
    %v199 = vpack.c.bf16 %v175, %v175
    %v200 = vpack.c.bf16 %v176, %v176
    %v201 = vpack.c.bf16 %v177, %v177
    %v202 = vpack.c.bf16 %v178, %v178
    %v203 = vpack.c.bf16 %v179, %v179
    %v204 = vpack.c.bf16 %v180, %v180
    %v205 = vpack.c.bf16 %v181, %v181
    %v206 = vpack.c.bf16 %v182, %v182
    %v207 = vpack.c.bf16 %v183, %v183
    %v208 = vpack.c.bf16 %v184, %v184
    %v209 = vpack.c.bf16 %v185, %v185
    %v210 = vpack.c.bf16 %v186, %v186
    %v211 = vld [vmem:[#allocation5] sm:$0xff]
    %v212 = vld [vmem:[#allocation5 + $0x8] sm:$0xff]
    %v213 = vld [vmem:[#allocation5 + $0x10] sm:$0xff]
    %v214 = vld [vmem:[#allocation5 + $0x18] sm:$0xff]
    %v215 = vld [vmem:[#allocation5 + $0x20] sm:$0xff]
    %v216 = vld [vmem:[#allocation5 + $0x28] sm:$0xff]
    %v217 = vld [vmem:[#allocation5 + $0x30] sm:$0xff]
    %v218 = vld [vmem:[#allocation5 + $0x38] sm:$0xff]
    %v219 = vld [vmem:[#allocation5 + $0x40] sm:$0xff]
    %v220 = vld [vmem:[#allocation5 + $0x48] sm:$0xff]
    %v221 = vld [vmem:[#allocation5 + $0x50] sm:$0xff]
    %v222 = vld [vmem:[#allocation5 + $0x58] sm:$0xff]
    %v223 = vld [vmem:[#allocation5 + $0x60] sm:$0xff]
    %v224 = vld [vmem:[#allocation5 + $0x68] sm:$0xff]
    %v225 = vld [vmem:[#allocation5 + $0x70] sm:$0xff]
    %v226 = vld [vmem:[#allocation5 + $0x78] sm:$0xff]
    %v227 = vld [vmem:[#allocation5 + $0x80] sm:$0xff]
    %v228 = vld [vmem:[#allocation5 + $0x88] sm:$0xff]
    %v229 = vld [vmem:[#allocation5 + $0x90] sm:$0xff]
    %v230 = vld [vmem:[#allocation5 + $0x98] sm:$0xff]
    %v231 = vld [vmem:[#allocation5 + $0xa0] sm:$0xff]
    %v232 = vld [vmem:[#allocation5 + $0xa8] sm:$0xff]
    %v233 = vld [vmem:[#allocation5 + $0xb0] sm:$0xff]
    %v234 = vld [vmem:[#allocation5 + $0xb8] sm:$0xff]
    %v235 = vld [vmem:[#allocation5 + $0xc0] sm:$0xff]
    %v236 = vld [vmem:[#allocation5 + $0xc8] sm:$0xff]
    %v237 = vld [vmem:[#allocation5 + $0xd0] sm:$0xff]
    %v238 = vld [vmem:[#allocation5 + $0xd8] sm:$0xff]
    %v239 = vld [vmem:[#allocation5 + $0xe0] sm:$0xff]
    %v240 = vld [vmem:[#allocation5 + $0xe8] sm:$0xff]
    %v241 = vld [vmem:[#allocation5 + $0xf0] sm:$0xff]
    %v242 = vld [vmem:[#allocation5 + $0xf8] sm:$0xff]
    %v243 = vld [vmem:[#allocation5 + $0x100] sm:$0xff]
    %v244 = vld [vmem:[#allocation5 + $0x108] sm:$0xff]
    %v245 = vld [vmem:[#allocation5 + $0x110] sm:$0xff]
    %v246 = vld [vmem:[#allocation5 + $0x118] sm:$0xff]
    %v247 = vld [vmem:[#allocation5 + $0x120] sm:$0xff]
    %v248 = vld [vmem:[#allocation5 + $0x128] sm:$0xff]
    %v249 = vld [vmem:[#allocation5 + $0x130] sm:$0xff]
    %v250 = vld [vmem:[#allocation5 + $0x138] sm:$0xff]
    %v251 = vld [vmem:[#allocation5 + $0x140] sm:$0xff]
    %v252 = vld [vmem:[#allocation5 + $0x148] sm:$0xff]
    %v253 = vld [vmem:[#allocation5 + $0x150] sm:$0xff]
    %v254 = vld [vmem:[#allocation5 + $0x158] sm:$0xff]
    %v255 = vld [vmem:[#allocation5 + $0x160] sm:$0xff]
    %v256 = vld [vmem:[#allocation5 + $0x168] sm:$0xff]
    %v257 = vld [vmem:[#allocation5 + $0x170] sm:$0xff]
    %v258 = vld [vmem:[#allocation5 + $0x178] sm:$0xff]
    %v259 = vld [vmem:[#allocation5 + $0x180] sm:$0xff]
    %v260 = vld [vmem:[#allocation5 + $0x188] sm:$0xff]
    %v261 = vld [vmem:[#allocation5 + $0x190] sm:$0xff]
    %v262 = vld [vmem:[#allocation5 + $0x198] sm:$0xff]
    %v263 = vld [vmem:[#allocation5 + $0x1a0] sm:$0xff]
    %v264 = vld [vmem:[#allocation5 + $0x1a8] sm:$0xff]
    %v265 = vld [vmem:[#allocation5 + $0x1b0] sm:$0xff]
    %v266 = vld [vmem:[#allocation5 + $0x1b8] sm:$0xff]
    %v267 = vld [vmem:[#allocation5 + $0x1c0] sm:$0xff]
    %v268 = vld [vmem:[#allocation5 + $0x1c8] sm:$0xff]
    %v269 = vld [vmem:[#allocation5 + $0x1d0] sm:$0xff]
    %v270 = vld [vmem:[#allocation5 + $0x1d8] sm:$0xff]
    %v271 = vld [vmem:[#allocation5 + $0x1e0] sm:$0xff]
    %v272 = vld [vmem:[#allocation5 + $0x1e8] sm:$0xff]
    %v273 = vld [vmem:[#allocation5 + $0x1f0] sm:$0xff]
    %v274 = vld [vmem:[#allocation5 + $0x1f8] sm:$0xff]
    %v275 = vld [vmem:[#allocation5 + $0x200] sm:$0xff]
    %v276 = vld [vmem:[#allocation5 + $0x208] sm:$0xff]
    %v277 = vld [vmem:[#allocation5 + $0x210] sm:$0xff]
    %v278 = vld [vmem:[#allocation5 + $0x218] sm:$0xff]
    %v279 = vld [vmem:[#allocation5 + $0x220] sm:$0xff]
    %v280 = vld [vmem:[#allocation5 + $0x228] sm:$0xff]
    %v281 = vld [vmem:[#allocation5 + $0x230] sm:$0xff]
    %v282 = vld [vmem:[#allocation5 + $0x238] sm:$0xff]
    %v283 = vld [vmem:[#allocation5 + $0x240] sm:$0xff]
    %v284 = vld [vmem:[#allocation5 + $0x248] sm:$0xff]
    %v285 = vld [vmem:[#allocation5 + $0x250] sm:$0xff]
    %v286 = vld [vmem:[#allocation5 + $0x258] sm:$0xff]
    %v287 = vld [vmem:[#allocation5 + $0x260] sm:$0xff]
    %v288 = vld [vmem:[#allocation5 + $0x268] sm:$0xff]
    %v289 = vld [vmem:[#allocation5 + $0x270] sm:$0xff]
    %v290 = vld [vmem:[#allocation5 + $0x278] sm:$0xff]
    %v291 = vld [vmem:[#allocation5 + $0x280] sm:$0xff]
    %v292 = vld [vmem:[#allocation5 + $0x288] sm:$0xff]
    %v293 = vld [vmem:[#allocation5 + $0x290] sm:$0xff]
    %v294 = vld [vmem:[#allocation5 + $0x298] sm:$0xff]
    %v295 = vld [vmem:[#allocation5 + $0x2a0] sm:$0xff]
    %v296 = vld [vmem:[#allocation5 + $0x2a8] sm:$0xff]
    %v297 = vld [vmem:[#allocation5 + $0x2b0] sm:$0xff]
    %v298 = vld [vmem:[#allocation5 + $0x2b8] sm:$0xff]
    %v299 = vld [vmem:[#allocation5 + $0x2c0] sm:$0xff]
    %v300 = vld [vmem:[#allocation5 + $0x2c8] sm:$0xff]
    %v301 = vld [vmem:[#allocation5 + $0x2d0] sm:$0xff]
    %v302 = vld [vmem:[#allocation5 + $0x2d8] sm:$0xff]
    %v303 = vld [vmem:[#allocation5 + $0x2e0] sm:$0xff]
    %v304 = vld [vmem:[#allocation5 + $0x2e8] sm:$0xff]
    %v305 = vld [vmem:[#allocation5 + $0x2f0] sm:$0xff]
    %v306 = vld [vmem:[#allocation5 + $0x2f8] sm:$0xff]
    %v307 = vld [vmem:[#allocation5 + $0x300] sm:$0xff]
    %v308 = vld [vmem:[#allocation5 + $0x308] sm:$0xff]
    %v309 = vld [vmem:[#allocation5 + $0x310] sm:$0xff]
    %v310 = vld [vmem:[#allocation5 + $0x318] sm:$0xff]
    %v311 = vld [vmem:[#allocation5 + $0x320] sm:$0xff]
    %v312 = vld [vmem:[#allocation5 + $0x328] sm:$0xff]
    %v313 = vld [vmem:[#allocation5 + $0x330] sm:$0xff]
    %v314 = vld [vmem:[#allocation5 + $0x338] sm:$0xff]
    %v315 = vld [vmem:[#allocation5 + $0x340] sm:$0xff]
    %v316 = vld [vmem:[#allocation5 + $0x348] sm:$0xff]
    %v317 = vld [vmem:[#allocation5 + $0x350] sm:$0xff]
    %v318 = vld [vmem:[#allocation5 + $0x358] sm:$0xff]
    %v319 = vld [vmem:[#allocation5 + $0x360] sm:$0xff]
    %v320 = vld [vmem:[#allocation5 + $0x368] sm:$0xff]
    %v321 = vld [vmem:[#allocation5 + $0x370] sm:$0xff]
    %v322 = vld [vmem:[#allocation5 + $0x378] sm:$0xff]
    %v323 = vld [vmem:[#allocation5 + $0x380] sm:$0xff]
    %v324 = vld [vmem:[#allocation5 + $0x388] sm:$0xff]
    %v325 = vld [vmem:[#allocation5 + $0x390] sm:$0xff]
    %v326 = vld [vmem:[#allocation5 + $0x398] sm:$0xff]
    %v327 = vld [vmem:[#allocation5 + $0x3a0] sm:$0xff]
    %v328 = vld [vmem:[#allocation5 + $0x3a8] sm:$0xff]
    %v329 = vld [vmem:[#allocation5 + $0x3b0] sm:$0xff]
    %v330 = vld [vmem:[#allocation5 + $0x3b8] sm:$0xff]
    %v331 = vld [vmem:[#allocation5 + $0x3c0] sm:$0xff]
    %v332 = vld [vmem:[#allocation5 + $0x3c8] sm:$0xff]
    %v333 = vld [vmem:[#allocation5 + $0x3d0] sm:$0xff]
    %v334 = vld [vmem:[#allocation5 + $0x3d8] sm:$0xff]
    %v335 = vld [vmem:[#allocation5 + $0x3e0] sm:$0xff]
    %v336 = vld [vmem:[#allocation5 + $0x3e8] sm:$0xff]
    %v337 = vld [vmem:[#allocation5 + $0x3f0] sm:$0xff]
    %v338 = vld [vmem:[#allocation5 + $0x3f8] sm:$0xff]
    %v339 = vld [vmem:[#allocation5 + $0x400] sm:$0xff]
    %v340 = vld [vmem:[#allocation5 + $0x408] sm:$0xff]
    %v341 = vld [vmem:[#allocation5 + $0x410] sm:$0xff]
    %v342 = vld [vmem:[#allocation5 + $0x418] sm:$0xff]
    %v343 = vld [vmem:[#allocation5 + $0x420] sm:$0xff]
    %v344 = vld [vmem:[#allocation5 + $0x428] sm:$0xff]
    %v345 = vld [vmem:[#allocation5 + $0x430] sm:$0xff]
    %v346 = vld [vmem:[#allocation5 + $0x438] sm:$0xff]
    %v347 = vld [vmem:[#allocation5 + $0x440] sm:$0xff]
    %v348 = vld [vmem:[#allocation5 + $0x448] sm:$0xff]
    %v349 = vld [vmem:[#allocation5 + $0x450] sm:$0xff]
    %v350 = vld [vmem:[#allocation5 + $0x458] sm:$0xff]
    %v351 = vld [vmem:[#allocation5 + $0x460] sm:$0xff]
    %v352 = vld [vmem:[#allocation5 + $0x468] sm:$0xff]
    %v353 = vld [vmem:[#allocation5 + $0x470] sm:$0xff]
    %v354 = vld [vmem:[#allocation5 + $0x478] sm:$0xff]
    %v355 = vld [vmem:[#allocation5 + $0x480] sm:$0xff]
    %v356 = vld [vmem:[#allocation5 + $0x488] sm:$0xff]
    %v357 = vld [vmem:[#allocation5 + $0x490] sm:$0xff]
    %v358 = vld [vmem:[#allocation5 + $0x498] sm:$0xff]
    %v359 = vld [vmem:[#allocation5 + $0x4a0] sm:$0xff]
    %v360 = vld [vmem:[#allocation5 + $0x4a8] sm:$0xff]
    %v361 = vld [vmem:[#allocation5 + $0x4b0] sm:$0xff]
    %v362 = vld [vmem:[#allocation5 + $0x4b8] sm:$0xff]
    %v363 = vld [vmem:[#allocation5 + $0x4c0] sm:$0xff]
    %v364 = vld [vmem:[#allocation5 + $0x4c8] sm:$0xff]
    %v365 = vld [vmem:[#allocation5 + $0x4d0] sm:$0xff]
    %v366 = vld [vmem:[#allocation5 + $0x4d8] sm:$0xff]
    %v367 = vld [vmem:[#allocation5 + $0x4e0] sm:$0xff]
    %v368 = vld [vmem:[#allocation5 + $0x4e8] sm:$0xff]
    %v369 = vld [vmem:[#allocation5 + $0x4f0] sm:$0xff]
    %v370 = vld [vmem:[#allocation5 + $0x4f8] sm:$0xff]
    %v371 = vld [vmem:[#allocation5 + $0x500] sm:$0xff]
    %v372 = vld [vmem:[#allocation5 + $0x508] sm:$0xff]
    %v373 = vld [vmem:[#allocation5 + $0x510] sm:$0xff]
    %v374 = vld [vmem:[#allocation5 + $0x518] sm:$0xff]
    %v375 = vld [vmem:[#allocation5 + $0x520] sm:$0xff]
    %v376 = vld [vmem:[#allocation5 + $0x528] sm:$0xff]
    %v377 = vld [vmem:[#allocation5 + $0x530] sm:$0xff]
    %v378 = vld [vmem:[#allocation5 + $0x538] sm:$0xff]
    %v379 = vld [vmem:[#allocation5 + $0x540] sm:$0xff]
    %v380 = vld [vmem:[#allocation5 + $0x548] sm:$0xff]
    %v381 = vld [vmem:[#allocation5 + $0x550] sm:$0xff]
    %v382 = vld [vmem:[#allocation5 + $0x558] sm:$0xff]
    %v383 = vld [vmem:[#allocation5 + $0x560] sm:$0xff]
    %v384 = vld [vmem:[#allocation5 + $0x568] sm:$0xff]
    %v385 = vld [vmem:[#allocation5 + $0x570] sm:$0xff]
    %v386 = vld [vmem:[#allocation5 + $0x578] sm:$0xff]
    %v387 = vld [vmem:[#allocation5 + $0x580] sm:$0xff]
    %v388 = vld [vmem:[#allocation5 + $0x588] sm:$0xff]
    %v389 = vld [vmem:[#allocation5 + $0x590] sm:$0xff]
    %v390 = vld [vmem:[#allocation5 + $0x598] sm:$0xff]
    %v391 = vld [vmem:[#allocation5 + $0x5a0] sm:$0xff]
    %v392 = vld [vmem:[#allocation5 + $0x5a8] sm:$0xff]
    %v393 = vld [vmem:[#allocation5 + $0x5b0] sm:$0xff]
    %v394 = vld [vmem:[#allocation5 + $0x5b8] sm:$0xff]
    %v395 = vld [vmem:[#allocation5 + $0x5c0] sm:$0xff]
    %v396 = vld [vmem:[#allocation5 + $0x5c8] sm:$0xff]
    %v397 = vld [vmem:[#allocation5 + $0x5d0] sm:$0xff]
    %v398 = vld [vmem:[#allocation5 + $0x5d8] sm:$0xff]
    %v399 = vld [vmem:[#allocation5 + $0x5e0] sm:$0xff]
    %v400 = vld [vmem:[#allocation5 + $0x5e8] sm:$0xff]
    %v401 = vld [vmem:[#allocation5 + $0x5f0] sm:$0xff]
    %v402 = vld [vmem:[#allocation5 + $0x5f8] sm:$0xff]
    %v403 = vld [vmem:[#allocation5 + $0x600] sm:$0xff]
    %v404 = vld [vmem:[#allocation5 + $0x608] sm:$0xff]
    %v405 = vld [vmem:[#allocation5 + $0x610] sm:$0xff]
    %v406 = vld [vmem:[#allocation5 + $0x618] sm:$0xff]
    %v407 = vld [vmem:[#allocation5 + $0x620] sm:$0xff]
    %v408 = vld [vmem:[#allocation5 + $0x628] sm:$0xff]
    %v409 = vld [vmem:[#allocation5 + $0x630] sm:$0xff]
    %v410 = vld [vmem:[#allocation5 + $0x638] sm:$0xff]
    %v411 = vld [vmem:[#allocation5 + $0x640] sm:$0xff]
    %v412 = vld [vmem:[#allocation5 + $0x648] sm:$0xff]
    %v413 = vld [vmem:[#allocation5 + $0x650] sm:$0xff]
    %v414 = vld [vmem:[#allocation5 + $0x658] sm:$0xff]
    %v415 = vld [vmem:[#allocation5 + $0x660] sm:$0xff]
    %v416 = vld [vmem:[#allocation5 + $0x668] sm:$0xff]
    %v417 = vld [vmem:[#allocation5 + $0x670] sm:$0xff]
    %v418 = vld [vmem:[#allocation5 + $0x678] sm:$0xff]
    %v419 = vld [vmem:[#allocation5 + $0x680] sm:$0xff]
    %v420 = vld [vmem:[#allocation5 + $0x688] sm:$0xff]
    %v421 = vld [vmem:[#allocation5 + $0x690] sm:$0xff]
    %v422 = vld [vmem:[#allocation5 + $0x698] sm:$0xff]
    %v423 = vld [vmem:[#allocation5 + $0x6a0] sm:$0xff]
    %v424 = vld [vmem:[#allocation5 + $0x6a8] sm:$0xff]
    %v425 = vld [vmem:[#allocation5 + $0x6b0] sm:$0xff]
    %v426 = vld [vmem:[#allocation5 + $0x6b8] sm:$0xff]
    %v427 = vld [vmem:[#allocation5 + $0x6c0] sm:$0xff]
    %v428 = vld [vmem:[#allocation5 + $0x6c8] sm:$0xff]
    %v429 = vld [vmem:[#allocation5 + $0x6d0] sm:$0xff]
    %v430 = vld [vmem:[#allocation5 + $0x6d8] sm:$0xff]
    %v431 = vld [vmem:[#allocation5 + $0x6e0] sm:$0xff]
    %v432 = vld [vmem:[#allocation5 + $0x6e8] sm:$0xff]
    %v433 = vld [vmem:[#allocation5 + $0x6f0] sm:$0xff]
    %v434 = vld [vmem:[#allocation5 + $0x6f8] sm:$0xff]
    %v435 = vld [vmem:[#allocation5 + $0x700] sm:$0xff]
    %v436 = vld [vmem:[#allocation5 + $0x708] sm:$0xff]
    %v437 = vld [vmem:[#allocation5 + $0x710] sm:$0xff]
    %v438 = vld [vmem:[#allocation5 + $0x718] sm:$0xff]
    %v439 = vld [vmem:[#allocation5 + $0x720] sm:$0xff]
    %v440 = vld [vmem:[#allocation5 + $0x728] sm:$0xff]
    %v441 = vld [vmem:[#allocation5 + $0x730] sm:$0xff]
    %v442 = vld [vmem:[#allocation5 + $0x738] sm:$0xff]
    %v443 = vld [vmem:[#allocation5 + $0x740] sm:$0xff]
    %v444 = vld [vmem:[#allocation5 + $0x748] sm:$0xff]
    %v445 = vld [vmem:[#allocation5 + $0x750] sm:$0xff]
    %v446 = vld [vmem:[#allocation5 + $0x758] sm:$0xff]
    %v447 = vld [vmem:[#allocation5 + $0x760] sm:$0xff]
    %v448 = vld [vmem:[#allocation5 + $0x768] sm:$0xff]
    %v449 = vld [vmem:[#allocation5 + $0x770] sm:$0xff]
    %v450 = vld [vmem:[#allocation5 + $0x778] sm:$0xff]
    %v451 = vld [vmem:[#allocation5 + $0x780] sm:$0xff]
    %v452 = vld [vmem:[#allocation5 + $0x788] sm:$0xff]
    %v453 = vld [vmem:[#allocation5 + $0x790] sm:$0xff]
    %v454 = vld [vmem:[#allocation5 + $0x798] sm:$0xff]
    %v455 = vld [vmem:[#allocation5 + $0x7a0] sm:$0xff]
    %v456 = vld [vmem:[#allocation5 + $0x7a8] sm:$0xff]
    %v457 = vld [vmem:[#allocation5 + $0x7b0] sm:$0xff]
    %v458 = vld [vmem:[#allocation5 + $0x7b8] sm:$0xff]
    %v459 = vld [vmem:[#allocation5 + $0x7c0] sm:$0xff]
    %v460 = vld [vmem:[#allocation5 + $0x7c8] sm:$0xff]
    %v461 = vld [vmem:[#allocation5 + $0x7d0] sm:$0xff]
    %v462 = vld [vmem:[#allocation5 + $0x7d8] sm:$0xff]
    %v463 = vld [vmem:[#allocation5 + $0x7e0] sm:$0xff]
    %v464 = vld [vmem:[#allocation5 + $0x7e8] sm:$0xff]
    %v465 = vld [vmem:[#allocation5 + $0x7f0] sm:$0xff]
    %v466 = vld [vmem:[#allocation5 + $0x7f8] sm:$0xff]
    %v467 = vld [vmem:[#allocation5 + $0x800] sm:$0xff]
    %v468 = vld [vmem:[#allocation5 + $0x808] sm:$0xff]
    %v469 = vld [vmem:[#allocation5 + $0x810] sm:$0xff]
    %v470 = vld [vmem:[#allocation5 + $0x818] sm:$0xff]
    %v471 = vld [vmem:[#allocation5 + $0x820] sm:$0xff]
    %v472 = vld [vmem:[#allocation5 + $0x828] sm:$0xff]
    %v473 = vld [vmem:[#allocation5 + $0x830] sm:$0xff]
    %v474 = vld [vmem:[#allocation5 + $0x838] sm:$0xff]
    %v475 = vld [vmem:[#allocation5 + $0x840] sm:$0xff]
    %v476 = vld [vmem:[#allocation5 + $0x848] sm:$0xff]
    %v477 = vld [vmem:[#allocation5 + $0x850] sm:$0xff]
    %v478 = vld [vmem:[#allocation5 + $0x858] sm:$0xff]
    %v479 = vld [vmem:[#allocation5 + $0x860] sm:$0xff]
    %v480 = vld [vmem:[#allocation5 + $0x868] sm:$0xff]
    %v481 = vld [vmem:[#allocation5 + $0x870] sm:$0xff]
    %v482 = vld [vmem:[#allocation5 + $0x878] sm:$0xff]
    %v483 = vld [vmem:[#allocation5 + $0x880] sm:$0xff]
    %v484 = vld [vmem:[#allocation5 + $0x888] sm:$0xff]
    %v485 = vld [vmem:[#allocation5 + $0x890] sm:$0xff]
    %v486 = vld [vmem:[#allocation5 + $0x898] sm:$0xff]
    %v487 = vld [vmem:[#allocation5 + $0x8a0] sm:$0xff]
    %v488 = vld [vmem:[#allocation5 + $0x8a8] sm:$0xff]
    %v489 = vld [vmem:[#allocation5 + $0x8b0] sm:$0xff]
    %v490 = vld [vmem:[#allocation5 + $0x8b8] sm:$0xff]
    %v491 = vld [vmem:[#allocation5 + $0x8c0] sm:$0xff]
    %v492 = vld [vmem:[#allocation5 + $0x8c8] sm:$0xff]
    %v493 = vld [vmem:[#allocation5 + $0x8d0] sm:$0xff]
    %v494 = vld [vmem:[#allocation5 + $0x8d8] sm:$0xff]
    %v495 = vld [vmem:[#allocation5 + $0x8e0] sm:$0xff]
    %v496 = vld [vmem:[#allocation5 + $0x8e8] sm:$0xff]
    %v497 = vld [vmem:[#allocation5 + $0x8f0] sm:$0xff]
    %v498 = vld [vmem:[#allocation5 + $0x8f8] sm:$0xff]
    %v499 = vld [vmem:[#allocation5 + $0x900] sm:$0xff]
    %v500 = vld [vmem:[#allocation5 + $0x908] sm:$0xff]
    %v501 = vld [vmem:[#allocation5 + $0x910] sm:$0xff]
    %v502 = vld [vmem:[#allocation5 + $0x918] sm:$0xff]
    %v503 = vld [vmem:[#allocation5 + $0x920] sm:$0xff]
    %v504 = vld [vmem:[#allocation5 + $0x928] sm:$0xff]
    %v505 = vld [vmem:[#allocation5 + $0x930] sm:$0xff]
    %v506 = vld [vmem:[#allocation5 + $0x938] sm:$0xff]
    %v507 = vld [vmem:[#allocation5 + $0x940] sm:$0xff]
    %v508 = vld [vmem:[#allocation5 + $0x948] sm:$0xff]
    %v509 = vld [vmem:[#allocation5 + $0x950] sm:$0xff]
    %v510 = vld [vmem:[#allocation5 + $0x958] sm:$0xff]
    %v511 = vld [vmem:[#allocation5 + $0x960] sm:$0xff]
    %v512 = vld [vmem:[#allocation5 + $0x968] sm:$0xff]
    %v513 = vld [vmem:[#allocation5 + $0x970] sm:$0xff]
    %v514 = vld [vmem:[#allocation5 + $0x978] sm:$0xff]
    %v515 = vld [vmem:[#allocation5 + $0x980] sm:$0xff]
    %v516 = vld [vmem:[#allocation5 + $0x988] sm:$0xff]
    %v517 = vld [vmem:[#allocation5 + $0x990] sm:$0xff]
    %v518 = vld [vmem:[#allocation5 + $0x998] sm:$0xff]
    %v519 = vld [vmem:[#allocation5 + $0x9a0] sm:$0xff]
    %v520 = vld [vmem:[#allocation5 + $0x9a8] sm:$0xff]
    %v521 = vld [vmem:[#allocation5 + $0x9b0] sm:$0xff]
    %v522 = vld [vmem:[#allocation5 + $0x9b8] sm:$0xff]
    %v523 = vld [vmem:[#allocation5 + $0x9c0] sm:$0xff]
    %v524 = vld [vmem:[#allocation5 + $0x9c8] sm:$0xff]
    %v525 = vld [vmem:[#allocation5 + $0x9d0] sm:$0xff]
    %v526 = vld [vmem:[#allocation5 + $0x9d8] sm:$0xff]
    %v527 = vld [vmem:[#allocation5 + $0x9e0] sm:$0xff]
    %v528 = vld [vmem:[#allocation5 + $0x9e8] sm:$0xff]
    %v529 = vld [vmem:[#allocation5 + $0x9f0] sm:$0xff]
    %v530 = vld [vmem:[#allocation5 + $0x9f8] sm:$0xff]
    %v531 = vld [vmem:[#allocation5 + $0xa00] sm:$0xff]
    %v532 = vld [vmem:[#allocation5 + $0xa08] sm:$0xff]
    %v533 = vld [vmem:[#allocation5 + $0xa10] sm:$0xff]
    %v534 = vld [vmem:[#allocation5 + $0xa18] sm:$0xff]
    %v535 = vld [vmem:[#allocation5 + $0xa20] sm:$0xff]
    %v536 = vld [vmem:[#allocation5 + $0xa28] sm:$0xff]
    %v537 = vld [vmem:[#allocation5 + $0xa30] sm:$0xff]
    %v538 = vld [vmem:[#allocation5 + $0xa38] sm:$0xff]
    %v539 = vld [vmem:[#allocation5 + $0xa40] sm:$0xff]
    %v540 = vld [vmem:[#allocation5 + $0xa48] sm:$0xff]
    %v541 = vld [vmem:[#allocation5 + $0xa50] sm:$0xff]
    %v542 = vld [vmem:[#allocation5 + $0xa58] sm:$0xff]
    %v543 = vld [vmem:[#allocation5 + $0xa60] sm:$0xff]
    %v544 = vld [vmem:[#allocation5 + $0xa68] sm:$0xff]
    %v545 = vld [vmem:[#allocation5 + $0xa70] sm:$0xff]
    %v546 = vld [vmem:[#allocation5 + $0xa78] sm:$0xff]
    %v547 = vld [vmem:[#allocation5 + $0xa80] sm:$0xff]
    %v548 = vld [vmem:[#allocation5 + $0xa88] sm:$0xff]
    %v549 = vld [vmem:[#allocation5 + $0xa90] sm:$0xff]
    %v550 = vld [vmem:[#allocation5 + $0xa98] sm:$0xff]
    %v551 = vld [vmem:[#allocation5 + $0xaa0] sm:$0xff]
    %v552 = vld [vmem:[#allocation5 + $0xaa8] sm:$0xff]
    %v553 = vld [vmem:[#allocation5 + $0xab0] sm:$0xff]
    %v554 = vld [vmem:[#allocation5 + $0xab8] sm:$0xff]
    %v555 = vld [vmem:[#allocation5 + $0xac0] sm:$0xff]
    %v556 = vld [vmem:[#allocation5 + $0xac8] sm:$0xff]
    %v557 = vld [vmem:[#allocation5 + $0xad0] sm:$0xff]
    %v558 = vld [vmem:[#allocation5 + $0xad8] sm:$0xff]
    %v559 = vld [vmem:[#allocation5 + $0xae0] sm:$0xff]
    %v560 = vld [vmem:[#allocation5 + $0xae8] sm:$0xff]
    %v561 = vld [vmem:[#allocation5 + $0xaf0] sm:$0xff]
    %v562 = vld [vmem:[#allocation5 + $0xaf8] sm:$0xff]
    %v563 = vld [vmem:[#allocation5 + $0xb00] sm:$0xff]
    %v564 = vld [vmem:[#allocation5 + $0xb08] sm:$0xff]
    %v565 = vld [vmem:[#allocation5 + $0xb10] sm:$0xff]
    %v566 = vld [vmem:[#allocation5 + $0xb18] sm:$0xff]
    %v567 = vld [vmem:[#allocation5 + $0xb20] sm:$0xff]
    %v568 = vld [vmem:[#allocation5 + $0xb28] sm:$0xff]
    %v569 = vld [vmem:[#allocation5 + $0xb30] sm:$0xff]
    %v570 = vld [vmem:[#allocation5 + $0xb38] sm:$0xff]
    %v571 = vld [vmem:[#allocation5 + $0xb40] sm:$0xff]
    %v572 = vld [vmem:[#allocation5 + $0xb48] sm:$0xff]
    %v573 = vld [vmem:[#allocation5 + $0xb50] sm:$0xff]
    %v574 = vld [vmem:[#allocation5 + $0xb58] sm:$0xff]
    %v575 = vld [vmem:[#allocation5 + $0xb60] sm:$0xff]
    %v576 = vld [vmem:[#allocation5 + $0xb68] sm:$0xff]
    %v577 = vld [vmem:[#allocation5 + $0xb70] sm:$0xff]
    %v578 = vld [vmem:[#allocation5 + $0xb78] sm:$0xff]
    %v579 = vld [vmem:[#allocation5 + $0xb80] sm:$0xff]
    %v580 = vld [vmem:[#allocation5 + $0xb88] sm:$0xff]
    %v581 = vld [vmem:[#allocation5 + $0xb90] sm:$0xff]
    %v582 = vld [vmem:[#allocation5 + $0xb98] sm:$0xff]
    %v583 = vld [vmem:[#allocation5 + $0xba0] sm:$0xff]
    %v584 = vld [vmem:[#allocation5 + $0xba8] sm:$0xff]
    %v585 = vld [vmem:[#allocation5 + $0xbb0] sm:$0xff]
    %v586 = vld [vmem:[#allocation5 + $0xbb8] sm:$0xff]
    %v587 = vld [vmem:[#allocation5 + $0xbc0] sm:$0xff]
    %v588 = vld [vmem:[#allocation5 + $0xbc8] sm:$0xff]
    %v589 = vld [vmem:[#allocation5 + $0xbd0] sm:$0xff]
    %v590 = vld [vmem:[#allocation5 + $0xbd8] sm:$0xff]
    %v591 = vld [vmem:[#allocation5 + $0xbe0] sm:$0xff]
    %v592 = vld [vmem:[#allocation5 + $0xbe8] sm:$0xff]
    %v593 = vld [vmem:[#allocation5 + $0xbf0] sm:$0xff]
    %v594 = vld [vmem:[#allocation5 + $0xbf8] sm:$0xff]
    %v595 = vld [vmem:[#allocation5 + $0xc00] sm:$0xff]
    %v596 = vld [vmem:[#allocation5 + $0xc08] sm:$0xff]
    %v597 = vld [vmem:[#allocation5 + $0xc10] sm:$0xff]
    %v598 = vld [vmem:[#allocation5 + $0xc18] sm:$0xff]
    %v599 = vld [vmem:[#allocation5 + $0xc20] sm:$0xff]
    %v600 = vld [vmem:[#allocation5 + $0xc28] sm:$0xff]
    %v601 = vld [vmem:[#allocation5 + $0xc30] sm:$0xff]
    %v602 = vld [vmem:[#allocation5 + $0xc38] sm:$0xff]
    %v603 = vld [vmem:[#allocation5 + $0xc40] sm:$0xff]
    %v604 = vld [vmem:[#allocation5 + $0xc48] sm:$0xff]
    %v605 = vld [vmem:[#allocation5 + $0xc50] sm:$0xff]
    %v606 = vld [vmem:[#allocation5 + $0xc58] sm:$0xff]
    %v607 = vld [vmem:[#allocation5 + $0xc60] sm:$0xff]
    %v608 = vld [vmem:[#allocation5 + $0xc68] sm:$0xff]
    %v609 = vld [vmem:[#allocation5 + $0xc70] sm:$0xff]
    %v610 = vld [vmem:[#allocation5 + $0xc78] sm:$0xff]
    %v611 = vld [vmem:[#allocation5 + $0xc80] sm:$0xff]
    %v612 = vld [vmem:[#allocation5 + $0xc88] sm:$0xff]
    %v613 = vld [vmem:[#allocation5 + $0xc90] sm:$0xff]
    %v614 = vld [vmem:[#allocation5 + $0xc98] sm:$0xff]
    %v615 = vld [vmem:[#allocation5 + $0xca0] sm:$0xff]
    %v616 = vld [vmem:[#allocation5 + $0xca8] sm:$0xff]
    %v617 = vld [vmem:[#allocation5 + $0xcb0] sm:$0xff]
    %v618 = vld [vmem:[#allocation5 + $0xcb8] sm:$0xff]
    %v619 = vld [vmem:[#allocation5 + $0xcc0] sm:$0xff]
    %v620 = vld [vmem:[#allocation5 + $0xcc8] sm:$0xff]
    %v621 = vld [vmem:[#allocation5 + $0xcd0] sm:$0xff]
    %v622 = vld [vmem:[#allocation5 + $0xcd8] sm:$0xff]
    %v623 = vld [vmem:[#allocation5 + $0xce0] sm:$0xff]
    %v624 = vld [vmem:[#allocation5 + $0xce8] sm:$0xff]
    %v625 = vld [vmem:[#allocation5 + $0xcf0] sm:$0xff]
    %v626 = vld [vmem:[#allocation5 + $0xcf8] sm:$0xff]
    %v627 = vld [vmem:[#allocation5 + $0xd00] sm:$0xff]
    %v628 = vld [vmem:[#allocation5 + $0xd08] sm:$0xff]
    %v629 = vld [vmem:[#allocation5 + $0xd10] sm:$0xff]
    %v630 = vld [vmem:[#allocation5 + $0xd18] sm:$0xff]
    %v631 = vld [vmem:[#allocation5 + $0xd20] sm:$0xff]
    %v632 = vld [vmem:[#allocation5 + $0xd28] sm:$0xff]
    %v633 = vld [vmem:[#allocation5 + $0xd30] sm:$0xff]
    %v634 = vld [vmem:[#allocation5 + $0xd38] sm:$0xff]
    %v635 = vld [vmem:[#allocation5 + $0xd40] sm:$0xff]
    %v636 = vld [vmem:[#allocation5 + $0xd48] sm:$0xff]
    %v637 = vld [vmem:[#allocation5 + $0xd50] sm:$0xff]
    %v638 = vld [vmem:[#allocation5 + $0xd58] sm:$0xff]
    %v639 = vld [vmem:[#allocation5 + $0xd60] sm:$0xff]
    %v640 = vld [vmem:[#allocation5 + $0xd68] sm:$0xff]
    %v641 = vld [vmem:[#allocation5 + $0xd70] sm:$0xff]
    %v642 = vld [vmem:[#allocation5 + $0xd78] sm:$0xff]
    %v643 = vld [vmem:[#allocation5 + $0xd80] sm:$0xff]
    %v644 = vld [vmem:[#allocation5 + $0xd88] sm:$0xff]
    %v645 = vld [vmem:[#allocation5 + $0xd90] sm:$0xff]
    %v646 = vld [vmem:[#allocation5 + $0xd98] sm:$0xff]
    %v647 = vld [vmem:[#allocation5 + $0xda0] sm:$0xff]
    %v648 = vld [vmem:[#allocation5 + $0xda8] sm:$0xff]
    %v649 = vld [vmem:[#allocation5 + $0xdb0] sm:$0xff]
    %v650 = vld [vmem:[#allocation5 + $0xdb8] sm:$0xff]
    %v651 = vld [vmem:[#allocation5 + $0xdc0] sm:$0xff]
    %v652 = vld [vmem:[#allocation5 + $0xdc8] sm:$0xff]
    %v653 = vld [vmem:[#allocation5 + $0xdd0] sm:$0xff]
    %v654 = vld [vmem:[#allocation5 + $0xdd8] sm:$0xff]
    %v655 = vld [vmem:[#allocation5 + $0xde0] sm:$0xff]
    %v656 = vld [vmem:[#allocation5 + $0xde8] sm:$0xff]
    %v657 = vld [vmem:[#allocation5 + $0xdf0] sm:$0xff]
    %v658 = vld [vmem:[#allocation5 + $0xdf8] sm:$0xff]
    %v659 = vld [vmem:[#allocation5 + $0xe00] sm:$0xff]
    %v660 = vld [vmem:[#allocation5 + $0xe08] sm:$0xff]
    %v661 = vld [vmem:[#allocation5 + $0xe10] sm:$0xff]
    %v662 = vld [vmem:[#allocation5 + $0xe18] sm:$0xff]
    %v663 = vld [vmem:[#allocation5 + $0xe20] sm:$0xff]
    %v664 = vld [vmem:[#allocation5 + $0xe28] sm:$0xff]
    %v665 = vld [vmem:[#allocation5 + $0xe30] sm:$0xff]
    %v666 = vld [vmem:[#allocation5 + $0xe38] sm:$0xff]
    %v667 = vld [vmem:[#allocation5 + $0xe40] sm:$0xff]
    %v668 = vld [vmem:[#allocation5 + $0xe48] sm:$0xff]
    %v669 = vld [vmem:[#allocation5 + $0xe50] sm:$0xff]
    %v670 = vld [vmem:[#allocation5 + $0xe58] sm:$0xff]
    %v671 = vld [vmem:[#allocation5 + $0xe60] sm:$0xff]
    %v672 = vld [vmem:[#allocation5 + $0xe68] sm:$0xff]
    %v673 = vld [vmem:[#allocation5 + $0xe70] sm:$0xff]
    %v674 = vld [vmem:[#allocation5 + $0xe78] sm:$0xff]
    %v675 = vld [vmem:[#allocation5 + $0xe80] sm:$0xff]
    %v676 = vld [vmem:[#allocation5 + $0xe88] sm:$0xff]
    %v677 = vld [vmem:[#allocation5 + $0xe90] sm:$0xff]
    %v678 = vld [vmem:[#allocation5 + $0xe98] sm:$0xff]
    %v679 = vld [vmem:[#allocation5 + $0xea0] sm:$0xff]
    %v680 = vld [vmem:[#allocation5 + $0xea8] sm:$0xff]
    %v681 = vld [vmem:[#allocation5 + $0xeb0] sm:$0xff]
    %v682 = vld [vmem:[#allocation5 + $0xeb8] sm:$0xff]
    %v683 = vld [vmem:[#allocation5 + $0xec0] sm:$0xff]
    %v684 = vld [vmem:[#allocation5 + $0xec8] sm:$0xff]
    %v685 = vld [vmem:[#allocation5 + $0xed0] sm:$0xff]
    %v686 = vld [vmem:[#allocation5 + $0xed8] sm:$0xff]
    %v687 = vld [vmem:[#allocation5 + $0xee0] sm:$0xff]
    %v688 = vld [vmem:[#allocation5 + $0xee8] sm:$0xff]
    %v689 = vld [vmem:[#allocation5 + $0xef0] sm:$0xff]
    %v690 = vld [vmem:[#allocation5 + $0xef8] sm:$0xff]
    %v691 = vld [vmem:[#allocation5 + $0xf00] sm:$0xff]
    %v692 = vld [vmem:[#allocation5 + $0xf08] sm:$0xff]
    %v693 = vld [vmem:[#allocation5 + $0xf10] sm:$0xff]
    %v694 = vld [vmem:[#allocation5 + $0xf18] sm:$0xff]
    %v695 = vld [vmem:[#allocation5 + $0xf20] sm:$0xff]
    %v696 = vld [vmem:[#allocation5 + $0xf28] sm:$0xff]
    %v697 = vld [vmem:[#allocation5 + $0xf30] sm:$0xff]
    %v698 = vld [vmem:[#allocation5 + $0xf38] sm:$0xff]
    %v699 = vld [vmem:[#allocation5 + $0xf40] sm:$0xff]
    %v700 = vld [vmem:[#allocation5 + $0xf48] sm:$0xff]
    %v701 = vld [vmem:[#allocation5 + $0xf50] sm:$0xff]
    %v702 = vld [vmem:[#allocation5 + $0xf58] sm:$0xff]
    %v703 = vld [vmem:[#allocation5 + $0xf60] sm:$0xff]
    %v704 = vld [vmem:[#allocation5 + $0xf68] sm:$0xff]
    %v705 = vld [vmem:[#allocation5 + $0xf70] sm:$0xff]
    %v706 = vld [vmem:[#allocation5 + $0xf78] sm:$0xff]
    %v707 = vld [vmem:[#allocation5 + $0xf80] sm:$0xff]
    %v708 = vld [vmem:[#allocation5 + $0xf88] sm:$0xff]
    %v709 = vld [vmem:[#allocation5 + $0xf90] sm:$0xff]
    %v710 = vld [vmem:[#allocation5 + $0xf98] sm:$0xff]
    %v711 = vld [vmem:[#allocation5 + $0xfa0] sm:$0xff]
    %v712 = vld [vmem:[#allocation5 + $0xfa8] sm:$0xff]
    %v713 = vld [vmem:[#allocation5 + $0xfb0] sm:$0xff]
    %v714 = vld [vmem:[#allocation5 + $0xfb8] sm:$0xff]
    %v715 = vld [vmem:[#allocation5 + $0xfc0] sm:$0xff]
    %v716 = vld [vmem:[#allocation5 + $0xfc8] sm:$0xff]
    %v717 = vld [vmem:[#allocation5 + $0xfd0] sm:$0xff]
    %v718 = vld [vmem:[#allocation5 + $0xfd8] sm:$0xff]
    %v719 = vld [vmem:[#allocation5 + $0xfe0] sm:$0xff]
    %v720 = vld [vmem:[#allocation5 + $0xfe8] sm:$0xff]
    %v721 = vld [vmem:[#allocation5 + $0xff0] sm:$0xff]
    %v722 = vld [vmem:[#allocation5 + $0xff8] sm:$0xff]
    %v723 = vld [vmem:[#allocation5 + $0x1000] sm:$0xff]
    %v724 = vld [vmem:[#allocation5 + $0x1008] sm:$0xff]
    %v725 = vld [vmem:[#allocation5 + $0x1010] sm:$0xff]
    %v726 = vld [vmem:[#allocation5 + $0x1018] sm:$0xff]
    %v727 = vld [vmem:[#allocation5 + $0x1020] sm:$0xff]
    %v728 = vld [vmem:[#allocation5 + $0x1028] sm:$0xff]
    %v729 = vld [vmem:[#allocation5 + $0x1030] sm:$0xff]
    %v730 = vld [vmem:[#allocation5 + $0x1038] sm:$0xff]
    %v731 = vld [vmem:[#allocation5 + $0x1040] sm:$0xff]
    %v732 = vld [vmem:[#allocation5 + $0x1048] sm:$0xff]
    %v733 = vld [vmem:[#allocation5 + $0x1050] sm:$0xff]
    %v734 = vld [vmem:[#allocation5 + $0x1058] sm:$0xff]
    %v735 = vld [vmem:[#allocation5 + $0x1060] sm:$0xff]
    %v736 = vld [vmem:[#allocation5 + $0x1068] sm:$0xff]
    %v737 = vld [vmem:[#allocation5 + $0x1070] sm:$0xff]
    %v738 = vld [vmem:[#allocation5 + $0x1078] sm:$0xff]
    %v739 = vld [vmem:[#allocation5 + $0x1080] sm:$0xff]
    %v740 = vld [vmem:[#allocation5 + $0x1088] sm:$0xff]
    %v741 = vld [vmem:[#allocation5 + $0x1090] sm:$0xff]
    %v742 = vld [vmem:[#allocation5 + $0x1098] sm:$0xff]
    %v743 = vld [vmem:[#allocation5 + $0x10a0] sm:$0xff]
    %v744 = vld [vmem:[#allocation5 + $0x10a8] sm:$0xff]
    %v745 = vld [vmem:[#allocation5 + $0x10b0] sm:$0xff]
    %v746 = vld [vmem:[#allocation5 + $0x10b8] sm:$0xff]
    %v747 = vld [vmem:[#allocation5 + $0x10c0] sm:$0xff]
    %v748 = vld [vmem:[#allocation5 + $0x10c8] sm:$0xff]
    %v749 = vld [vmem:[#allocation5 + $0x10d0] sm:$0xff]
    %v750 = vld [vmem:[#allocation5 + $0x10d8] sm:$0xff]
    %v751 = vld [vmem:[#allocation5 + $0x10e0] sm:$0xff]
    %v752 = vld [vmem:[#allocation5 + $0x10e8] sm:$0xff]
    %v753 = vld [vmem:[#allocation5 + $0x10f0] sm:$0xff]
    %v754 = vld [vmem:[#allocation5 + $0x10f8] sm:$0xff]
    %v755 = vld [vmem:[#allocation5 + $0x1100] sm:$0xff]
    %v756 = vld [vmem:[#allocation5 + $0x1108] sm:$0xff]
    %v757 = vld [vmem:[#allocation5 + $0x1110] sm:$0xff]
    %v758 = vld [vmem:[#allocation5 + $0x1118] sm:$0xff]
    %v759 = vld [vmem:[#allocation5 + $0x1120] sm:$0xff]
    %v760 = vld [vmem:[#allocation5 + $0x1128] sm:$0xff]
    %v761 = vld [vmem:[#allocation5 + $0x1130] sm:$0xff]
    %v762 = vld [vmem:[#allocation5 + $0x1138] sm:$0xff]
    %v763 = vld [vmem:[#allocation5 + $0x1140] sm:$0xff]
    %v764 = vld [vmem:[#allocation5 + $0x1148] sm:$0xff]
    %v765 = vld [vmem:[#allocation5 + $0x1150] sm:$0xff]
    %v766 = vld [vmem:[#allocation5 + $0x1158] sm:$0xff]
    %v767 = vld [vmem:[#allocation5 + $0x1160] sm:$0xff]
    %v768 = vld [vmem:[#allocation5 + $0x1168] sm:$0xff]
    %v769 = vld [vmem:[#allocation5 + $0x1170] sm:$0xff]
    %v770 = vld [vmem:[#allocation5 + $0x1178] sm:$0xff]
    %v771 = vld [vmem:[#allocation5 + $0x1180] sm:$0xff]
    %v772 = vld [vmem:[#allocation5 + $0x1188] sm:$0xff]
    %v773 = vld [vmem:[#allocation5 + $0x1190] sm:$0xff]
    %v774 = vld [vmem:[#allocation5 + $0x1198] sm:$0xff]
    %v775 = vld [vmem:[#allocation5 + $0x11a0] sm:$0xff]
    %v776 = vld [vmem:[#allocation5 + $0x11a8] sm:$0xff]
    %v777 = vld [vmem:[#allocation5 + $0x11b0] sm:$0xff]
    %v778 = vld [vmem:[#allocation5 + $0x11b8] sm:$0xff]
    %v779 = vld [vmem:[#allocation5 + $0x11c0] sm:$0xff]
    %v780 = vld [vmem:[#allocation5 + $0x11c8] sm:$0xff]
    %v781 = vld [vmem:[#allocation5 + $0x11d0] sm:$0xff]
    %v782 = vld [vmem:[#allocation5 + $0x11d8] sm:$0xff]
    %v783 = vld [vmem:[#allocation5 + $0x11e0] sm:$0xff]
    %v784 = vld [vmem:[#allocation5 + $0x11e8] sm:$0xff]
    %v785 = vld [vmem:[#allocation5 + $0x11f0] sm:$0xff]
    %v786 = vld [vmem:[#allocation5 + $0x11f8] sm:$0xff]
    %v787 = vld [vmem:[#allocation5 + $0x1200] sm:$0xff]
    %v788 = vld [vmem:[#allocation5 + $0x1208] sm:$0xff]
    %v789 = vld [vmem:[#allocation5 + $0x1210] sm:$0xff]
    %v790 = vld [vmem:[#allocation5 + $0x1218] sm:$0xff]
    %v791 = vld [vmem:[#allocation5 + $0x1220] sm:$0xff]
    %v792 = vld [vmem:[#allocation5 + $0x1228] sm:$0xff]
    %v793 = vld [vmem:[#allocation5 + $0x1230] sm:$0xff]
    %v794 = vld [vmem:[#allocation5 + $0x1238] sm:$0xff]
    %v795 = vld [vmem:[#allocation5 + $0x1240] sm:$0xff]
    %v796 = vld [vmem:[#allocation5 + $0x1248] sm:$0xff]
    %v797 = vld [vmem:[#allocation5 + $0x1250] sm:$0xff]
    %v798 = vld [vmem:[#allocation5 + $0x1258] sm:$0xff]
    %v799 = vld [vmem:[#allocation5 + $0x1260] sm:$0xff]
    %v800 = vld [vmem:[#allocation5 + $0x1268] sm:$0xff]
    %v801 = vld [vmem:[#allocation5 + $0x1270] sm:$0xff]
    %v802 = vld [vmem:[#allocation5 + $0x1278] sm:$0xff]
    %v803 = vld [vmem:[#allocation5 + $0x1280] sm:$0xff]
    %v804 = vld [vmem:[#allocation5 + $0x1288] sm:$0xff]
    %v805 = vld [vmem:[#allocation5 + $0x1290] sm:$0xff]
    %v806 = vld [vmem:[#allocation5 + $0x1298] sm:$0xff]
    %v807 = vld [vmem:[#allocation5 + $0x12a0] sm:$0xff]
    %v808 = vld [vmem:[#allocation5 + $0x12a8] sm:$0xff]
    %v809 = vld [vmem:[#allocation5 + $0x12b0] sm:$0xff]
    %v810 = vld [vmem:[#allocation5 + $0x12b8] sm:$0xff]
    %v811 = vld [vmem:[#allocation5 + $0x12c0] sm:$0xff]
    %v812 = vld [vmem:[#allocation5 + $0x12c8] sm:$0xff]
    %v813 = vld [vmem:[#allocation5 + $0x12d0] sm:$0xff]
    %v814 = vld [vmem:[#allocation5 + $0x12d8] sm:$0xff]
    %v815 = vld [vmem:[#allocation5 + $0x12e0] sm:$0xff]
    %v816 = vld [vmem:[#allocation5 + $0x12e8] sm:$0xff]
    %v817 = vld [vmem:[#allocation5 + $0x12f0] sm:$0xff]
    %v818 = vld [vmem:[#allocation5 + $0x12f8] sm:$0xff]
    %v819 = vld [vmem:[#allocation5 + $0x1300] sm:$0xff]
    %v820 = vld [vmem:[#allocation5 + $0x1308] sm:$0xff]
    %v821 = vld [vmem:[#allocation5 + $0x1310] sm:$0xff]
    %v822 = vld [vmem:[#allocation5 + $0x1318] sm:$0xff]
    %v823 = vld [vmem:[#allocation5 + $0x1320] sm:$0xff]
    %v824 = vld [vmem:[#allocation5 + $0x1328] sm:$0xff]
    %v825 = vld [vmem:[#allocation5 + $0x1330] sm:$0xff]
    %v826 = vld [vmem:[#allocation5 + $0x1338] sm:$0xff]
    %v827 = vld [vmem:[#allocation5 + $0x1340] sm:$0xff]
    %v828 = vld [vmem:[#allocation5 + $0x1348] sm:$0xff]
    %v829 = vld [vmem:[#allocation5 + $0x1350] sm:$0xff]
    %v830 = vld [vmem:[#allocation5 + $0x1358] sm:$0xff]
    %v831 = vld [vmem:[#allocation5 + $0x1360] sm:$0xff]
    %v832 = vld [vmem:[#allocation5 + $0x1368] sm:$0xff]
    %v833 = vld [vmem:[#allocation5 + $0x1370] sm:$0xff]
    %v834 = vld [vmem:[#allocation5 + $0x1378] sm:$0xff]
    %v835 = vld [vmem:[#allocation5 + $0x1380] sm:$0xff]
    %v836 = vld [vmem:[#allocation5 + $0x1388] sm:$0xff]
    %v837 = vld [vmem:[#allocation5 + $0x1390] sm:$0xff]
    %v838 = vld [vmem:[#allocation5 + $0x1398] sm:$0xff]
    %v839 = vld [vmem:[#allocation5 + $0x13a0] sm:$0xff]
    %v840 = vld [vmem:[#allocation5 + $0x13a8] sm:$0xff]
    %v841 = vld [vmem:[#allocation5 + $0x13b0] sm:$0xff]
    %v842 = vld [vmem:[#allocation5 + $0x13b8] sm:$0xff]
    %v843 = vld [vmem:[#allocation5 + $0x13c0] sm:$0xff]
    %v844 = vld [vmem:[#allocation5 + $0x13c8] sm:$0xff]
    %v845 = vld [vmem:[#allocation5 + $0x13d0] sm:$0xff]
    %v846 = vld [vmem:[#allocation5 + $0x13d8] sm:$0xff]
    %v847 = vld [vmem:[#allocation5 + $0x13e0] sm:$0xff]
    %v848 = vld [vmem:[#allocation5 + $0x13e8] sm:$0xff]
    %v849 = vld [vmem:[#allocation5 + $0x13f0] sm:$0xff]
    %v850 = vld [vmem:[#allocation5 + $0x13f8] sm:$0xff]
    %v851 = vld [vmem:[#allocation5 + $0x1400] sm:$0xff]
    %v852 = vld [vmem:[#allocation5 + $0x1408] sm:$0xff]
    %v853 = vld [vmem:[#allocation5 + $0x1410] sm:$0xff]
    %v854 = vld [vmem:[#allocation5 + $0x1418] sm:$0xff]
    %v855 = vld [vmem:[#allocation5 + $0x1420] sm:$0xff]
    %v856 = vld [vmem:[#allocation5 + $0x1428] sm:$0xff]
    %v857 = vld [vmem:[#allocation5 + $0x1430] sm:$0xff]
    %v858 = vld [vmem:[#allocation5 + $0x1438] sm:$0xff]
    %v859 = vld [vmem:[#allocation5 + $0x1440] sm:$0xff]
    %v860 = vld [vmem:[#allocation5 + $0x1448] sm:$0xff]
    %v861 = vld [vmem:[#allocation5 + $0x1450] sm:$0xff]
    %v862 = vld [vmem:[#allocation5 + $0x1458] sm:$0xff]
    %v863 = vld [vmem:[#allocation5 + $0x1460] sm:$0xff]
    %v864 = vld [vmem:[#allocation5 + $0x1468] sm:$0xff]
    %v865 = vld [vmem:[#allocation5 + $0x1470] sm:$0xff]
    %v866 = vld [vmem:[#allocation5 + $0x1478] sm:$0xff]
    %v867 = vld [vmem:[#allocation5 + $0x1480] sm:$0xff]
    %v868 = vld [vmem:[#allocation5 + $0x1488] sm:$0xff]
    %v869 = vld [vmem:[#allocation5 + $0x1490] sm:$0xff]
    %v870 = vld [vmem:[#allocation5 + $0x1498] sm:$0xff]
    %v871 = vld [vmem:[#allocation5 + $0x14a0] sm:$0xff]
    %v872 = vld [vmem:[#allocation5 + $0x14a8] sm:$0xff]
    %v873 = vld [vmem:[#allocation5 + $0x14b0] sm:$0xff]
    %v874 = vld [vmem:[#allocation5 + $0x14b8] sm:$0xff]
    %v875 = vld [vmem:[#allocation5 + $0x14c0] sm:$0xff]
    %v876 = vld [vmem:[#allocation5 + $0x14c8] sm:$0xff]
    %v877 = vld [vmem:[#allocation5 + $0x14d0] sm:$0xff]
    %v878 = vld [vmem:[#allocation5 + $0x14d8] sm:$0xff]
    %v879 = vld [vmem:[#allocation5 + $0x14e0] sm:$0xff]
    %v880 = vld [vmem:[#allocation5 + $0x14e8] sm:$0xff]
    %v881 = vld [vmem:[#allocation5 + $0x14f0] sm:$0xff]
    %v882 = vld [vmem:[#allocation5 + $0x14f8] sm:$0xff]
    %v883 = vld [vmem:[#allocation5 + $0x1500] sm:$0xff]
    %v884 = vld [vmem:[#allocation5 + $0x1508] sm:$0xff]
    %v885 = vld [vmem:[#allocation5 + $0x1510] sm:$0xff]
    %v886 = vld [vmem:[#allocation5 + $0x1518] sm:$0xff]
    %v887 = vld [vmem:[#allocation5 + $0x1520] sm:$0xff]
    %v888 = vld [vmem:[#allocation5 + $0x1528] sm:$0xff]
    %v889 = vld [vmem:[#allocation5 + $0x1530] sm:$0xff]
    %v890 = vld [vmem:[#allocation5 + $0x1538] sm:$0xff]
    %v891 = vld [vmem:[#allocation5 + $0x1540] sm:$0xff]
    %v892 = vld [vmem:[#allocation5 + $0x1548] sm:$0xff]
    %v893 = vld [vmem:[#allocation5 + $0x1550] sm:$0xff]
    %v894 = vld [vmem:[#allocation5 + $0x1558] sm:$0xff]
    %v895 = vld [vmem:[#allocation5 + $0x1560] sm:$0xff]
    %v896 = vld [vmem:[#allocation5 + $0x1568] sm:$0xff]
    %v897 = vld [vmem:[#allocation5 + $0x1570] sm:$0xff]
    %v898 = vld [vmem:[#allocation5 + $0x1578] sm:$0xff]
    %v899 = vld [vmem:[#allocation5 + $0x1580] sm:$0xff]
    %v900 = vld [vmem:[#allocation5 + $0x1588] sm:$0xff]
    %v901 = vld [vmem:[#allocation5 + $0x1590] sm:$0xff]
    %v902 = vld [vmem:[#allocation5 + $0x1598] sm:$0xff]
    %v903 = vld [vmem:[#allocation5 + $0x15a0] sm:$0xff]
    %v904 = vld [vmem:[#allocation5 + $0x15a8] sm:$0xff]
    %v905 = vld [vmem:[#allocation5 + $0x15b0] sm:$0xff]
    %v906 = vld [vmem:[#allocation5 + $0x15b8] sm:$0xff]
    %v907 = vld [vmem:[#allocation5 + $0x15c0] sm:$0xff]
    %v908 = vld [vmem:[#allocation5 + $0x15c8] sm:$0xff]
    %v909 = vld [vmem:[#allocation5 + $0x15d0] sm:$0xff]
    %v910 = vld [vmem:[#allocation5 + $0x15d8] sm:$0xff]
    %v911 = vld [vmem:[#allocation5 + $0x15e0] sm:$0xff]
    %v912 = vld [vmem:[#allocation5 + $0x15e8] sm:$0xff]
    %v913 = vld [vmem:[#allocation5 + $0x15f0] sm:$0xff]
    %v914 = vld [vmem:[#allocation5 + $0x15f8] sm:$0xff]
    %v915 = vld [vmem:[#allocation5 + $0x1600] sm:$0xff]
    %v916 = vld [vmem:[#allocation5 + $0x1608] sm:$0xff]
    %v917 = vld [vmem:[#allocation5 + $0x1610] sm:$0xff]
    %v918 = vld [vmem:[#allocation5 + $0x1618] sm:$0xff]
    %v919 = vld [vmem:[#allocation5 + $0x1620] sm:$0xff]
    %v920 = vld [vmem:[#allocation5 + $0x1628] sm:$0xff]
    %v921 = vld [vmem:[#allocation5 + $0x1630] sm:$0xff]
    %v922 = vld [vmem:[#allocation5 + $0x1638] sm:$0xff]
    %v923 = vld [vmem:[#allocation5 + $0x1640] sm:$0xff]
    %v924 = vld [vmem:[#allocation5 + $0x1648] sm:$0xff]
    %v925 = vld [vmem:[#allocation5 + $0x1650] sm:$0xff]
    %v926 = vld [vmem:[#allocation5 + $0x1658] sm:$0xff]
    %v927 = vld [vmem:[#allocation5 + $0x1660] sm:$0xff]
    %v928 = vld [vmem:[#allocation5 + $0x1668] sm:$0xff]
    %v929 = vld [vmem:[#allocation5 + $0x1670] sm:$0xff]
    %v930 = vld [vmem:[#allocation5 + $0x1678] sm:$0xff]
    %v931 = vld [vmem:[#allocation5 + $0x1680] sm:$0xff]
    %v932 = vld [vmem:[#allocation5 + $0x1688] sm:$0xff]
    %v933 = vld [vmem:[#allocation5 + $0x1690] sm:$0xff]
    %v934 = vld [vmem:[#allocation5 + $0x1698] sm:$0xff]
    %v935 = vld [vmem:[#allocation5 + $0x16a0] sm:$0xff]
    %v936 = vld [vmem:[#allocation5 + $0x16a8] sm:$0xff]
    %v937 = vld [vmem:[#allocation5 + $0x16b0] sm:$0xff]
    %v938 = vld [vmem:[#allocation5 + $0x16b8] sm:$0xff]
    %v939 = vld [vmem:[#allocation5 + $0x16c0] sm:$0xff]
    %v940 = vld [vmem:[#allocation5 + $0x16c8] sm:$0xff]
    %v941 = vld [vmem:[#allocation5 + $0x16d0] sm:$0xff]
    %v942 = vld [vmem:[#allocation5 + $0x16d8] sm:$0xff]
    %v943 = vld [vmem:[#allocation5 + $0x16e0] sm:$0xff]
    %v944 = vld [vmem:[#allocation5 + $0x16e8] sm:$0xff]
    %v945 = vld [vmem:[#allocation5 + $0x16f0] sm:$0xff]
    %v946 = vld [vmem:[#allocation5 + $0x16f8] sm:$0xff]
    %v947 = vld [vmem:[#allocation5 + $0x1700] sm:$0xff]
    %v948 = vld [vmem:[#allocation5 + $0x1708] sm:$0xff]
    %v949 = vld [vmem:[#allocation5 + $0x1710] sm:$0xff]
    %v950 = vld [vmem:[#allocation5 + $0x1718] sm:$0xff]
    %v951 = vld [vmem:[#allocation5 + $0x1720] sm:$0xff]
    %v952 = vld [vmem:[#allocation5 + $0x1728] sm:$0xff]
    %v953 = vld [vmem:[#allocation5 + $0x1730] sm:$0xff]
    %v954 = vld [vmem:[#allocation5 + $0x1738] sm:$0xff]
    %v955 = vld [vmem:[#allocation5 + $0x1740] sm:$0xff]
    %v956 = vld [vmem:[#allocation5 + $0x1748] sm:$0xff]
    %v957 = vld [vmem:[#allocation5 + $0x1750] sm:$0xff]
    %v958 = vld [vmem:[#allocation5 + $0x1758] sm:$0xff]
    %v959 = vld [vmem:[#allocation5 + $0x1760] sm:$0xff]
    %v960 = vld [vmem:[#allocation5 + $0x1768] sm:$0xff]
    %v961 = vld [vmem:[#allocation5 + $0x1770] sm:$0xff]
    %v962 = vld [vmem:[#allocation5 + $0x1778] sm:$0xff]
    %v963 = vld [vmem:[#allocation5 + $0x1780] sm:$0xff]
    %v964 = vld [vmem:[#allocation5 + $0x1788] sm:$0xff]
    %v965 = vld [vmem:[#allocation5 + $0x1790] sm:$0xff]
    %v966 = vld [vmem:[#allocation5 + $0x1798] sm:$0xff]
    %v967 = vld [vmem:[#allocation5 + $0x17a0] sm:$0xff]
    %v968 = vld [vmem:[#allocation5 + $0x17a8] sm:$0xff]
    %v969 = vld [vmem:[#allocation5 + $0x17b0] sm:$0xff]
    %v970 = vld [vmem:[#allocation5 + $0x17b8] sm:$0xff]
    %v971 = vld [vmem:[#allocation5 + $0x17c0] sm:$0xff]
    %v972 = vld [vmem:[#allocation5 + $0x17c8] sm:$0xff]
    %v973 = vld [vmem:[#allocation5 + $0x17d0] sm:$0xff]
    %v974 = vld [vmem:[#allocation5 + $0x17d8] sm:$0xff]
    %v975 = vld [vmem:[#allocation5 + $0x17e0] sm:$0xff]
    %v976 = vld [vmem:[#allocation5 + $0x17e8] sm:$0xff]
    %v977 = vld [vmem:[#allocation5 + $0x17f0] sm:$0xff]
    %v978 = vld [vmem:[#allocation5 + $0x17f8] sm:$0xff]
    %v979 = vld [vmem:[#allocation7] sm:$0xf]
    %v981 = vperm.slane %v979, 0
    %v982 = vperm.slane %v979, 1
    %v983 = vperm.slane %v979, 2
    %v984 = vperm.slane %v979, 3
    %v1757 = vunpack.c.l.b16 %v211
    %v1758 = vunpack.c.h.b16 %v211
    %v1759 = vunpack.c.l.b16 %v212
    %v1760 = vunpack.c.h.b16 %v212
    %v1761 = vunpack.c.l.b16 %v213
    %v1762 = vunpack.c.h.b16 %v213
    %v1763 = vunpack.c.l.b16 %v214
    %v1764 = vunpack.c.h.b16 %v214
    %v1765 = vunpack.c.l.b16 %v215
    %v1766 = vunpack.c.h.b16 %v215
    %v1767 = vunpack.c.l.b16 %v216
    %v1768 = vunpack.c.h.b16 %v216
    %v1769 = vunpack.c.l.b16 %v217
    %v1770 = vunpack.c.h.b16 %v217
    %v1771 = vunpack.c.l.b16 %v218
    %v1772 = vunpack.c.h.b16 %v218
    %v1773 = vunpack.c.l.b16 %v219
    %v1774 = vunpack.c.h.b16 %v219
    %v1775 = vunpack.c.l.b16 %v220
    %v1776 = vunpack.c.h.b16 %v220
    %v1777 = vunpack.c.l.b16 %v221
    %v1778 = vunpack.c.h.b16 %v221
    %v1779 = vunpack.c.l.b16 %v222
    %v1780 = vunpack.c.h.b16 %v222
    %v1781 = vunpack.c.l.b16 %v223
    %v1782 = vunpack.c.h.b16 %v223
    %v1783 = vunpack.c.l.b16 %v224
    %v1784 = vunpack.c.h.b16 %v224
    %v1785 = vunpack.c.l.b16 %v225
    %v1786 = vunpack.c.h.b16 %v225
    %v1787 = vunpack.c.l.b16 %v226
    %v1788 = vunpack.c.h.b16 %v226
    %v1789 = vunpack.c.l.b16 %v227
    %v1790 = vunpack.c.h.b16 %v227
    %v1791 = vunpack.c.l.b16 %v228
    %v1792 = vunpack.c.h.b16 %v228
    %v1793 = vunpack.c.l.b16 %v229
    %v1794 = vunpack.c.h.b16 %v229
    %v1795 = vunpack.c.l.b16 %v230
    %v1796 = vunpack.c.h.b16 %v230
    %v1797 = vunpack.c.l.b16 %v231
    %v1798 = vunpack.c.h.b16 %v231
    %v1799 = vunpack.c.l.b16 %v232
    %v1800 = vunpack.c.h.b16 %v232
    %v1801 = vunpack.c.l.b16 %v233
    %v1802 = vunpack.c.h.b16 %v233
    %v1803 = vunpack.c.l.b16 %v234
    %v1804 = vunpack.c.h.b16 %v234
    %v1805 = vunpack.c.l.b16 %v235
    %v1806 = vunpack.c.h.b16 %v235
    %v1807 = vunpack.c.l.b16 %v236
    %v1808 = vunpack.c.h.b16 %v236
    %v1809 = vunpack.c.l.b16 %v237
    %v1810 = vunpack.c.h.b16 %v237
    %v1811 = vunpack.c.l.b16 %v238
    %v1812 = vunpack.c.h.b16 %v238
    %v1813 = vunpack.c.l.b16 %v239
    %v1814 = vunpack.c.h.b16 %v239
    %v1815 = vunpack.c.l.b16 %v240
    %v1816 = vunpack.c.h.b16 %v240
    %v1817 = vunpack.c.l.b16 %v241
    %v1818 = vunpack.c.h.b16 %v241
    %v1819 = vunpack.c.l.b16 %v242
    %v1820 = vunpack.c.h.b16 %v242
    %v1821 = vunpack.c.l.b16 %v243
    %v1822 = vunpack.c.h.b16 %v243
    %v1823 = vunpack.c.l.b16 %v244
    %v1824 = vunpack.c.h.b16 %v244
    %v1825 = vunpack.c.l.b16 %v245
    %v1826 = vunpack.c.h.b16 %v245
    %v1827 = vunpack.c.l.b16 %v246
    %v1828 = vunpack.c.h.b16 %v246
    %v1829 = vunpack.c.l.b16 %v247
    %v1830 = vunpack.c.h.b16 %v247
    %v1831 = vunpack.c.l.b16 %v248
    %v1832 = vunpack.c.h.b16 %v248
    %v1833 = vunpack.c.l.b16 %v249
    %v1834 = vunpack.c.h.b16 %v249
    %v1835 = vunpack.c.l.b16 %v250
    %v1836 = vunpack.c.h.b16 %v250
    %v1837 = vunpack.c.l.b16 %v251
    %v1838 = vunpack.c.h.b16 %v251
    %v1839 = vunpack.c.l.b16 %v252
    %v1840 = vunpack.c.h.b16 %v252
    %v1841 = vunpack.c.l.b16 %v253
    %v1842 = vunpack.c.h.b16 %v253
    %v1843 = vunpack.c.l.b16 %v254
    %v1844 = vunpack.c.h.b16 %v254
    %v1845 = vunpack.c.l.b16 %v255
    %v1846 = vunpack.c.h.b16 %v255
    %v1847 = vunpack.c.l.b16 %v256
    %v1848 = vunpack.c.h.b16 %v256
    %v1849 = vunpack.c.l.b16 %v257
    %v1850 = vunpack.c.h.b16 %v257
    %v1851 = vunpack.c.l.b16 %v258
    %v1852 = vunpack.c.h.b16 %v258
    %v1853 = vunpack.c.l.b16 %v259
    %v1854 = vunpack.c.h.b16 %v259
    %v1855 = vunpack.c.l.b16 %v260
    %v1856 = vunpack.c.h.b16 %v260
    %v1857 = vunpack.c.l.b16 %v261
    %v1858 = vunpack.c.h.b16 %v261
    %v1859 = vunpack.c.l.b16 %v262
    %v1860 = vunpack.c.h.b16 %v262
    %v1861 = vunpack.c.l.b16 %v263
    %v1862 = vunpack.c.h.b16 %v263
    %v1863 = vunpack.c.l.b16 %v264
    %v1864 = vunpack.c.h.b16 %v264
    %v1865 = vunpack.c.l.b16 %v265
    %v1866 = vunpack.c.h.b16 %v265
    %v1867 = vunpack.c.l.b16 %v266
    %v1868 = vunpack.c.h.b16 %v266
    %v1869 = vunpack.c.l.b16 %v267
    %v1870 = vunpack.c.h.b16 %v267
    %v1871 = vunpack.c.l.b16 %v268
    %v1872 = vunpack.c.h.b16 %v268
    %v1873 = vunpack.c.l.b16 %v269
    %v1874 = vunpack.c.h.b16 %v269
    %v1875 = vunpack.c.l.b16 %v270
    %v1876 = vunpack.c.h.b16 %v270
    %v1877 = vunpack.c.l.b16 %v271
    %v1878 = vunpack.c.h.b16 %v271
    %v1879 = vunpack.c.l.b16 %v272
    %v1880 = vunpack.c.h.b16 %v272
    %v1881 = vunpack.c.l.b16 %v273
    %v1882 = vunpack.c.h.b16 %v273
    %v1883 = vunpack.c.l.b16 %v274
    %v1884 = vunpack.c.h.b16 %v274
    %v1885 = vunpack.c.l.b16 %v275
    %v1886 = vunpack.c.h.b16 %v275
    %v1887 = vunpack.c.l.b16 %v276
    %v1888 = vunpack.c.h.b16 %v276
    %v1889 = vunpack.c.l.b16 %v277
    %v1890 = vunpack.c.h.b16 %v277
    %v1891 = vunpack.c.l.b16 %v278
    %v1892 = vunpack.c.h.b16 %v278
    %v1893 = vunpack.c.l.b16 %v279
    %v1894 = vunpack.c.h.b16 %v279
    %v1895 = vunpack.c.l.b16 %v280
    %v1896 = vunpack.c.h.b16 %v280
    %v1897 = vunpack.c.l.b16 %v281
    %v1898 = vunpack.c.h.b16 %v281
    %v1899 = vunpack.c.l.b16 %v282
    %v1900 = vunpack.c.h.b16 %v282
    %v1901 = vunpack.c.l.b16 %v283
    %v1902 = vunpack.c.h.b16 %v283
    %v1903 = vunpack.c.l.b16 %v284
    %v1904 = vunpack.c.h.b16 %v284
    %v1905 = vunpack.c.l.b16 %v285
    %v1906 = vunpack.c.h.b16 %v285
    %v1907 = vunpack.c.l.b16 %v286
    %v1908 = vunpack.c.h.b16 %v286
    %v1909 = vunpack.c.l.b16 %v287
    %v1910 = vunpack.c.h.b16 %v287
    %v1911 = vunpack.c.l.b16 %v288
    %v1912 = vunpack.c.h.b16 %v288
    %v1913 = vunpack.c.l.b16 %v289
    %v1914 = vunpack.c.h.b16 %v289
    %v1915 = vunpack.c.l.b16 %v290
    %v1916 = vunpack.c.h.b16 %v290
    %v1917 = vunpack.c.l.b16 %v291
    %v1918 = vunpack.c.h.b16 %v291
    %v1919 = vunpack.c.l.b16 %v292
    %v1920 = vunpack.c.h.b16 %v292
    %v1921 = vunpack.c.l.b16 %v293
    %v1922 = vunpack.c.h.b16 %v293
    %v1923 = vunpack.c.l.b16 %v294
    %v1924 = vunpack.c.h.b16 %v294
    %v1925 = vunpack.c.l.b16 %v295
    %v1926 = vunpack.c.h.b16 %v295
    %v1927 = vunpack.c.l.b16 %v296
    %v1928 = vunpack.c.h.b16 %v296
    %v1929 = vunpack.c.l.b16 %v297
    %v1930 = vunpack.c.h.b16 %v297
    %v1931 = vunpack.c.l.b16 %v298
    %v1932 = vunpack.c.h.b16 %v298
    %v1933 = vunpack.c.l.b16 %v299
    %v1934 = vunpack.c.h.b16 %v299
    %v1935 = vunpack.c.l.b16 %v300
    %v1936 = vunpack.c.h.b16 %v300
    %v1937 = vunpack.c.l.b16 %v301
    %v1938 = vunpack.c.h.b16 %v301
    %v1939 = vunpack.c.l.b16 %v302
    %v1940 = vunpack.c.h.b16 %v302
    %v1941 = vunpack.c.l.b16 %v303
    %v1942 = vunpack.c.h.b16 %v303
    %v1943 = vunpack.c.l.b16 %v304
    %v1944 = vunpack.c.h.b16 %v304
    %v1945 = vunpack.c.l.b16 %v305
    %v1946 = vunpack.c.h.b16 %v305
    %v1947 = vunpack.c.l.b16 %v306
    %v1948 = vunpack.c.h.b16 %v306
    %v1949 = vunpack.c.l.b16 %v307
    %v1950 = vunpack.c.h.b16 %v307
    %v1951 = vunpack.c.l.b16 %v308
    %v1952 = vunpack.c.h.b16 %v308
    %v1953 = vunpack.c.l.b16 %v309
    %v1954 = vunpack.c.h.b16 %v309
    %v1955 = vunpack.c.l.b16 %v310
    %v1956 = vunpack.c.h.b16 %v310
    %v1957 = vunpack.c.l.b16 %v311
    %v1958 = vunpack.c.h.b16 %v311
    %v1959 = vunpack.c.l.b16 %v312
    %v1960 = vunpack.c.h.b16 %v312
    %v1961 = vunpack.c.l.b16 %v313
    %v1962 = vunpack.c.h.b16 %v313
    %v1963 = vunpack.c.l.b16 %v314
    %v1964 = vunpack.c.h.b16 %v314
    %v1965 = vunpack.c.l.b16 %v315
    %v1966 = vunpack.c.h.b16 %v315
    %v1967 = vunpack.c.l.b16 %v316
    %v1968 = vunpack.c.h.b16 %v316
    %v1969 = vunpack.c.l.b16 %v317
    %v1970 = vunpack.c.h.b16 %v317
    %v1971 = vunpack.c.l.b16 %v318
    %v1972 = vunpack.c.h.b16 %v318
    %v1973 = vunpack.c.l.b16 %v319
    %v1974 = vunpack.c.h.b16 %v319
    %v1975 = vunpack.c.l.b16 %v320
    %v1976 = vunpack.c.h.b16 %v320
    %v1977 = vunpack.c.l.b16 %v321
    %v1978 = vunpack.c.h.b16 %v321
    %v1979 = vunpack.c.l.b16 %v322
    %v1980 = vunpack.c.h.b16 %v322
    %v1981 = vunpack.c.l.b16 %v323
    %v1982 = vunpack.c.h.b16 %v323
    %v1983 = vunpack.c.l.b16 %v324
    %v1984 = vunpack.c.h.b16 %v324
    %v1985 = vunpack.c.l.b16 %v325
    %v1986 = vunpack.c.h.b16 %v325
    %v1987 = vunpack.c.l.b16 %v326
    %v1988 = vunpack.c.h.b16 %v326
    %v1989 = vunpack.c.l.b16 %v327
    %v1990 = vunpack.c.h.b16 %v327
    %v1991 = vunpack.c.l.b16 %v328
    %v1992 = vunpack.c.h.b16 %v328
    %v1993 = vunpack.c.l.b16 %v329
    %v1994 = vunpack.c.h.b16 %v329
    %v1995 = vunpack.c.l.b16 %v330
    %v1996 = vunpack.c.h.b16 %v330
    %v1997 = vunpack.c.l.b16 %v331
    %v1998 = vunpack.c.h.b16 %v331
    %v1999 = vunpack.c.l.b16 %v332
    %v2000 = vunpack.c.h.b16 %v332
    %v2001 = vunpack.c.l.b16 %v333
    %v2002 = vunpack.c.h.b16 %v333
    %v2003 = vunpack.c.l.b16 %v334
    %v2004 = vunpack.c.h.b16 %v334
    %v2005 = vunpack.c.l.b16 %v335
    %v2006 = vunpack.c.h.b16 %v335
    %v2007 = vunpack.c.l.b16 %v336
    %v2008 = vunpack.c.h.b16 %v336
    %v2009 = vunpack.c.l.b16 %v337
    %v2010 = vunpack.c.h.b16 %v337
    %v2011 = vunpack.c.l.b16 %v338
    %v2012 = vunpack.c.h.b16 %v338
    %v2013 = vunpack.c.l.b16 %v339
    %v2014 = vunpack.c.h.b16 %v339
    %v2015 = vunpack.c.l.b16 %v340
    %v2016 = vunpack.c.h.b16 %v340
    %v2017 = vunpack.c.l.b16 %v341
    %v2018 = vunpack.c.h.b16 %v341
    %v2019 = vunpack.c.l.b16 %v342
    %v2020 = vunpack.c.h.b16 %v342
    %v2021 = vunpack.c.l.b16 %v343
    %v2022 = vunpack.c.h.b16 %v343
    %v2023 = vunpack.c.l.b16 %v344
    %v2024 = vunpack.c.h.b16 %v344
    %v2025 = vunpack.c.l.b16 %v345
    %v2026 = vunpack.c.h.b16 %v345
    %v2027 = vunpack.c.l.b16 %v346
    %v2028 = vunpack.c.h.b16 %v346
    %v2029 = vunpack.c.l.b16 %v347
    %v2030 = vunpack.c.h.b16 %v347
    %v2031 = vunpack.c.l.b16 %v348
    %v2032 = vunpack.c.h.b16 %v348
    %v2033 = vunpack.c.l.b16 %v349
    %v2034 = vunpack.c.h.b16 %v349
    %v2035 = vunpack.c.l.b16 %v350
    %v2036 = vunpack.c.h.b16 %v350
    %v2037 = vunpack.c.l.b16 %v351
    %v2038 = vunpack.c.h.b16 %v351
    %v2039 = vunpack.c.l.b16 %v352
    %v2040 = vunpack.c.h.b16 %v352
    %v2041 = vunpack.c.l.b16 %v353
    %v2042 = vunpack.c.h.b16 %v353
    %v2043 = vunpack.c.l.b16 %v354
    %v2044 = vunpack.c.h.b16 %v354
    %v2045 = vunpack.c.l.b16 %v355
    %v2046 = vunpack.c.h.b16 %v355
    %v2047 = vunpack.c.l.b16 %v356
    %v2048 = vunpack.c.h.b16 %v356
    %v2049 = vunpack.c.l.b16 %v357
    %v2050 = vunpack.c.h.b16 %v357
    %v2051 = vunpack.c.l.b16 %v358
    %v2052 = vunpack.c.h.b16 %v358
    %v2053 = vunpack.c.l.b16 %v359
    %v2054 = vunpack.c.h.b16 %v359
    %v2055 = vunpack.c.l.b16 %v360
    %v2056 = vunpack.c.h.b16 %v360
    %v2057 = vunpack.c.l.b16 %v361
    %v2058 = vunpack.c.h.b16 %v361
    %v2059 = vunpack.c.l.b16 %v362
    %v2060 = vunpack.c.h.b16 %v362
    %v2061 = vunpack.c.l.b16 %v363
    %v2062 = vunpack.c.h.b16 %v363
    %v2063 = vunpack.c.l.b16 %v364
    %v2064 = vunpack.c.h.b16 %v364
    %v2065 = vunpack.c.l.b16 %v365
    %v2066 = vunpack.c.h.b16 %v365
    %v2067 = vunpack.c.l.b16 %v366
    %v2068 = vunpack.c.h.b16 %v366
    %v2069 = vunpack.c.l.b16 %v367
    %v2070 = vunpack.c.h.b16 %v367
    %v2071 = vunpack.c.l.b16 %v368
    %v2072 = vunpack.c.h.b16 %v368
    %v2073 = vunpack.c.l.b16 %v369
    %v2074 = vunpack.c.h.b16 %v369
    %v2075 = vunpack.c.l.b16 %v370
    %v2076 = vunpack.c.h.b16 %v370
    %v2077 = vunpack.c.l.b16 %v371
    %v2078 = vunpack.c.h.b16 %v371
    %v2079 = vunpack.c.l.b16 %v372
    %v2080 = vunpack.c.h.b16 %v372
    %v2081 = vunpack.c.l.b16 %v373
    %v2082 = vunpack.c.h.b16 %v373
    %v2083 = vunpack.c.l.b16 %v374
    %v2084 = vunpack.c.h.b16 %v374
    %v2085 = vunpack.c.l.b16 %v375
    %v2086 = vunpack.c.h.b16 %v375
    %v2087 = vunpack.c.l.b16 %v376
    %v2088 = vunpack.c.h.b16 %v376
    %v2089 = vunpack.c.l.b16 %v377
    %v2090 = vunpack.c.h.b16 %v377
    %v2091 = vunpack.c.l.b16 %v378
    %v2092 = vunpack.c.h.b16 %v378
    %v2093 = vunpack.c.l.b16 %v379
    %v2094 = vunpack.c.h.b16 %v379
    %v2095 = vunpack.c.l.b16 %v380
    %v2096 = vunpack.c.h.b16 %v380
    %v2097 = vunpack.c.l.b16 %v381
    %v2098 = vunpack.c.h.b16 %v381
    %v2099 = vunpack.c.l.b16 %v382
    %v2100 = vunpack.c.h.b16 %v382
    %v2101 = vunpack.c.l.b16 %v383
    %v2102 = vunpack.c.h.b16 %v383
    %v2103 = vunpack.c.l.b16 %v384
    %v2104 = vunpack.c.h.b16 %v384
    %v2105 = vunpack.c.l.b16 %v385
    %v2106 = vunpack.c.h.b16 %v385
    %v2107 = vunpack.c.l.b16 %v386
    %v2108 = vunpack.c.h.b16 %v386
    %v2109 = vunpack.c.l.b16 %v387
    %v2110 = vunpack.c.h.b16 %v387
    %v2111 = vunpack.c.l.b16 %v388
    %v2112 = vunpack.c.h.b16 %v388
    %v2113 = vunpack.c.l.b16 %v389
    %v2114 = vunpack.c.h.b16 %v389
    %v2115 = vunpack.c.l.b16 %v390
    %v2116 = vunpack.c.h.b16 %v390
    %v2117 = vunpack.c.l.b16 %v391
    %v2118 = vunpack.c.h.b16 %v391
    %v2119 = vunpack.c.l.b16 %v392
    %v2120 = vunpack.c.h.b16 %v392
    %v2121 = vunpack.c.l.b16 %v393
    %v2122 = vunpack.c.h.b16 %v393
    %v2123 = vunpack.c.l.b16 %v394
    %v2124 = vunpack.c.h.b16 %v394
    %v2125 = vunpack.c.l.b16 %v395
    %v2126 = vunpack.c.h.b16 %v395
    %v2127 = vunpack.c.l.b16 %v396
    %v2128 = vunpack.c.h.b16 %v396
    %v2129 = vunpack.c.l.b16 %v397
    %v2130 = vunpack.c.h.b16 %v397
    %v2131 = vunpack.c.l.b16 %v398
    %v2132 = vunpack.c.h.b16 %v398
    %v2133 = vunpack.c.l.b16 %v399
    %v2134 = vunpack.c.h.b16 %v399
    %v2135 = vunpack.c.l.b16 %v400
    %v2136 = vunpack.c.h.b16 %v400
    %v2137 = vunpack.c.l.b16 %v401
    %v2138 = vunpack.c.h.b16 %v401
    %v2139 = vunpack.c.l.b16 %v402
    %v2140 = vunpack.c.h.b16 %v402
    %v2141 = vunpack.c.l.b16 %v403
    %v2142 = vunpack.c.h.b16 %v403
    %v2143 = vunpack.c.l.b16 %v404
    %v2144 = vunpack.c.h.b16 %v404
    %v2145 = vunpack.c.l.b16 %v405
    %v2146 = vunpack.c.h.b16 %v405
    %v2147 = vunpack.c.l.b16 %v406
    %v2148 = vunpack.c.h.b16 %v406
    %v2149 = vunpack.c.l.b16 %v407
    %v2150 = vunpack.c.h.b16 %v407
    %v2151 = vunpack.c.l.b16 %v408
    %v2152 = vunpack.c.h.b16 %v408
    %v2153 = vunpack.c.l.b16 %v409
    %v2154 = vunpack.c.h.b16 %v409
    %v2155 = vunpack.c.l.b16 %v410
    %v2156 = vunpack.c.h.b16 %v410
    %v2157 = vunpack.c.l.b16 %v411
    %v2158 = vunpack.c.h.b16 %v411
    %v2159 = vunpack.c.l.b16 %v412
    %v2160 = vunpack.c.h.b16 %v412
    %v2161 = vunpack.c.l.b16 %v413
    %v2162 = vunpack.c.h.b16 %v413
    %v2163 = vunpack.c.l.b16 %v414
    %v2164 = vunpack.c.h.b16 %v414
    %v2165 = vunpack.c.l.b16 %v415
    %v2166 = vunpack.c.h.b16 %v415
    %v2167 = vunpack.c.l.b16 %v416
    %v2168 = vunpack.c.h.b16 %v416
    %v2169 = vunpack.c.l.b16 %v417
    %v2170 = vunpack.c.h.b16 %v417
    %v2171 = vunpack.c.l.b16 %v418
    %v2172 = vunpack.c.h.b16 %v418
    %v2173 = vunpack.c.l.b16 %v419
    %v2174 = vunpack.c.h.b16 %v419
    %v2175 = vunpack.c.l.b16 %v420
    %v2176 = vunpack.c.h.b16 %v420
    %v2177 = vunpack.c.l.b16 %v421
    %v2178 = vunpack.c.h.b16 %v421
    %v2179 = vunpack.c.l.b16 %v422
    %v2180 = vunpack.c.h.b16 %v422
    %v2181 = vunpack.c.l.b16 %v423
    %v2182 = vunpack.c.h.b16 %v423
    %v2183 = vunpack.c.l.b16 %v424
    %v2184 = vunpack.c.h.b16 %v424
    %v2185 = vunpack.c.l.b16 %v425
    %v2186 = vunpack.c.h.b16 %v425
    %v2187 = vunpack.c.l.b16 %v426
    %v2188 = vunpack.c.h.b16 %v426
    %v2189 = vunpack.c.l.b16 %v427
    %v2190 = vunpack.c.h.b16 %v427
    %v2191 = vunpack.c.l.b16 %v428
    %v2192 = vunpack.c.h.b16 %v428
    %v2193 = vunpack.c.l.b16 %v429
    %v2194 = vunpack.c.h.b16 %v429
    %v2195 = vunpack.c.l.b16 %v430
    %v2196 = vunpack.c.h.b16 %v430
    %v2197 = vunpack.c.l.b16 %v431
    %v2198 = vunpack.c.h.b16 %v431
    %v2199 = vunpack.c.l.b16 %v432
    %v2200 = vunpack.c.h.b16 %v432
    %v2201 = vunpack.c.l.b16 %v433
    %v2202 = vunpack.c.h.b16 %v433
    %v2203 = vunpack.c.l.b16 %v434
    %v2204 = vunpack.c.h.b16 %v434
    %v2205 = vunpack.c.l.b16 %v435
    %v2206 = vunpack.c.h.b16 %v435
    %v2207 = vunpack.c.l.b16 %v436
    %v2208 = vunpack.c.h.b16 %v436
    %v2209 = vunpack.c.l.b16 %v437
    %v2210 = vunpack.c.h.b16 %v437
    %v2211 = vunpack.c.l.b16 %v438
    %v2212 = vunpack.c.h.b16 %v438
    %v2213 = vunpack.c.l.b16 %v439
    %v2214 = vunpack.c.h.b16 %v439
    %v2215 = vunpack.c.l.b16 %v440
    %v2216 = vunpack.c.h.b16 %v440
    %v2217 = vunpack.c.l.b16 %v441
    %v2218 = vunpack.c.h.b16 %v441
    %v2219 = vunpack.c.l.b16 %v442
    %v2220 = vunpack.c.h.b16 %v442
    %v2221 = vunpack.c.l.b16 %v443
    %v2222 = vunpack.c.h.b16 %v443
    %v2223 = vunpack.c.l.b16 %v444
    %v2224 = vunpack.c.h.b16 %v444
    %v2225 = vunpack.c.l.b16 %v445
    %v2226 = vunpack.c.h.b16 %v445
    %v2227 = vunpack.c.l.b16 %v446
    %v2228 = vunpack.c.h.b16 %v446
    %v2229 = vunpack.c.l.b16 %v447
    %v2230 = vunpack.c.h.b16 %v447
    %v2231 = vunpack.c.l.b16 %v448
    %v2232 = vunpack.c.h.b16 %v448
    %v2233 = vunpack.c.l.b16 %v449
    %v2234 = vunpack.c.h.b16 %v449
    %v2235 = vunpack.c.l.b16 %v450
    %v2236 = vunpack.c.h.b16 %v450
    %v2237 = vunpack.c.l.b16 %v451
    %v2238 = vunpack.c.h.b16 %v451
    %v2239 = vunpack.c.l.b16 %v452
    %v2240 = vunpack.c.h.b16 %v452
    %v2241 = vunpack.c.l.b16 %v453
    %v2242 = vunpack.c.h.b16 %v453
    %v2243 = vunpack.c.l.b16 %v454
    %v2244 = vunpack.c.h.b16 %v454
    %v2245 = vunpack.c.l.b16 %v455
    %v2246 = vunpack.c.h.b16 %v455
    %v2247 = vunpack.c.l.b16 %v456
    %v2248 = vunpack.c.h.b16 %v456
    %v2249 = vunpack.c.l.b16 %v457
    %v2250 = vunpack.c.h.b16 %v457
    %v2251 = vunpack.c.l.b16 %v458
    %v2252 = vunpack.c.h.b16 %v458
    %v2253 = vunpack.c.l.b16 %v459
    %v2254 = vunpack.c.h.b16 %v459
    %v2255 = vunpack.c.l.b16 %v460
    %v2256 = vunpack.c.h.b16 %v460
    %v2257 = vunpack.c.l.b16 %v461
    %v2258 = vunpack.c.h.b16 %v461
    %v2259 = vunpack.c.l.b16 %v462
    %v2260 = vunpack.c.h.b16 %v462
    %v2261 = vunpack.c.l.b16 %v463
    %v2262 = vunpack.c.h.b16 %v463
    %v2263 = vunpack.c.l.b16 %v464
    %v2264 = vunpack.c.h.b16 %v464
    %v2265 = vunpack.c.l.b16 %v465
    %v2266 = vunpack.c.h.b16 %v465
    %v2267 = vunpack.c.l.b16 %v466
    %v2268 = vunpack.c.h.b16 %v466
    %v2269 = vunpack.c.l.b16 %v467
    %v2270 = vunpack.c.h.b16 %v467
    %v2271 = vunpack.c.l.b16 %v468
    %v2272 = vunpack.c.h.b16 %v468
    %v2273 = vunpack.c.l.b16 %v469
    %v2274 = vunpack.c.h.b16 %v469
    %v2275 = vunpack.c.l.b16 %v470
    %v2276 = vunpack.c.h.b16 %v470
    %v2277 = vunpack.c.l.b16 %v471
    %v2278 = vunpack.c.h.b16 %v471
    %v2279 = vunpack.c.l.b16 %v472
    %v2280 = vunpack.c.h.b16 %v472
    %v2281 = vunpack.c.l.b16 %v473
    %v2282 = vunpack.c.h.b16 %v473
    %v2283 = vunpack.c.l.b16 %v474
    %v2284 = vunpack.c.h.b16 %v474
    %v2285 = vunpack.c.l.b16 %v475
    %v2286 = vunpack.c.h.b16 %v475
    %v2287 = vunpack.c.l.b16 %v476
    %v2288 = vunpack.c.h.b16 %v476
    %v2289 = vunpack.c.l.b16 %v477
    %v2290 = vunpack.c.h.b16 %v477
    %v2291 = vunpack.c.l.b16 %v478
    %v2292 = vunpack.c.h.b16 %v478
    %v2293 = vunpack.c.l.b16 %v479
    %v2294 = vunpack.c.h.b16 %v479
    %v2295 = vunpack.c.l.b16 %v480
    %v2296 = vunpack.c.h.b16 %v480
    %v2297 = vunpack.c.l.b16 %v481
    %v2298 = vunpack.c.h.b16 %v481
    %v2299 = vunpack.c.l.b16 %v482
    %v2300 = vunpack.c.h.b16 %v482
    %v2301 = vunpack.c.l.b16 %v483
    %v2302 = vunpack.c.h.b16 %v483
    %v2303 = vunpack.c.l.b16 %v484
    %v2304 = vunpack.c.h.b16 %v484
    %v2305 = vunpack.c.l.b16 %v485
    %v2306 = vunpack.c.h.b16 %v485
    %v2307 = vunpack.c.l.b16 %v486
    %v2308 = vunpack.c.h.b16 %v486
    %v2309 = vunpack.c.l.b16 %v487
    %v2310 = vunpack.c.h.b16 %v487
    %v2311 = vunpack.c.l.b16 %v488
    %v2312 = vunpack.c.h.b16 %v488
    %v2313 = vunpack.c.l.b16 %v489
    %v2314 = vunpack.c.h.b16 %v489
    %v2315 = vunpack.c.l.b16 %v490
    %v2316 = vunpack.c.h.b16 %v490
    %v2317 = vunpack.c.l.b16 %v491
    %v2318 = vunpack.c.h.b16 %v491
    %v2319 = vunpack.c.l.b16 %v492
    %v2320 = vunpack.c.h.b16 %v492
    %v2321 = vunpack.c.l.b16 %v493
    %v2322 = vunpack.c.h.b16 %v493
    %v2323 = vunpack.c.l.b16 %v494
    %v2324 = vunpack.c.h.b16 %v494
    %v2325 = vunpack.c.l.b16 %v495
    %v2326 = vunpack.c.h.b16 %v495
    %v2327 = vunpack.c.l.b16 %v496
    %v2328 = vunpack.c.h.b16 %v496
    %v2329 = vunpack.c.l.b16 %v497
    %v2330 = vunpack.c.h.b16 %v497
    %v2331 = vunpack.c.l.b16 %v498
    %v2332 = vunpack.c.h.b16 %v498
    %v2333 = vunpack.c.l.b16 %v499
    %v2334 = vunpack.c.h.b16 %v499
    %v2335 = vunpack.c.l.b16 %v500
    %v2336 = vunpack.c.h.b16 %v500
    %v2337 = vunpack.c.l.b16 %v501
    %v2338 = vunpack.c.h.b16 %v501
    %v2339 = vunpack.c.l.b16 %v502
    %v2340 = vunpack.c.h.b16 %v502
    %v2341 = vunpack.c.l.b16 %v503
    %v2342 = vunpack.c.h.b16 %v503
    %v2343 = vunpack.c.l.b16 %v504
    %v2344 = vunpack.c.h.b16 %v504
    %v2345 = vunpack.c.l.b16 %v505
    %v2346 = vunpack.c.h.b16 %v505
    %v2347 = vunpack.c.l.b16 %v506
    %v2348 = vunpack.c.h.b16 %v506
    %v2349 = vunpack.c.l.b16 %v507
    %v2350 = vunpack.c.h.b16 %v507
    %v2351 = vunpack.c.l.b16 %v508
    %v2352 = vunpack.c.h.b16 %v508
    %v2353 = vunpack.c.l.b16 %v509
    %v2354 = vunpack.c.h.b16 %v509
    %v2355 = vunpack.c.l.b16 %v510
    %v2356 = vunpack.c.h.b16 %v510
    %v2357 = vunpack.c.l.b16 %v511
    %v2358 = vunpack.c.h.b16 %v511
    %v2359 = vunpack.c.l.b16 %v512
    %v2360 = vunpack.c.h.b16 %v512
    %v2361 = vunpack.c.l.b16 %v513
    %v2362 = vunpack.c.h.b16 %v513
    %v2363 = vunpack.c.l.b16 %v514
    %v2364 = vunpack.c.h.b16 %v514
    %v2365 = vunpack.c.l.b16 %v515
    %v2366 = vunpack.c.h.b16 %v515
    %v2367 = vunpack.c.l.b16 %v516
    %v2368 = vunpack.c.h.b16 %v516
    %v2369 = vunpack.c.l.b16 %v517
    %v2370 = vunpack.c.h.b16 %v517
    %v2371 = vunpack.c.l.b16 %v518
    %v2372 = vunpack.c.h.b16 %v518
    %v2373 = vunpack.c.l.b16 %v519
    %v2374 = vunpack.c.h.b16 %v519
    %v2375 = vunpack.c.l.b16 %v520
    %v2376 = vunpack.c.h.b16 %v520
    %v2377 = vunpack.c.l.b16 %v521
    %v2378 = vunpack.c.h.b16 %v521
    %v2379 = vunpack.c.l.b16 %v522
    %v2380 = vunpack.c.h.b16 %v522
    %v2381 = vunpack.c.l.b16 %v523
    %v2382 = vunpack.c.h.b16 %v523
    %v2383 = vunpack.c.l.b16 %v524
    %v2384 = vunpack.c.h.b16 %v524
    %v2385 = vunpack.c.l.b16 %v525
    %v2386 = vunpack.c.h.b16 %v525
    %v2387 = vunpack.c.l.b16 %v526
    %v2388 = vunpack.c.h.b16 %v526
    %v2389 = vunpack.c.l.b16 %v527
    %v2390 = vunpack.c.h.b16 %v527
    %v2391 = vunpack.c.l.b16 %v528
    %v2392 = vunpack.c.h.b16 %v528
    %v2393 = vunpack.c.l.b16 %v529
    %v2394 = vunpack.c.h.b16 %v529
    %v2395 = vunpack.c.l.b16 %v530
    %v2396 = vunpack.c.h.b16 %v530
    %v2397 = vunpack.c.l.b16 %v531
    %v2398 = vunpack.c.h.b16 %v531
    %v2399 = vunpack.c.l.b16 %v532
    %v2400 = vunpack.c.h.b16 %v532
    %v2401 = vunpack.c.l.b16 %v533
    %v2402 = vunpack.c.h.b16 %v533
    %v2403 = vunpack.c.l.b16 %v534
    %v2404 = vunpack.c.h.b16 %v534
    %v2405 = vunpack.c.l.b16 %v535
    %v2406 = vunpack.c.h.b16 %v535
    %v2407 = vunpack.c.l.b16 %v536
    %v2408 = vunpack.c.h.b16 %v536
    %v2409 = vunpack.c.l.b16 %v537
    %v2410 = vunpack.c.h.b16 %v537
    %v2411 = vunpack.c.l.b16 %v538
    %v2412 = vunpack.c.h.b16 %v538
    %v2413 = vunpack.c.l.b16 %v539
    %v2414 = vunpack.c.h.b16 %v539
    %v2415 = vunpack.c.l.b16 %v540
    %v2416 = vunpack.c.h.b16 %v540
    %v2417 = vunpack.c.l.b16 %v541
    %v2418 = vunpack.c.h.b16 %v541
    %v2419 = vunpack.c.l.b16 %v542
    %v2420 = vunpack.c.h.b16 %v542
    %v2421 = vunpack.c.l.b16 %v543
    %v2422 = vunpack.c.h.b16 %v543
    %v2423 = vunpack.c.l.b16 %v544
    %v2424 = vunpack.c.h.b16 %v544
    %v2425 = vunpack.c.l.b16 %v545
    %v2426 = vunpack.c.h.b16 %v545
    %v2427 = vunpack.c.l.b16 %v546
    %v2428 = vunpack.c.h.b16 %v546
    %v2429 = vunpack.c.l.b16 %v547
    %v2430 = vunpack.c.h.b16 %v547
    %v2431 = vunpack.c.l.b16 %v548
    %v2432 = vunpack.c.h.b16 %v548
    %v2433 = vunpack.c.l.b16 %v549
    %v2434 = vunpack.c.h.b16 %v549
    %v2435 = vunpack.c.l.b16 %v550
    %v2436 = vunpack.c.h.b16 %v550
    %v2437 = vunpack.c.l.b16 %v551
    %v2438 = vunpack.c.h.b16 %v551
    %v2439 = vunpack.c.l.b16 %v552
    %v2440 = vunpack.c.h.b16 %v552
    %v2441 = vunpack.c.l.b16 %v553
    %v2442 = vunpack.c.h.b16 %v553
    %v2443 = vunpack.c.l.b16 %v554
    %v2444 = vunpack.c.h.b16 %v554
    %v2445 = vunpack.c.l.b16 %v555
    %v2446 = vunpack.c.h.b16 %v555
    %v2447 = vunpack.c.l.b16 %v556
    %v2448 = vunpack.c.h.b16 %v556
    %v2449 = vunpack.c.l.b16 %v557
    %v2450 = vunpack.c.h.b16 %v557
    %v2451 = vunpack.c.l.b16 %v558
    %v2452 = vunpack.c.h.b16 %v558
    %v2453 = vunpack.c.l.b16 %v559
    %v2454 = vunpack.c.h.b16 %v559
    %v2455 = vunpack.c.l.b16 %v560
    %v2456 = vunpack.c.h.b16 %v560
    %v2457 = vunpack.c.l.b16 %v561
    %v2458 = vunpack.c.h.b16 %v561
    %v2459 = vunpack.c.l.b16 %v562
    %v2460 = vunpack.c.h.b16 %v562
    %v2461 = vunpack.c.l.b16 %v563
    %v2462 = vunpack.c.h.b16 %v563
    %v2463 = vunpack.c.l.b16 %v564
    %v2464 = vunpack.c.h.b16 %v564
    %v2465 = vunpack.c.l.b16 %v565
    %v2466 = vunpack.c.h.b16 %v565
    %v2467 = vunpack.c.l.b16 %v566
    %v2468 = vunpack.c.h.b16 %v566
    %v2469 = vunpack.c.l.b16 %v567
    %v2470 = vunpack.c.h.b16 %v567
    %v2471 = vunpack.c.l.b16 %v568
    %v2472 = vunpack.c.h.b16 %v568
    %v2473 = vunpack.c.l.b16 %v569
    %v2474 = vunpack.c.h.b16 %v569
    %v2475 = vunpack.c.l.b16 %v570
    %v2476 = vunpack.c.h.b16 %v570
    %v2477 = vunpack.c.l.b16 %v571
    %v2478 = vunpack.c.h.b16 %v571
    %v2479 = vunpack.c.l.b16 %v572
    %v2480 = vunpack.c.h.b16 %v572
    %v2481 = vunpack.c.l.b16 %v573
    %v2482 = vunpack.c.h.b16 %v573
    %v2483 = vunpack.c.l.b16 %v574
    %v2484 = vunpack.c.h.b16 %v574
    %v2485 = vunpack.c.l.b16 %v575
    %v2486 = vunpack.c.h.b16 %v575
    %v2487 = vunpack.c.l.b16 %v576
    %v2488 = vunpack.c.h.b16 %v576
    %v2489 = vunpack.c.l.b16 %v577
    %v2490 = vunpack.c.h.b16 %v577
    %v2491 = vunpack.c.l.b16 %v578
    %v2492 = vunpack.c.h.b16 %v578
    %v2493 = vunpack.c.l.b16 %v579
    %v2494 = vunpack.c.h.b16 %v579
    %v2495 = vunpack.c.l.b16 %v580
    %v2496 = vunpack.c.h.b16 %v580
    %v2497 = vunpack.c.l.b16 %v581
    %v2498 = vunpack.c.h.b16 %v581
    %v2499 = vunpack.c.l.b16 %v582
    %v2500 = vunpack.c.h.b16 %v582
    %v2501 = vunpack.c.l.b16 %v583
    %v2502 = vunpack.c.h.b16 %v583
    %v2503 = vunpack.c.l.b16 %v584
    %v2504 = vunpack.c.h.b16 %v584
    %v2505 = vunpack.c.l.b16 %v585
    %v2506 = vunpack.c.h.b16 %v585
    %v2507 = vunpack.c.l.b16 %v586
    %v2508 = vunpack.c.h.b16 %v586
    %v2509 = vunpack.c.l.b16 %v587
    %v2510 = vunpack.c.h.b16 %v587
    %v2511 = vunpack.c.l.b16 %v588
    %v2512 = vunpack.c.h.b16 %v588
    %v2513 = vunpack.c.l.b16 %v589
    %v2514 = vunpack.c.h.b16 %v589
    %v2515 = vunpack.c.l.b16 %v590
    %v2516 = vunpack.c.h.b16 %v590
    %v2517 = vunpack.c.l.b16 %v591
    %v2518 = vunpack.c.h.b16 %v591
    %v2519 = vunpack.c.l.b16 %v592
    %v2520 = vunpack.c.h.b16 %v592
    %v2521 = vunpack.c.l.b16 %v593
    %v2522 = vunpack.c.h.b16 %v593
    %v2523 = vunpack.c.l.b16 %v594
    %v2524 = vunpack.c.h.b16 %v594
    %v2525 = vunpack.c.l.b16 %v595
    %v2526 = vunpack.c.h.b16 %v595
    %v2527 = vunpack.c.l.b16 %v596
    %v2528 = vunpack.c.h.b16 %v596
    %v2529 = vunpack.c.l.b16 %v597
    %v2530 = vunpack.c.h.b16 %v597
    %v2531 = vunpack.c.l.b16 %v598
    %v2532 = vunpack.c.h.b16 %v598
    %v2533 = vunpack.c.l.b16 %v599
    %v2534 = vunpack.c.h.b16 %v599
    %v2535 = vunpack.c.l.b16 %v600
    %v2536 = vunpack.c.h.b16 %v600
    %v2537 = vunpack.c.l.b16 %v601
    %v2538 = vunpack.c.h.b16 %v601
    %v2539 = vunpack.c.l.b16 %v602
    %v2540 = vunpack.c.h.b16 %v602
    %v2541 = vunpack.c.l.b16 %v603
    %v2542 = vunpack.c.h.b16 %v603
    %v2543 = vunpack.c.l.b16 %v604
    %v2544 = vunpack.c.h.b16 %v604
    %v2545 = vunpack.c.l.b16 %v605
    %v2546 = vunpack.c.h.b16 %v605
    %v2547 = vunpack.c.l.b16 %v606
    %v2548 = vunpack.c.h.b16 %v606
    %v2549 = vunpack.c.l.b16 %v607
    %v2550 = vunpack.c.h.b16 %v607
    %v2551 = vunpack.c.l.b16 %v608
    %v2552 = vunpack.c.h.b16 %v608
    %v2553 = vunpack.c.l.b16 %v609
    %v2554 = vunpack.c.h.b16 %v609
    %v2555 = vunpack.c.l.b16 %v610
    %v2556 = vunpack.c.h.b16 %v610
    %v2557 = vunpack.c.l.b16 %v611
    %v2558 = vunpack.c.h.b16 %v611
    %v2559 = vunpack.c.l.b16 %v612
    %v2560 = vunpack.c.h.b16 %v612
    %v2561 = vunpack.c.l.b16 %v613
    %v2562 = vunpack.c.h.b16 %v613
    %v2563 = vunpack.c.l.b16 %v614
    %v2564 = vunpack.c.h.b16 %v614
    %v2565 = vunpack.c.l.b16 %v615
    %v2566 = vunpack.c.h.b16 %v615
    %v2567 = vunpack.c.l.b16 %v616
    %v2568 = vunpack.c.h.b16 %v616
    %v2569 = vunpack.c.l.b16 %v617
    %v2570 = vunpack.c.h.b16 %v617
    %v2571 = vunpack.c.l.b16 %v618
    %v2572 = vunpack.c.h.b16 %v618
    %v2573 = vunpack.c.l.b16 %v619
    %v2574 = vunpack.c.h.b16 %v619
    %v2575 = vunpack.c.l.b16 %v620
    %v2576 = vunpack.c.h.b16 %v620
    %v2577 = vunpack.c.l.b16 %v621
    %v2578 = vunpack.c.h.b16 %v621
    %v2579 = vunpack.c.l.b16 %v622
    %v2580 = vunpack.c.h.b16 %v622
    %v2581 = vunpack.c.l.b16 %v623
    %v2582 = vunpack.c.h.b16 %v623
    %v2583 = vunpack.c.l.b16 %v624
    %v2584 = vunpack.c.h.b16 %v624
    %v2585 = vunpack.c.l.b16 %v625
    %v2586 = vunpack.c.h.b16 %v625
    %v2587 = vunpack.c.l.b16 %v626
    %v2588 = vunpack.c.h.b16 %v626
    %v2589 = vunpack.c.l.b16 %v627
    %v2590 = vunpack.c.h.b16 %v627
    %v2591 = vunpack.c.l.b16 %v628
    %v2592 = vunpack.c.h.b16 %v628
    %v2593 = vunpack.c.l.b16 %v629
    %v2594 = vunpack.c.h.b16 %v629
    %v2595 = vunpack.c.l.b16 %v630
    %v2596 = vunpack.c.h.b16 %v630
    %v2597 = vunpack.c.l.b16 %v631
    %v2598 = vunpack.c.h.b16 %v631
    %v2599 = vunpack.c.l.b16 %v632
    %v2600 = vunpack.c.h.b16 %v632
    %v2601 = vunpack.c.l.b16 %v633
    %v2602 = vunpack.c.h.b16 %v633
    %v2603 = vunpack.c.l.b16 %v634
    %v2604 = vunpack.c.h.b16 %v634
    %v2605 = vunpack.c.l.b16 %v635
    %v2606 = vunpack.c.h.b16 %v635
    %v2607 = vunpack.c.l.b16 %v636
    %v2608 = vunpack.c.h.b16 %v636
    %v2609 = vunpack.c.l.b16 %v637
    %v2610 = vunpack.c.h.b16 %v637
    %v2611 = vunpack.c.l.b16 %v638
    %v2612 = vunpack.c.h.b16 %v638
    %v2613 = vunpack.c.l.b16 %v639
    %v2614 = vunpack.c.h.b16 %v639
    %v2615 = vunpack.c.l.b16 %v640
    %v2616 = vunpack.c.h.b16 %v640
    %v2617 = vunpack.c.l.b16 %v641
    %v2618 = vunpack.c.h.b16 %v641
    %v2619 = vunpack.c.l.b16 %v642
    %v2620 = vunpack.c.h.b16 %v642
    %v2621 = vunpack.c.l.b16 %v643
    %v2622 = vunpack.c.h.b16 %v643
    %v2623 = vunpack.c.l.b16 %v644
    %v2624 = vunpack.c.h.b16 %v644
    %v2625 = vunpack.c.l.b16 %v645
    %v2626 = vunpack.c.h.b16 %v645
    %v2627 = vunpack.c.l.b16 %v646
    %v2628 = vunpack.c.h.b16 %v646
    %v2629 = vunpack.c.l.b16 %v647
    %v2630 = vunpack.c.h.b16 %v647
    %v2631 = vunpack.c.l.b16 %v648
    %v2632 = vunpack.c.h.b16 %v648
    %v2633 = vunpack.c.l.b16 %v649
    %v2634 = vunpack.c.h.b16 %v649
    %v2635 = vunpack.c.l.b16 %v650
    %v2636 = vunpack.c.h.b16 %v650
    %v2637 = vunpack.c.l.b16 %v651
    %v2638 = vunpack.c.h.b16 %v651
    %v2639 = vunpack.c.l.b16 %v652
    %v2640 = vunpack.c.h.b16 %v652
    %v2641 = vunpack.c.l.b16 %v653
    %v2642 = vunpack.c.h.b16 %v653
    %v2643 = vunpack.c.l.b16 %v654
    %v2644 = vunpack.c.h.b16 %v654
    %v2645 = vunpack.c.l.b16 %v655
    %v2646 = vunpack.c.h.b16 %v655
    %v2647 = vunpack.c.l.b16 %v656
    %v2648 = vunpack.c.h.b16 %v656
    %v2649 = vunpack.c.l.b16 %v657
    %v2650 = vunpack.c.h.b16 %v657
    %v2651 = vunpack.c.l.b16 %v658
    %v2652 = vunpack.c.h.b16 %v658
    %v2653 = vunpack.c.l.b16 %v659
    %v2654 = vunpack.c.h.b16 %v659
    %v2655 = vunpack.c.l.b16 %v660
    %v2656 = vunpack.c.h.b16 %v660
    %v2657 = vunpack.c.l.b16 %v661
    %v2658 = vunpack.c.h.b16 %v661
    %v2659 = vunpack.c.l.b16 %v662
    %v2660 = vunpack.c.h.b16 %v662
    %v2661 = vunpack.c.l.b16 %v663
    %v2662 = vunpack.c.h.b16 %v663
    %v2663 = vunpack.c.l.b16 %v664
    %v2664 = vunpack.c.h.b16 %v664
    %v2665 = vunpack.c.l.b16 %v665
    %v2666 = vunpack.c.h.b16 %v665
    %v2667 = vunpack.c.l.b16 %v666
    %v2668 = vunpack.c.h.b16 %v666
    %v2669 = vunpack.c.l.b16 %v667
    %v2670 = vunpack.c.h.b16 %v667
    %v2671 = vunpack.c.l.b16 %v668
    %v2672 = vunpack.c.h.b16 %v668
    %v2673 = vunpack.c.l.b16 %v669
    %v2674 = vunpack.c.h.b16 %v669
    %v2675 = vunpack.c.l.b16 %v670
    %v2676 = vunpack.c.h.b16 %v670
    %v2677 = vunpack.c.l.b16 %v671
    %v2678 = vunpack.c.h.b16 %v671
    %v2679 = vunpack.c.l.b16 %v672
    %v2680 = vunpack.c.h.b16 %v672
    %v2681 = vunpack.c.l.b16 %v673
    %v2682 = vunpack.c.h.b16 %v673
    %v2683 = vunpack.c.l.b16 %v674
    %v2684 = vunpack.c.h.b16 %v674
    %v2685 = vunpack.c.l.b16 %v675
    %v2686 = vunpack.c.h.b16 %v675
    %v2687 = vunpack.c.l.b16 %v676
    %v2688 = vunpack.c.h.b16 %v676
    %v2689 = vunpack.c.l.b16 %v677
    %v2690 = vunpack.c.h.b16 %v677
    %v2691 = vunpack.c.l.b16 %v678
    %v2692 = vunpack.c.h.b16 %v678
    %v2693 = vunpack.c.l.b16 %v679
    %v2694 = vunpack.c.h.b16 %v679
    %v2695 = vunpack.c.l.b16 %v680
    %v2696 = vunpack.c.h.b16 %v680
    %v2697 = vunpack.c.l.b16 %v681
    %v2698 = vunpack.c.h.b16 %v681
    %v2699 = vunpack.c.l.b16 %v682
    %v2700 = vunpack.c.h.b16 %v682
    %v2701 = vunpack.c.l.b16 %v683
    %v2702 = vunpack.c.h.b16 %v683
    %v2703 = vunpack.c.l.b16 %v684
    %v2704 = vunpack.c.h.b16 %v684
    %v2705 = vunpack.c.l.b16 %v685
    %v2706 = vunpack.c.h.b16 %v685
    %v2707 = vunpack.c.l.b16 %v686
    %v2708 = vunpack.c.h.b16 %v686
    %v2709 = vunpack.c.l.b16 %v687
    %v2710 = vunpack.c.h.b16 %v687
    %v2711 = vunpack.c.l.b16 %v688
    %v2712 = vunpack.c.h.b16 %v688
    %v2713 = vunpack.c.l.b16 %v689
    %v2714 = vunpack.c.h.b16 %v689
    %v2715 = vunpack.c.l.b16 %v690
    %v2716 = vunpack.c.h.b16 %v690
    %v2717 = vunpack.c.l.b16 %v691
    %v2718 = vunpack.c.h.b16 %v691
    %v2719 = vunpack.c.l.b16 %v692
    %v2720 = vunpack.c.h.b16 %v692
    %v2721 = vunpack.c.l.b16 %v693
    %v2722 = vunpack.c.h.b16 %v693
    %v2723 = vunpack.c.l.b16 %v694
    %v2724 = vunpack.c.h.b16 %v694
    %v2725 = vunpack.c.l.b16 %v695
    %v2726 = vunpack.c.h.b16 %v695
    %v2727 = vunpack.c.l.b16 %v696
    %v2728 = vunpack.c.h.b16 %v696
    %v2729 = vunpack.c.l.b16 %v697
    %v2730 = vunpack.c.h.b16 %v697
    %v2731 = vunpack.c.l.b16 %v698
    %v2732 = vunpack.c.h.b16 %v698
    %v2733 = vunpack.c.l.b16 %v699
    %v2734 = vunpack.c.h.b16 %v699
    %v2735 = vunpack.c.l.b16 %v700
    %v2736 = vunpack.c.h.b16 %v700
    %v2737 = vunpack.c.l.b16 %v701
    %v2738 = vunpack.c.h.b16 %v701
    %v2739 = vunpack.c.l.b16 %v702
    %v2740 = vunpack.c.h.b16 %v702
    %v2741 = vunpack.c.l.b16 %v703
    %v2742 = vunpack.c.h.b16 %v703
    %v2743 = vunpack.c.l.b16 %v704
    %v2744 = vunpack.c.h.b16 %v704
    %v2745 = vunpack.c.l.b16 %v705
    %v2746 = vunpack.c.h.b16 %v705
    %v2747 = vunpack.c.l.b16 %v706
    %v2748 = vunpack.c.h.b16 %v706
    %v2749 = vunpack.c.l.b16 %v707
    %v2750 = vunpack.c.h.b16 %v707
    %v2751 = vunpack.c.l.b16 %v708
    %v2752 = vunpack.c.h.b16 %v708
    %v2753 = vunpack.c.l.b16 %v709
    %v2754 = vunpack.c.h.b16 %v709
    %v2755 = vunpack.c.l.b16 %v710
    %v2756 = vunpack.c.h.b16 %v710
    %v2757 = vunpack.c.l.b16 %v711
    %v2758 = vunpack.c.h.b16 %v711
    %v2759 = vunpack.c.l.b16 %v712
    %v2760 = vunpack.c.h.b16 %v712
    %v2761 = vunpack.c.l.b16 %v713
    %v2762 = vunpack.c.h.b16 %v713
    %v2763 = vunpack.c.l.b16 %v714
    %v2764 = vunpack.c.h.b16 %v714
    %v2765 = vunpack.c.l.b16 %v715
    %v2766 = vunpack.c.h.b16 %v715
    %v2767 = vunpack.c.l.b16 %v716
    %v2768 = vunpack.c.h.b16 %v716
    %v2769 = vunpack.c.l.b16 %v717
    %v2770 = vunpack.c.h.b16 %v717
    %v2771 = vunpack.c.l.b16 %v718
    %v2772 = vunpack.c.h.b16 %v718
    %v2773 = vunpack.c.l.b16 %v719
    %v2774 = vunpack.c.h.b16 %v719
    %v2775 = vunpack.c.l.b16 %v720
    %v2776 = vunpack.c.h.b16 %v720
    %v2777 = vunpack.c.l.b16 %v721
    %v2778 = vunpack.c.h.b16 %v721
    %v2779 = vunpack.c.l.b16 %v722
    %v2780 = vunpack.c.h.b16 %v722
    %v2781 = vunpack.c.l.b16 %v723
    %v2782 = vunpack.c.h.b16 %v723
    %v2783 = vunpack.c.l.b16 %v724
    %v2784 = vunpack.c.h.b16 %v724
    %v2785 = vunpack.c.l.b16 %v725
    %v2786 = vunpack.c.h.b16 %v725
    %v2787 = vunpack.c.l.b16 %v726
    %v2788 = vunpack.c.h.b16 %v726
    %v2789 = vunpack.c.l.b16 %v727
    %v2790 = vunpack.c.h.b16 %v727
    %v2791 = vunpack.c.l.b16 %v728
    %v2792 = vunpack.c.h.b16 %v728
    %v2793 = vunpack.c.l.b16 %v729
    %v2794 = vunpack.c.h.b16 %v729
    %v2795 = vunpack.c.l.b16 %v730
    %v2796 = vunpack.c.h.b16 %v730
    %v2797 = vunpack.c.l.b16 %v731
    %v2798 = vunpack.c.h.b16 %v731
    %v2799 = vunpack.c.l.b16 %v732
    %v2800 = vunpack.c.h.b16 %v732
    %v2801 = vunpack.c.l.b16 %v733
    %v2802 = vunpack.c.h.b16 %v733
    %v2803 = vunpack.c.l.b16 %v734
    %v2804 = vunpack.c.h.b16 %v734
    %v2805 = vunpack.c.l.b16 %v735
    %v2806 = vunpack.c.h.b16 %v735
    %v2807 = vunpack.c.l.b16 %v736
    %v2808 = vunpack.c.h.b16 %v736
    %v2809 = vunpack.c.l.b16 %v737
    %v2810 = vunpack.c.h.b16 %v737
    %v2811 = vunpack.c.l.b16 %v738
    %v2812 = vunpack.c.h.b16 %v738
    %v2813 = vunpack.c.l.b16 %v739
    %v2814 = vunpack.c.h.b16 %v739
    %v2815 = vunpack.c.l.b16 %v740
    %v2816 = vunpack.c.h.b16 %v740
    %v2817 = vunpack.c.l.b16 %v741
    %v2818 = vunpack.c.h.b16 %v741
    %v2819 = vunpack.c.l.b16 %v742
    %v2820 = vunpack.c.h.b16 %v742
    %v2821 = vunpack.c.l.b16 %v743
    %v2822 = vunpack.c.h.b16 %v743
    %v2823 = vunpack.c.l.b16 %v744
    %v2824 = vunpack.c.h.b16 %v744
    %v2825 = vunpack.c.l.b16 %v745
    %v2826 = vunpack.c.h.b16 %v745
    %v2827 = vunpack.c.l.b16 %v746
    %v2828 = vunpack.c.h.b16 %v746
    %v2829 = vunpack.c.l.b16 %v747
    %v2830 = vunpack.c.h.b16 %v747
    %v2831 = vunpack.c.l.b16 %v748
    %v2832 = vunpack.c.h.b16 %v748
    %v2833 = vunpack.c.l.b16 %v749
    %v2834 = vunpack.c.h.b16 %v749
    %v2835 = vunpack.c.l.b16 %v750
    %v2836 = vunpack.c.h.b16 %v750
    %v2837 = vunpack.c.l.b16 %v751
    %v2838 = vunpack.c.h.b16 %v751
    %v2839 = vunpack.c.l.b16 %v752
    %v2840 = vunpack.c.h.b16 %v752
    %v2841 = vunpack.c.l.b16 %v753
    %v2842 = vunpack.c.h.b16 %v753
    %v2843 = vunpack.c.l.b16 %v754
    %v2844 = vunpack.c.h.b16 %v754
    %v2845 = vunpack.c.l.b16 %v755
    %v2846 = vunpack.c.h.b16 %v755
    %v2847 = vunpack.c.l.b16 %v756
    %v2848 = vunpack.c.h.b16 %v756
    %v2849 = vunpack.c.l.b16 %v757
    %v2850 = vunpack.c.h.b16 %v757
    %v2851 = vunpack.c.l.b16 %v758
    %v2852 = vunpack.c.h.b16 %v758
    %v2853 = vunpack.c.l.b16 %v759
    %v2854 = vunpack.c.h.b16 %v759
    %v2855 = vunpack.c.l.b16 %v760
    %v2856 = vunpack.c.h.b16 %v760
    %v2857 = vunpack.c.l.b16 %v761
    %v2858 = vunpack.c.h.b16 %v761
    %v2859 = vunpack.c.l.b16 %v762
    %v2860 = vunpack.c.h.b16 %v762
    %v2861 = vunpack.c.l.b16 %v763
    %v2862 = vunpack.c.h.b16 %v763
    %v2863 = vunpack.c.l.b16 %v764
    %v2864 = vunpack.c.h.b16 %v764
    %v2865 = vunpack.c.l.b16 %v765
    %v2866 = vunpack.c.h.b16 %v765
    %v2867 = vunpack.c.l.b16 %v766
    %v2868 = vunpack.c.h.b16 %v766
    %v2869 = vunpack.c.l.b16 %v767
    %v2870 = vunpack.c.h.b16 %v767
    %v2871 = vunpack.c.l.b16 %v768
    %v2872 = vunpack.c.h.b16 %v768
    %v2873 = vunpack.c.l.b16 %v769
    %v2874 = vunpack.c.h.b16 %v769
    %v2875 = vunpack.c.l.b16 %v770
    %v2876 = vunpack.c.h.b16 %v770
    %v2877 = vunpack.c.l.b16 %v771
    %v2878 = vunpack.c.h.b16 %v771
    %v2879 = vunpack.c.l.b16 %v772
    %v2880 = vunpack.c.h.b16 %v772
    %v2881 = vunpack.c.l.b16 %v773
    %v2882 = vunpack.c.h.b16 %v773
    %v2883 = vunpack.c.l.b16 %v774
    %v2884 = vunpack.c.h.b16 %v774
    %v2885 = vunpack.c.l.b16 %v775
    %v2886 = vunpack.c.h.b16 %v775
    %v2887 = vunpack.c.l.b16 %v776
    %v2888 = vunpack.c.h.b16 %v776
    %v2889 = vunpack.c.l.b16 %v777
    %v2890 = vunpack.c.h.b16 %v777
    %v2891 = vunpack.c.l.b16 %v778
    %v2892 = vunpack.c.h.b16 %v778
    %v2893 = vunpack.c.l.b16 %v779
    %v2894 = vunpack.c.h.b16 %v779
    %v2895 = vunpack.c.l.b16 %v780
    %v2896 = vunpack.c.h.b16 %v780
    %v2897 = vunpack.c.l.b16 %v781
    %v2898 = vunpack.c.h.b16 %v781
    %v2899 = vunpack.c.l.b16 %v782
    %v2900 = vunpack.c.h.b16 %v782
    %v2901 = vunpack.c.l.b16 %v783
    %v2902 = vunpack.c.h.b16 %v783
    %v2903 = vunpack.c.l.b16 %v784
    %v2904 = vunpack.c.h.b16 %v784
    %v2905 = vunpack.c.l.b16 %v785
    %v2906 = vunpack.c.h.b16 %v785
    %v2907 = vunpack.c.l.b16 %v786
    %v2908 = vunpack.c.h.b16 %v786
    %v2909 = vunpack.c.l.b16 %v787
    %v2910 = vunpack.c.h.b16 %v787
    %v2911 = vunpack.c.l.b16 %v788
    %v2912 = vunpack.c.h.b16 %v788
    %v2913 = vunpack.c.l.b16 %v789
    %v2914 = vunpack.c.h.b16 %v789
    %v2915 = vunpack.c.l.b16 %v790
    %v2916 = vunpack.c.h.b16 %v790
    %v2917 = vunpack.c.l.b16 %v791
    %v2918 = vunpack.c.h.b16 %v791
    %v2919 = vunpack.c.l.b16 %v792
    %v2920 = vunpack.c.h.b16 %v792
    %v2921 = vunpack.c.l.b16 %v793
    %v2922 = vunpack.c.h.b16 %v793
    %v2923 = vunpack.c.l.b16 %v794
    %v2924 = vunpack.c.h.b16 %v794
    %v2925 = vunpack.c.l.b16 %v795
    %v2926 = vunpack.c.h.b16 %v795
    %v2927 = vunpack.c.l.b16 %v796
    %v2928 = vunpack.c.h.b16 %v796
    %v2929 = vunpack.c.l.b16 %v797
    %v2930 = vunpack.c.h.b16 %v797
    %v2931 = vunpack.c.l.b16 %v798
    %v2932 = vunpack.c.h.b16 %v798
    %v2933 = vunpack.c.l.b16 %v799
    %v2934 = vunpack.c.h.b16 %v799
    %v2935 = vunpack.c.l.b16 %v800
    %v2936 = vunpack.c.h.b16 %v800
    %v2937 = vunpack.c.l.b16 %v801
    %v2938 = vunpack.c.h.b16 %v801
    %v2939 = vunpack.c.l.b16 %v802
    %v2940 = vunpack.c.h.b16 %v802
    %v2941 = vunpack.c.l.b16 %v803
    %v2942 = vunpack.c.h.b16 %v803
    %v2943 = vunpack.c.l.b16 %v804
    %v2944 = vunpack.c.h.b16 %v804
    %v2945 = vunpack.c.l.b16 %v805
    %v2946 = vunpack.c.h.b16 %v805
    %v2947 = vunpack.c.l.b16 %v806
    %v2948 = vunpack.c.h.b16 %v806
    %v2949 = vunpack.c.l.b16 %v807
    %v2950 = vunpack.c.h.b16 %v807
    %v2951 = vunpack.c.l.b16 %v808
    %v2952 = vunpack.c.h.b16 %v808
    %v2953 = vunpack.c.l.b16 %v809
    %v2954 = vunpack.c.h.b16 %v809
    %v2955 = vunpack.c.l.b16 %v810
    %v2956 = vunpack.c.h.b16 %v810
    %v2957 = vunpack.c.l.b16 %v811
    %v2958 = vunpack.c.h.b16 %v811
    %v2959 = vunpack.c.l.b16 %v812
    %v2960 = vunpack.c.h.b16 %v812
    %v2961 = vunpack.c.l.b16 %v813
    %v2962 = vunpack.c.h.b16 %v813
    %v2963 = vunpack.c.l.b16 %v814
    %v2964 = vunpack.c.h.b16 %v814
    %v2965 = vunpack.c.l.b16 %v815
    %v2966 = vunpack.c.h.b16 %v815
    %v2967 = vunpack.c.l.b16 %v816
    %v2968 = vunpack.c.h.b16 %v816
    %v2969 = vunpack.c.l.b16 %v817
    %v2970 = vunpack.c.h.b16 %v817
    %v2971 = vunpack.c.l.b16 %v818
    %v2972 = vunpack.c.h.b16 %v818
    %v2973 = vunpack.c.l.b16 %v819
    %v2974 = vunpack.c.h.b16 %v819
    %v2975 = vunpack.c.l.b16 %v820
    %v2976 = vunpack.c.h.b16 %v820
    %v2977 = vunpack.c.l.b16 %v821
    %v2978 = vunpack.c.h.b16 %v821
    %v2979 = vunpack.c.l.b16 %v822
    %v2980 = vunpack.c.h.b16 %v822
    %v2981 = vunpack.c.l.b16 %v823
    %v2982 = vunpack.c.h.b16 %v823
    %v2983 = vunpack.c.l.b16 %v824
    %v2984 = vunpack.c.h.b16 %v824
    %v2985 = vunpack.c.l.b16 %v825
    %v2986 = vunpack.c.h.b16 %v825
    %v2987 = vunpack.c.l.b16 %v826
    %v2988 = vunpack.c.h.b16 %v826
    %v2989 = vunpack.c.l.b16 %v827
    %v2990 = vunpack.c.h.b16 %v827
    %v2991 = vunpack.c.l.b16 %v828
    %v2992 = vunpack.c.h.b16 %v828
    %v2993 = vunpack.c.l.b16 %v829
    %v2994 = vunpack.c.h.b16 %v829
    %v2995 = vunpack.c.l.b16 %v830
    %v2996 = vunpack.c.h.b16 %v830
    %v2997 = vunpack.c.l.b16 %v831
    %v2998 = vunpack.c.h.b16 %v831
    %v2999 = vunpack.c.l.b16 %v832
    %v3000 = vunpack.c.h.b16 %v832
    %v3001 = vunpack.c.l.b16 %v833
    %v3002 = vunpack.c.h.b16 %v833
    %v3003 = vunpack.c.l.b16 %v834
    %v3004 = vunpack.c.h.b16 %v834
    %v3005 = vunpack.c.l.b16 %v835
    %v3006 = vunpack.c.h.b16 %v835
    %v3007 = vunpack.c.l.b16 %v836
    %v3008 = vunpack.c.h.b16 %v836
    %v3009 = vunpack.c.l.b16 %v837
    %v3010 = vunpack.c.h.b16 %v837
    %v3011 = vunpack.c.l.b16 %v838
    %v3012 = vunpack.c.h.b16 %v838
    %v3013 = vunpack.c.l.b16 %v839
    %v3014 = vunpack.c.h.b16 %v839
    %v3015 = vunpack.c.l.b16 %v840
    %v3016 = vunpack.c.h.b16 %v840
    %v3017 = vunpack.c.l.b16 %v841
    %v3018 = vunpack.c.h.b16 %v841
    %v3019 = vunpack.c.l.b16 %v842
    %v3020 = vunpack.c.h.b16 %v842
    %v3021 = vunpack.c.l.b16 %v843
    %v3022 = vunpack.c.h.b16 %v843
    %v3023 = vunpack.c.l.b16 %v844
    %v3024 = vunpack.c.h.b16 %v844
    %v3025 = vunpack.c.l.b16 %v845
    %v3026 = vunpack.c.h.b16 %v845
    %v3027 = vunpack.c.l.b16 %v846
    %v3028 = vunpack.c.h.b16 %v846
    %v3029 = vunpack.c.l.b16 %v847
    %v3030 = vunpack.c.h.b16 %v847
    %v3031 = vunpack.c.l.b16 %v848
    %v3032 = vunpack.c.h.b16 %v848
    %v3033 = vunpack.c.l.b16 %v849
    %v3034 = vunpack.c.h.b16 %v849
    %v3035 = vunpack.c.l.b16 %v850
    %v3036 = vunpack.c.h.b16 %v850
    %v3037 = vunpack.c.l.b16 %v851
    %v3038 = vunpack.c.h.b16 %v851
    %v3039 = vunpack.c.l.b16 %v852
    %v3040 = vunpack.c.h.b16 %v852
    %v3041 = vunpack.c.l.b16 %v853
    %v3042 = vunpack.c.h.b16 %v853
    %v3043 = vunpack.c.l.b16 %v854
    %v3044 = vunpack.c.h.b16 %v854
    %v3045 = vunpack.c.l.b16 %v855
    %v3046 = vunpack.c.h.b16 %v855
    %v3047 = vunpack.c.l.b16 %v856
    %v3048 = vunpack.c.h.b16 %v856
    %v3049 = vunpack.c.l.b16 %v857
    %v3050 = vunpack.c.h.b16 %v857
    %v3051 = vunpack.c.l.b16 %v858
    %v3052 = vunpack.c.h.b16 %v858
    %v3053 = vunpack.c.l.b16 %v859
    %v3054 = vunpack.c.h.b16 %v859
    %v3055 = vunpack.c.l.b16 %v860
    %v3056 = vunpack.c.h.b16 %v860
    %v3057 = vunpack.c.l.b16 %v861
    %v3058 = vunpack.c.h.b16 %v861
    %v3059 = vunpack.c.l.b16 %v862
    %v3060 = vunpack.c.h.b16 %v862
    %v3061 = vunpack.c.l.b16 %v863
    %v3062 = vunpack.c.h.b16 %v863
    %v3063 = vunpack.c.l.b16 %v864
    %v3064 = vunpack.c.h.b16 %v864
    %v3065 = vunpack.c.l.b16 %v865
    %v3066 = vunpack.c.h.b16 %v865
    %v3067 = vunpack.c.l.b16 %v866
    %v3068 = vunpack.c.h.b16 %v866
    %v3069 = vunpack.c.l.b16 %v867
    %v3070 = vunpack.c.h.b16 %v867
    %v3071 = vunpack.c.l.b16 %v868
    %v3072 = vunpack.c.h.b16 %v868
    %v3073 = vunpack.c.l.b16 %v869
    %v3074 = vunpack.c.h.b16 %v869
    %v3075 = vunpack.c.l.b16 %v870
    %v3076 = vunpack.c.h.b16 %v870
    %v3077 = vunpack.c.l.b16 %v871
    %v3078 = vunpack.c.h.b16 %v871
    %v3079 = vunpack.c.l.b16 %v872
    %v3080 = vunpack.c.h.b16 %v872
    %v3081 = vunpack.c.l.b16 %v873
    %v3082 = vunpack.c.h.b16 %v873
    %v3083 = vunpack.c.l.b16 %v874
    %v3084 = vunpack.c.h.b16 %v874
    %v3085 = vunpack.c.l.b16 %v875
    %v3086 = vunpack.c.h.b16 %v875
    %v3087 = vunpack.c.l.b16 %v876
    %v3088 = vunpack.c.h.b16 %v876
    %v3089 = vunpack.c.l.b16 %v877
    %v3090 = vunpack.c.h.b16 %v877
    %v3091 = vunpack.c.l.b16 %v878
    %v3092 = vunpack.c.h.b16 %v878
    %v3093 = vunpack.c.l.b16 %v879
    %v3094 = vunpack.c.h.b16 %v879
    %v3095 = vunpack.c.l.b16 %v880
    %v3096 = vunpack.c.h.b16 %v880
    %v3097 = vunpack.c.l.b16 %v881
    %v3098 = vunpack.c.h.b16 %v881
    %v3099 = vunpack.c.l.b16 %v882
    %v3100 = vunpack.c.h.b16 %v882
    %v3101 = vunpack.c.l.b16 %v883
    %v3102 = vunpack.c.h.b16 %v883
    %v3103 = vunpack.c.l.b16 %v884
    %v3104 = vunpack.c.h.b16 %v884
    %v3105 = vunpack.c.l.b16 %v885
    %v3106 = vunpack.c.h.b16 %v885
    %v3107 = vunpack.c.l.b16 %v886
    %v3108 = vunpack.c.h.b16 %v886
    %v3109 = vunpack.c.l.b16 %v887
    %v3110 = vunpack.c.h.b16 %v887
    %v3111 = vunpack.c.l.b16 %v888
    %v3112 = vunpack.c.h.b16 %v888
    %v3113 = vunpack.c.l.b16 %v889
    %v3114 = vunpack.c.h.b16 %v889
    %v3115 = vunpack.c.l.b16 %v890
    %v3116 = vunpack.c.h.b16 %v890
    %v3117 = vunpack.c.l.b16 %v891
    %v3118 = vunpack.c.h.b16 %v891
    %v3119 = vunpack.c.l.b16 %v892
    %v3120 = vunpack.c.h.b16 %v892
    %v3121 = vunpack.c.l.b16 %v893
    %v3122 = vunpack.c.h.b16 %v893
    %v3123 = vunpack.c.l.b16 %v894
    %v3124 = vunpack.c.h.b16 %v894
    %v3125 = vunpack.c.l.b16 %v895
    %v3126 = vunpack.c.h.b16 %v895
    %v3127 = vunpack.c.l.b16 %v896
    %v3128 = vunpack.c.h.b16 %v896
    %v3129 = vunpack.c.l.b16 %v897
    %v3130 = vunpack.c.h.b16 %v897
    %v3131 = vunpack.c.l.b16 %v898
    %v3132 = vunpack.c.h.b16 %v898
    %v3133 = vunpack.c.l.b16 %v899
    %v3134 = vunpack.c.h.b16 %v899
    %v3135 = vunpack.c.l.b16 %v900
    %v3136 = vunpack.c.h.b16 %v900
    %v3137 = vunpack.c.l.b16 %v901
    %v3138 = vunpack.c.h.b16 %v901
    %v3139 = vunpack.c.l.b16 %v902
    %v3140 = vunpack.c.h.b16 %v902
    %v3141 = vunpack.c.l.b16 %v903
    %v3142 = vunpack.c.h.b16 %v903
    %v3143 = vunpack.c.l.b16 %v904
    %v3144 = vunpack.c.h.b16 %v904
    %v3145 = vunpack.c.l.b16 %v905
    %v3146 = vunpack.c.h.b16 %v905
    %v3147 = vunpack.c.l.b16 %v906
    %v3148 = vunpack.c.h.b16 %v906
    %v3149 = vunpack.c.l.b16 %v907
    %v3150 = vunpack.c.h.b16 %v907
    %v3151 = vunpack.c.l.b16 %v908
    %v3152 = vunpack.c.h.b16 %v908
    %v3153 = vunpack.c.l.b16 %v909
    %v3154 = vunpack.c.h.b16 %v909
    %v3155 = vunpack.c.l.b16 %v910
    %v3156 = vunpack.c.h.b16 %v910
    %v3157 = vunpack.c.l.b16 %v911
    %v3158 = vunpack.c.h.b16 %v911
    %v3159 = vunpack.c.l.b16 %v912
    %v3160 = vunpack.c.h.b16 %v912
    %v3161 = vunpack.c.l.b16 %v913
    %v3162 = vunpack.c.h.b16 %v913
    %v3163 = vunpack.c.l.b16 %v914
    %v3164 = vunpack.c.h.b16 %v914
    %v3165 = vunpack.c.l.b16 %v915
    %v3166 = vunpack.c.h.b16 %v915
    %v3167 = vunpack.c.l.b16 %v916
    %v3168 = vunpack.c.h.b16 %v916
    %v3169 = vunpack.c.l.b16 %v917
    %v3170 = vunpack.c.h.b16 %v917
    %v3171 = vunpack.c.l.b16 %v918
    %v3172 = vunpack.c.h.b16 %v918
    %v3173 = vunpack.c.l.b16 %v919
    %v3174 = vunpack.c.h.b16 %v919
    %v3175 = vunpack.c.l.b16 %v920
    %v3176 = vunpack.c.h.b16 %v920
    %v3177 = vunpack.c.l.b16 %v921
    %v3178 = vunpack.c.h.b16 %v921
    %v3179 = vunpack.c.l.b16 %v922
    %v3180 = vunpack.c.h.b16 %v922
    %v3181 = vunpack.c.l.b16 %v923
    %v3182 = vunpack.c.h.b16 %v923
    %v3183 = vunpack.c.l.b16 %v924
    %v3184 = vunpack.c.h.b16 %v924
    %v3185 = vunpack.c.l.b16 %v925
    %v3186 = vunpack.c.h.b16 %v925
    %v3187 = vunpack.c.l.b16 %v926
    %v3188 = vunpack.c.h.b16 %v926
    %v3189 = vunpack.c.l.b16 %v927
    %v3190 = vunpack.c.h.b16 %v927
    %v3191 = vunpack.c.l.b16 %v928
    %v3192 = vunpack.c.h.b16 %v928
    %v3193 = vunpack.c.l.b16 %v929
    %v3194 = vunpack.c.h.b16 %v929
    %v3195 = vunpack.c.l.b16 %v930
    %v3196 = vunpack.c.h.b16 %v930
    %v3197 = vunpack.c.l.b16 %v931
    %v3198 = vunpack.c.h.b16 %v931
    %v3199 = vunpack.c.l.b16 %v932
    %v3200 = vunpack.c.h.b16 %v932
    %v3201 = vunpack.c.l.b16 %v933
    %v3202 = vunpack.c.h.b16 %v933
    %v3203 = vunpack.c.l.b16 %v934
    %v3204 = vunpack.c.h.b16 %v934
    %v3205 = vunpack.c.l.b16 %v935
    %v3206 = vunpack.c.h.b16 %v935
    %v3207 = vunpack.c.l.b16 %v936
    %v3208 = vunpack.c.h.b16 %v936
    %v3209 = vunpack.c.l.b16 %v937
    %v3210 = vunpack.c.h.b16 %v937
    %v3211 = vunpack.c.l.b16 %v938
    %v3212 = vunpack.c.h.b16 %v938
    %v3213 = vunpack.c.l.b16 %v939
    %v3214 = vunpack.c.h.b16 %v939
    %v3215 = vunpack.c.l.b16 %v940
    %v3216 = vunpack.c.h.b16 %v940
    %v3217 = vunpack.c.l.b16 %v941
    %v3218 = vunpack.c.h.b16 %v941
    %v3219 = vunpack.c.l.b16 %v942
    %v3220 = vunpack.c.h.b16 %v942
    %v3221 = vunpack.c.l.b16 %v943
    %v3222 = vunpack.c.h.b16 %v943
    %v3223 = vunpack.c.l.b16 %v944
    %v3224 = vunpack.c.h.b16 %v944
    %v3225 = vunpack.c.l.b16 %v945
    %v3226 = vunpack.c.h.b16 %v945
    %v3227 = vunpack.c.l.b16 %v946
    %v3228 = vunpack.c.h.b16 %v946
    %v3229 = vunpack.c.l.b16 %v947
    %v3230 = vunpack.c.h.b16 %v947
    %v3231 = vunpack.c.l.b16 %v948
    %v3232 = vunpack.c.h.b16 %v948
    %v3233 = vunpack.c.l.b16 %v949
    %v3234 = vunpack.c.h.b16 %v949
    %v3235 = vunpack.c.l.b16 %v950
    %v3236 = vunpack.c.h.b16 %v950
    %v3237 = vunpack.c.l.b16 %v951
    %v3238 = vunpack.c.h.b16 %v951
    %v3239 = vunpack.c.l.b16 %v952
    %v3240 = vunpack.c.h.b16 %v952
    %v3241 = vunpack.c.l.b16 %v953
    %v3242 = vunpack.c.h.b16 %v953
    %v3243 = vunpack.c.l.b16 %v954
    %v3244 = vunpack.c.h.b16 %v954
    %v3245 = vunpack.c.l.b16 %v955
    %v3246 = vunpack.c.h.b16 %v955
    %v3247 = vunpack.c.l.b16 %v956
    %v3248 = vunpack.c.h.b16 %v956
    %v3249 = vunpack.c.l.b16 %v957
    %v3250 = vunpack.c.h.b16 %v957
    %v3251 = vunpack.c.l.b16 %v958
    %v3252 = vunpack.c.h.b16 %v958
    %v3253 = vunpack.c.l.b16 %v959
    %v3254 = vunpack.c.h.b16 %v959
    %v3255 = vunpack.c.l.b16 %v960
    %v3256 = vunpack.c.h.b16 %v960
    %v3257 = vunpack.c.l.b16 %v961
    %v3258 = vunpack.c.h.b16 %v961
    %v3259 = vunpack.c.l.b16 %v962
    %v3260 = vunpack.c.h.b16 %v962
    %v3261 = vunpack.c.l.b16 %v963
    %v3262 = vunpack.c.h.b16 %v963
    %v3263 = vunpack.c.l.b16 %v964
    %v3264 = vunpack.c.h.b16 %v964
    %v3265 = vunpack.c.l.b16 %v965
    %v3266 = vunpack.c.h.b16 %v965
    %v3267 = vunpack.c.l.b16 %v966
    %v3268 = vunpack.c.h.b16 %v966
    %v3269 = vunpack.c.l.b16 %v967
    %v3270 = vunpack.c.h.b16 %v967
    %v3271 = vunpack.c.l.b16 %v968
    %v3272 = vunpack.c.h.b16 %v968
    %v3273 = vunpack.c.l.b16 %v969
    %v3274 = vunpack.c.h.b16 %v969
    %v3275 = vunpack.c.l.b16 %v970
    %v3276 = vunpack.c.h.b16 %v970
    %v3277 = vunpack.c.l.b16 %v971
    %v3278 = vunpack.c.h.b16 %v971
    %v3279 = vunpack.c.l.b16 %v972
    %v3280 = vunpack.c.h.b16 %v972
    %v3281 = vunpack.c.l.b16 %v973
    %v3282 = vunpack.c.h.b16 %v973
    %v3283 = vunpack.c.l.b16 %v974
    %v3284 = vunpack.c.h.b16 %v974
    %v3285 = vunpack.c.l.b16 %v975
    %v3286 = vunpack.c.h.b16 %v975
    %v3287 = vunpack.c.l.b16 %v976
    %v3288 = vunpack.c.h.b16 %v976
    %v3289 = vunpack.c.l.b16 %v977
    %v3290 = vunpack.c.h.b16 %v977
    %v3291 = vunpack.c.l.b16 %v978
    %v3292 = vunpack.c.h.b16 %v978
    %v3293 = vpack.c.b16 %v1761, %v1757
    %v3294 = vpack.c.b16 %v1762, %v1758
    %v3295 = vpack.c.b16 %v1763, %v1759
    %v3296 = vpack.c.b16 %v1764, %v1760
    %v3297 = vpack.c.b16 %v1769, %v1765
    %v3298 = vpack.c.b16 %v1770, %v1766
    %v3299 = vpack.c.b16 %v1771, %v1767
    %v3300 = vpack.c.b16 %v1772, %v1768
    %v3301 = vpack.c.b16 %v1777, %v1773
    %v3302 = vpack.c.b16 %v1778, %v1774
    %v3303 = vpack.c.b16 %v1779, %v1775
    %v3304 = vpack.c.b16 %v1780, %v1776
    %v3305 = vpack.c.b16 %v1785, %v1781
    %v3306 = vpack.c.b16 %v1786, %v1782
    %v3307 = vpack.c.b16 %v1787, %v1783
    %v3308 = vpack.c.b16 %v1788, %v1784
    %v3309 = vpack.c.b16 %v1793, %v1789
    %v3310 = vpack.c.b16 %v1794, %v1790
    %v3311 = vpack.c.b16 %v1795, %v1791
    %v3312 = vpack.c.b16 %v1796, %v1792
    %v3313 = vpack.c.b16 %v1801, %v1797
    %v3314 = vpack.c.b16 %v1802, %v1798
    %v3315 = vpack.c.b16 %v1803, %v1799
    %v3316 = vpack.c.b16 %v1804, %v1800
    %v3317 = vpack.c.b16 %v1809, %v1805
    %v3318 = vpack.c.b16 %v1810, %v1806
    %v3319 = vpack.c.b16 %v1811, %v1807
    %v3320 = vpack.c.b16 %v1812, %v1808
    %v3321 = vpack.c.b16 %v1817, %v1813
    %v3322 = vpack.c.b16 %v1818, %v1814
    %v3323 = vpack.c.b16 %v1819, %v1815
    %v3324 = vpack.c.b16 %v1820, %v1816
    %v3325 = vpack.c.b16 %v1825, %v1821
    %v3326 = vpack.c.b16 %v1826, %v1822
    %v3327 = vpack.c.b16 %v1827, %v1823
    %v3328 = vpack.c.b16 %v1828, %v1824
    %v3329 = vpack.c.b16 %v1833, %v1829
    %v3330 = vpack.c.b16 %v1834, %v1830
    %v3331 = vpack.c.b16 %v1835, %v1831
    %v3332 = vpack.c.b16 %v1836, %v1832
    %v3333 = vpack.c.b16 %v1841, %v1837
    %v3334 = vpack.c.b16 %v1842, %v1838
    %v3335 = vpack.c.b16 %v1843, %v1839
    %v3336 = vpack.c.b16 %v1844, %v1840
    %v3337 = vpack.c.b16 %v1849, %v1845
    %v3338 = vpack.c.b16 %v1850, %v1846
    %v3339 = vpack.c.b16 %v1851, %v1847
    %v3340 = vpack.c.b16 %v1852, %v1848
    %v3341 = vpack.c.b16 %v1857, %v1853
    %v3342 = vpack.c.b16 %v1858, %v1854
    %v3343 = vpack.c.b16 %v1859, %v1855
    %v3344 = vpack.c.b16 %v1860, %v1856
    %v3345 = vpack.c.b16 %v1865, %v1861
    %v3346 = vpack.c.b16 %v1866, %v1862
    %v3347 = vpack.c.b16 %v1867, %v1863
    %v3348 = vpack.c.b16 %v1868, %v1864
    %v3349 = vpack.c.b16 %v1873, %v1869
    %v3350 = vpack.c.b16 %v1874, %v1870
    %v3351 = vpack.c.b16 %v1875, %v1871
    %v3352 = vpack.c.b16 %v1876, %v1872
    %v3353 = vpack.c.b16 %v1881, %v1877
    %v3354 = vpack.c.b16 %v1882, %v1878
    %v3355 = vpack.c.b16 %v1883, %v1879
    %v3356 = vpack.c.b16 %v1884, %v1880
    %v3357 = vpack.c.b16 %v1889, %v1885
    %v3358 = vpack.c.b16 %v1890, %v1886
    %v3359 = vpack.c.b16 %v1891, %v1887
    %v3360 = vpack.c.b16 %v1892, %v1888
    %v3361 = vpack.c.b16 %v1897, %v1893
    %v3362 = vpack.c.b16 %v1898, %v1894
    %v3363 = vpack.c.b16 %v1899, %v1895
    %v3364 = vpack.c.b16 %v1900, %v1896
    %v3365 = vpack.c.b16 %v1905, %v1901
    %v3366 = vpack.c.b16 %v1906, %v1902
    %v3367 = vpack.c.b16 %v1907, %v1903
    %v3368 = vpack.c.b16 %v1908, %v1904
    %v3369 = vpack.c.b16 %v1913, %v1909
    %v3370 = vpack.c.b16 %v1914, %v1910
    %v3371 = vpack.c.b16 %v1915, %v1911
    %v3372 = vpack.c.b16 %v1916, %v1912
    %v3373 = vpack.c.b16 %v1921, %v1917
    %v3374 = vpack.c.b16 %v1922, %v1918
    %v3375 = vpack.c.b16 %v1923, %v1919
    %v3376 = vpack.c.b16 %v1924, %v1920
    %v3377 = vpack.c.b16 %v1929, %v1925
    %v3378 = vpack.c.b16 %v1930, %v1926
    %v3379 = vpack.c.b16 %v1931, %v1927
    %v3380 = vpack.c.b16 %v1932, %v1928
    %v3381 = vpack.c.b16 %v1937, %v1933
    %v3382 = vpack.c.b16 %v1938, %v1934
    %v3383 = vpack.c.b16 %v1939, %v1935
    %v3384 = vpack.c.b16 %v1940, %v1936
    %v3385 = vpack.c.b16 %v1945, %v1941
    %v3386 = vpack.c.b16 %v1946, %v1942
    %v3387 = vpack.c.b16 %v1947, %v1943
    %v3388 = vpack.c.b16 %v1948, %v1944
    %v3389 = vpack.c.b16 %v1953, %v1949
    %v3390 = vpack.c.b16 %v1954, %v1950
    %v3391 = vpack.c.b16 %v1955, %v1951
    %v3392 = vpack.c.b16 %v1956, %v1952
    %v3393 = vpack.c.b16 %v1961, %v1957
    %v3394 = vpack.c.b16 %v1962, %v1958
    %v3395 = vpack.c.b16 %v1963, %v1959
    %v3396 = vpack.c.b16 %v1964, %v1960
    %v3397 = vpack.c.b16 %v1969, %v1965
    %v3398 = vpack.c.b16 %v1970, %v1966
    %v3399 = vpack.c.b16 %v1971, %v1967
    %v3400 = vpack.c.b16 %v1972, %v1968
    %v3401 = vpack.c.b16 %v1977, %v1973
    %v3402 = vpack.c.b16 %v1978, %v1974
    %v3403 = vpack.c.b16 %v1979, %v1975
    %v3404 = vpack.c.b16 %v1980, %v1976
    %v3405 = vpack.c.b16 %v1985, %v1981
    %v3406 = vpack.c.b16 %v1986, %v1982
    %v3407 = vpack.c.b16 %v1987, %v1983
    %v3408 = vpack.c.b16 %v1988, %v1984
    %v3409 = vpack.c.b16 %v1993, %v1989
    %v3410 = vpack.c.b16 %v1994, %v1990
    %v3411 = vpack.c.b16 %v1995, %v1991
    %v3412 = vpack.c.b16 %v1996, %v1992
    %v3413 = vpack.c.b16 %v2001, %v1997
    %v3414 = vpack.c.b16 %v2002, %v1998
    %v3415 = vpack.c.b16 %v2003, %v1999
    %v3416 = vpack.c.b16 %v2004, %v2000
    %v3417 = vpack.c.b16 %v2009, %v2005
    %v3418 = vpack.c.b16 %v2010, %v2006
    %v3419 = vpack.c.b16 %v2011, %v2007
    %v3420 = vpack.c.b16 %v2012, %v2008
    %v3421 = vpack.c.b16 %v2017, %v2013
    %v3422 = vpack.c.b16 %v2018, %v2014
    %v3423 = vpack.c.b16 %v2019, %v2015
    %v3424 = vpack.c.b16 %v2020, %v2016
    %v3425 = vpack.c.b16 %v2025, %v2021
    %v3426 = vpack.c.b16 %v2026, %v2022
    %v3427 = vpack.c.b16 %v2027, %v2023
    %v3428 = vpack.c.b16 %v2028, %v2024
    %v3429 = vpack.c.b16 %v2033, %v2029
    %v3430 = vpack.c.b16 %v2034, %v2030
    %v3431 = vpack.c.b16 %v2035, %v2031
    %v3432 = vpack.c.b16 %v2036, %v2032
    %v3433 = vpack.c.b16 %v2041, %v2037
    %v3434 = vpack.c.b16 %v2042, %v2038
    %v3435 = vpack.c.b16 %v2043, %v2039
    %v3436 = vpack.c.b16 %v2044, %v2040
    %v3437 = vpack.c.b16 %v2049, %v2045
    %v3438 = vpack.c.b16 %v2050, %v2046
    %v3439 = vpack.c.b16 %v2051, %v2047
    %v3440 = vpack.c.b16 %v2052, %v2048
    %v3441 = vpack.c.b16 %v2057, %v2053
    %v3442 = vpack.c.b16 %v2058, %v2054
    %v3443 = vpack.c.b16 %v2059, %v2055
    %v3444 = vpack.c.b16 %v2060, %v2056
    %v3445 = vpack.c.b16 %v2065, %v2061
    %v3446 = vpack.c.b16 %v2066, %v2062
    %v3447 = vpack.c.b16 %v2067, %v2063
    %v3448 = vpack.c.b16 %v2068, %v2064
    %v3449 = vpack.c.b16 %v2073, %v2069
    %v3450 = vpack.c.b16 %v2074, %v2070
    %v3451 = vpack.c.b16 %v2075, %v2071
    %v3452 = vpack.c.b16 %v2076, %v2072
    %v3453 = vpack.c.b16 %v2081, %v2077
    %v3454 = vpack.c.b16 %v2082, %v2078
    %v3455 = vpack.c.b16 %v2083, %v2079
    %v3456 = vpack.c.b16 %v2084, %v2080
    %v3457 = vpack.c.b16 %v2089, %v2085
    %v3458 = vpack.c.b16 %v2090, %v2086
    %v3459 = vpack.c.b16 %v2091, %v2087
    %v3460 = vpack.c.b16 %v2092, %v2088
    %v3461 = vpack.c.b16 %v2097, %v2093
    %v3462 = vpack.c.b16 %v2098, %v2094
    %v3463 = vpack.c.b16 %v2099, %v2095
    %v3464 = vpack.c.b16 %v2100, %v2096
    %v3465 = vpack.c.b16 %v2105, %v2101
    %v3466 = vpack.c.b16 %v2106, %v2102
    %v3467 = vpack.c.b16 %v2107, %v2103
    %v3468 = vpack.c.b16 %v2108, %v2104
    %v3469 = vpack.c.b16 %v2113, %v2109
    %v3470 = vpack.c.b16 %v2114, %v2110
    %v3471 = vpack.c.b16 %v2115, %v2111
    %v3472 = vpack.c.b16 %v2116, %v2112
    %v3473 = vpack.c.b16 %v2121, %v2117
    %v3474 = vpack.c.b16 %v2122, %v2118
    %v3475 = vpack.c.b16 %v2123, %v2119
    %v3476 = vpack.c.b16 %v2124, %v2120
    %v3477 = vpack.c.b16 %v2129, %v2125
    %v3478 = vpack.c.b16 %v2130, %v2126
    %v3479 = vpack.c.b16 %v2131, %v2127
    %v3480 = vpack.c.b16 %v2132, %v2128
    %v3481 = vpack.c.b16 %v2137, %v2133
    %v3482 = vpack.c.b16 %v2138, %v2134
    %v3483 = vpack.c.b16 %v2139, %v2135
    %v3484 = vpack.c.b16 %v2140, %v2136
    %v3485 = vpack.c.b16 %v2145, %v2141
    %v3486 = vpack.c.b16 %v2146, %v2142
    %v3487 = vpack.c.b16 %v2147, %v2143
    %v3488 = vpack.c.b16 %v2148, %v2144
    %v3489 = vpack.c.b16 %v2153, %v2149
    %v3490 = vpack.c.b16 %v2154, %v2150
    %v3491 = vpack.c.b16 %v2155, %v2151
    %v3492 = vpack.c.b16 %v2156, %v2152
    %v3493 = vpack.c.b16 %v2161, %v2157
    %v3494 = vpack.c.b16 %v2162, %v2158
    %v3495 = vpack.c.b16 %v2163, %v2159
    %v3496 = vpack.c.b16 %v2164, %v2160
    %v3497 = vpack.c.b16 %v2169, %v2165
    %v3498 = vpack.c.b16 %v2170, %v2166
    %v3499 = vpack.c.b16 %v2171, %v2167
    %v3500 = vpack.c.b16 %v2172, %v2168
    %v3501 = vpack.c.b16 %v2177, %v2173
    %v3502 = vpack.c.b16 %v2178, %v2174
    %v3503 = vpack.c.b16 %v2179, %v2175
    %v3504 = vpack.c.b16 %v2180, %v2176
    %v3505 = vpack.c.b16 %v2185, %v2181
    %v3506 = vpack.c.b16 %v2186, %v2182
    %v3507 = vpack.c.b16 %v2187, %v2183
    %v3508 = vpack.c.b16 %v2188, %v2184
    %v3509 = vpack.c.b16 %v2193, %v2189
    %v3510 = vpack.c.b16 %v2194, %v2190
    %v3511 = vpack.c.b16 %v2195, %v2191
    %v3512 = vpack.c.b16 %v2196, %v2192
    %v3513 = vpack.c.b16 %v2201, %v2197
    %v3514 = vpack.c.b16 %v2202, %v2198
    %v3515 = vpack.c.b16 %v2203, %v2199
    %v3516 = vpack.c.b16 %v2204, %v2200
    %v3517 = vpack.c.b16 %v2209, %v2205
    %v3518 = vpack.c.b16 %v2210, %v2206
    %v3519 = vpack.c.b16 %v2211, %v2207
    %v3520 = vpack.c.b16 %v2212, %v2208
    %v3521 = vpack.c.b16 %v2217, %v2213
    %v3522 = vpack.c.b16 %v2218, %v2214
    %v3523 = vpack.c.b16 %v2219, %v2215
    %v3524 = vpack.c.b16 %v2220, %v2216
    %v3525 = vpack.c.b16 %v2225, %v2221
    %v3526 = vpack.c.b16 %v2226, %v2222
    %v3527 = vpack.c.b16 %v2227, %v2223
    %v3528 = vpack.c.b16 %v2228, %v2224
    %v3529 = vpack.c.b16 %v2233, %v2229
    %v3530 = vpack.c.b16 %v2234, %v2230
    %v3531 = vpack.c.b16 %v2235, %v2231
    %v3532 = vpack.c.b16 %v2236, %v2232
    %v3533 = vpack.c.b16 %v2241, %v2237
    %v3534 = vpack.c.b16 %v2242, %v2238
    %v3535 = vpack.c.b16 %v2243, %v2239
    %v3536 = vpack.c.b16 %v2244, %v2240
    %v3537 = vpack.c.b16 %v2249, %v2245
    %v3538 = vpack.c.b16 %v2250, %v2246
    %v3539 = vpack.c.b16 %v2251, %v2247
    %v3540 = vpack.c.b16 %v2252, %v2248
    %v3541 = vpack.c.b16 %v2257, %v2253
    %v3542 = vpack.c.b16 %v2258, %v2254
    %v3543 = vpack.c.b16 %v2259, %v2255
    %v3544 = vpack.c.b16 %v2260, %v2256
    %v3545 = vpack.c.b16 %v2265, %v2261
    %v3546 = vpack.c.b16 %v2266, %v2262
    %v3547 = vpack.c.b16 %v2267, %v2263
    %v3548 = vpack.c.b16 %v2268, %v2264
    %v3549 = vpack.c.b16 %v2273, %v2269
    %v3550 = vpack.c.b16 %v2274, %v2270
    %v3551 = vpack.c.b16 %v2275, %v2271
    %v3552 = vpack.c.b16 %v2276, %v2272
    %v3553 = vpack.c.b16 %v2281, %v2277
    %v3554 = vpack.c.b16 %v2282, %v2278
    %v3555 = vpack.c.b16 %v2283, %v2279
    %v3556 = vpack.c.b16 %v2284, %v2280
    %v3557 = vpack.c.b16 %v2289, %v2285
    %v3558 = vpack.c.b16 %v2290, %v2286
    %v3559 = vpack.c.b16 %v2291, %v2287
    %v3560 = vpack.c.b16 %v2292, %v2288
    %v3561 = vpack.c.b16 %v2297, %v2293
    %v3562 = vpack.c.b16 %v2298, %v2294
    %v3563 = vpack.c.b16 %v2299, %v2295
    %v3564 = vpack.c.b16 %v2300, %v2296
    %v3565 = vpack.c.b16 %v2305, %v2301
    %v3566 = vpack.c.b16 %v2306, %v2302
    %v3567 = vpack.c.b16 %v2307, %v2303
    %v3568 = vpack.c.b16 %v2308, %v2304
    %v3569 = vpack.c.b16 %v2313, %v2309
    %v3570 = vpack.c.b16 %v2314, %v2310
    %v3571 = vpack.c.b16 %v2315, %v2311
    %v3572 = vpack.c.b16 %v2316, %v2312
    %v3573 = vpack.c.b16 %v2321, %v2317
    %v3574 = vpack.c.b16 %v2322, %v2318
    %v3575 = vpack.c.b16 %v2323, %v2319
    %v3576 = vpack.c.b16 %v2324, %v2320
    %v3577 = vpack.c.b16 %v2329, %v2325
    %v3578 = vpack.c.b16 %v2330, %v2326
    %v3579 = vpack.c.b16 %v2331, %v2327
    %v3580 = vpack.c.b16 %v2332, %v2328
    %v3581 = vpack.c.b16 %v2337, %v2333
    %v3582 = vpack.c.b16 %v2338, %v2334
    %v3583 = vpack.c.b16 %v2339, %v2335
    %v3584 = vpack.c.b16 %v2340, %v2336
    %v3585 = vpack.c.b16 %v2345, %v2341
    %v3586 = vpack.c.b16 %v2346, %v2342
    %v3587 = vpack.c.b16 %v2347, %v2343
    %v3588 = vpack.c.b16 %v2348, %v2344
    %v3589 = vpack.c.b16 %v2353, %v2349
    %v3590 = vpack.c.b16 %v2354, %v2350
    %v3591 = vpack.c.b16 %v2355, %v2351
    %v3592 = vpack.c.b16 %v2356, %v2352
    %v3593 = vpack.c.b16 %v2361, %v2357
    %v3594 = vpack.c.b16 %v2362, %v2358
    %v3595 = vpack.c.b16 %v2363, %v2359
    %v3596 = vpack.c.b16 %v2364, %v2360
    %v3597 = vpack.c.b16 %v2369, %v2365
    %v3598 = vpack.c.b16 %v2370, %v2366
    %v3599 = vpack.c.b16 %v2371, %v2367
    %v3600 = vpack.c.b16 %v2372, %v2368
    %v3601 = vpack.c.b16 %v2377, %v2373
    %v3602 = vpack.c.b16 %v2378, %v2374
    %v3603 = vpack.c.b16 %v2379, %v2375
    %v3604 = vpack.c.b16 %v2380, %v2376
    %v3605 = vpack.c.b16 %v2385, %v2381
    %v3606 = vpack.c.b16 %v2386, %v2382
    %v3607 = vpack.c.b16 %v2387, %v2383
    %v3608 = vpack.c.b16 %v2388, %v2384
    %v3609 = vpack.c.b16 %v2393, %v2389
    %v3610 = vpack.c.b16 %v2394, %v2390
    %v3611 = vpack.c.b16 %v2395, %v2391
    %v3612 = vpack.c.b16 %v2396, %v2392
    %v3613 = vpack.c.b16 %v2401, %v2397
    %v3614 = vpack.c.b16 %v2402, %v2398
    %v3615 = vpack.c.b16 %v2403, %v2399
    %v3616 = vpack.c.b16 %v2404, %v2400
    %v3617 = vpack.c.b16 %v2409, %v2405
    %v3618 = vpack.c.b16 %v2410, %v2406
    %v3619 = vpack.c.b16 %v2411, %v2407
    %v3620 = vpack.c.b16 %v2412, %v2408
    %v3621 = vpack.c.b16 %v2417, %v2413
    %v3622 = vpack.c.b16 %v2418, %v2414
    %v3623 = vpack.c.b16 %v2419, %v2415
    %v3624 = vpack.c.b16 %v2420, %v2416
    %v3625 = vpack.c.b16 %v2425, %v2421
    %v3626 = vpack.c.b16 %v2426, %v2422
    %v3627 = vpack.c.b16 %v2427, %v2423
    %v3628 = vpack.c.b16 %v2428, %v2424
    %v3629 = vpack.c.b16 %v2433, %v2429
    %v3630 = vpack.c.b16 %v2434, %v2430
    %v3631 = vpack.c.b16 %v2435, %v2431
    %v3632 = vpack.c.b16 %v2436, %v2432
    %v3633 = vpack.c.b16 %v2441, %v2437
    %v3634 = vpack.c.b16 %v2442, %v2438
    %v3635 = vpack.c.b16 %v2443, %v2439
    %v3636 = vpack.c.b16 %v2444, %v2440
    %v3637 = vpack.c.b16 %v2449, %v2445
    %v3638 = vpack.c.b16 %v2450, %v2446
    %v3639 = vpack.c.b16 %v2451, %v2447
    %v3640 = vpack.c.b16 %v2452, %v2448
    %v3641 = vpack.c.b16 %v2457, %v2453
    %v3642 = vpack.c.b16 %v2458, %v2454
    %v3643 = vpack.c.b16 %v2459, %v2455
    %v3644 = vpack.c.b16 %v2460, %v2456
    %v3645 = vpack.c.b16 %v2465, %v2461
    %v3646 = vpack.c.b16 %v2466, %v2462
    %v3647 = vpack.c.b16 %v2467, %v2463
    %v3648 = vpack.c.b16 %v2468, %v2464
    %v3649 = vpack.c.b16 %v2473, %v2469
    %v3650 = vpack.c.b16 %v2474, %v2470
    %v3651 = vpack.c.b16 %v2475, %v2471
    %v3652 = vpack.c.b16 %v2476, %v2472
    %v3653 = vpack.c.b16 %v2481, %v2477
    %v3654 = vpack.c.b16 %v2482, %v2478
    %v3655 = vpack.c.b16 %v2483, %v2479
    %v3656 = vpack.c.b16 %v2484, %v2480
    %v3657 = vpack.c.b16 %v2489, %v2485
    %v3658 = vpack.c.b16 %v2490, %v2486
    %v3659 = vpack.c.b16 %v2491, %v2487
    %v3660 = vpack.c.b16 %v2492, %v2488
    %v3661 = vpack.c.b16 %v2497, %v2493
    %v3662 = vpack.c.b16 %v2498, %v2494
    %v3663 = vpack.c.b16 %v2499, %v2495
    %v3664 = vpack.c.b16 %v2500, %v2496
    %v3665 = vpack.c.b16 %v2505, %v2501
    %v3666 = vpack.c.b16 %v2506, %v2502
    %v3667 = vpack.c.b16 %v2507, %v2503
    %v3668 = vpack.c.b16 %v2508, %v2504
    %v3669 = vpack.c.b16 %v2513, %v2509
    %v3670 = vpack.c.b16 %v2514, %v2510
    %v3671 = vpack.c.b16 %v2515, %v2511
    %v3672 = vpack.c.b16 %v2516, %v2512
    %v3673 = vpack.c.b16 %v2521, %v2517
    %v3674 = vpack.c.b16 %v2522, %v2518
    %v3675 = vpack.c.b16 %v2523, %v2519
    %v3676 = vpack.c.b16 %v2524, %v2520
    %v3677 = vpack.c.b16 %v2529, %v2525
    %v3678 = vpack.c.b16 %v2530, %v2526
    %v3679 = vpack.c.b16 %v2531, %v2527
    %v3680 = vpack.c.b16 %v2532, %v2528
    %v3681 = vpack.c.b16 %v2537, %v2533
    %v3682 = vpack.c.b16 %v2538, %v2534
    %v3683 = vpack.c.b16 %v2539, %v2535
    %v3684 = vpack.c.b16 %v2540, %v2536
    %v3685 = vpack.c.b16 %v2545, %v2541
    %v3686 = vpack.c.b16 %v2546, %v2542
    %v3687 = vpack.c.b16 %v2547, %v2543
    %v3688 = vpack.c.b16 %v2548, %v2544
    %v3689 = vpack.c.b16 %v2553, %v2549
    %v3690 = vpack.c.b16 %v2554, %v2550
    %v3691 = vpack.c.b16 %v2555, %v2551
    %v3692 = vpack.c.b16 %v2556, %v2552
    %v3693 = vpack.c.b16 %v2561, %v2557
    %v3694 = vpack.c.b16 %v2562, %v2558
    %v3695 = vpack.c.b16 %v2563, %v2559
    %v3696 = vpack.c.b16 %v2564, %v2560
    %v3697 = vpack.c.b16 %v2569, %v2565
    %v3698 = vpack.c.b16 %v2570, %v2566
    %v3699 = vpack.c.b16 %v2571, %v2567
    %v3700 = vpack.c.b16 %v2572, %v2568
    %v3701 = vpack.c.b16 %v2577, %v2573
    %v3702 = vpack.c.b16 %v2578, %v2574
    %v3703 = vpack.c.b16 %v2579, %v2575
    %v3704 = vpack.c.b16 %v2580, %v2576
    %v3705 = vpack.c.b16 %v2585, %v2581
    %v3706 = vpack.c.b16 %v2586, %v2582
    %v3707 = vpack.c.b16 %v2587, %v2583
    %v3708 = vpack.c.b16 %v2588, %v2584
    %v3709 = vpack.c.b16 %v2593, %v2589
    %v3710 = vpack.c.b16 %v2594, %v2590
    %v3711 = vpack.c.b16 %v2595, %v2591
    %v3712 = vpack.c.b16 %v2596, %v2592
    %v3713 = vpack.c.b16 %v2601, %v2597
    %v3714 = vpack.c.b16 %v2602, %v2598
    %v3715 = vpack.c.b16 %v2603, %v2599
    %v3716 = vpack.c.b16 %v2604, %v2600
    %v3717 = vpack.c.b16 %v2609, %v2605
    %v3718 = vpack.c.b16 %v2610, %v2606
    %v3719 = vpack.c.b16 %v2611, %v2607
    %v3720 = vpack.c.b16 %v2612, %v2608
    %v3721 = vpack.c.b16 %v2617, %v2613
    %v3722 = vpack.c.b16 %v2618, %v2614
    %v3723 = vpack.c.b16 %v2619, %v2615
    %v3724 = vpack.c.b16 %v2620, %v2616
    %v3725 = vpack.c.b16 %v2625, %v2621
    %v3726 = vpack.c.b16 %v2626, %v2622
    %v3727 = vpack.c.b16 %v2627, %v2623
    %v3728 = vpack.c.b16 %v2628, %v2624
    %v3729 = vpack.c.b16 %v2633, %v2629
    %v3730 = vpack.c.b16 %v2634, %v2630
    %v3731 = vpack.c.b16 %v2635, %v2631
    %v3732 = vpack.c.b16 %v2636, %v2632
    %v3733 = vpack.c.b16 %v2641, %v2637
    %v3734 = vpack.c.b16 %v2642, %v2638
    %v3735 = vpack.c.b16 %v2643, %v2639
    %v3736 = vpack.c.b16 %v2644, %v2640
    %v3737 = vpack.c.b16 %v2649, %v2645
    %v3738 = vpack.c.b16 %v2650, %v2646
    %v3739 = vpack.c.b16 %v2651, %v2647
    %v3740 = vpack.c.b16 %v2652, %v2648
    %v3741 = vpack.c.b16 %v2657, %v2653
    %v3742 = vpack.c.b16 %v2658, %v2654
    %v3743 = vpack.c.b16 %v2659, %v2655
    %v3744 = vpack.c.b16 %v2660, %v2656
    %v3745 = vpack.c.b16 %v2665, %v2661
    %v3746 = vpack.c.b16 %v2666, %v2662
    %v3747 = vpack.c.b16 %v2667, %v2663
    %v3748 = vpack.c.b16 %v2668, %v2664
    %v3749 = vpack.c.b16 %v2673, %v2669
    %v3750 = vpack.c.b16 %v2674, %v2670
    %v3751 = vpack.c.b16 %v2675, %v2671
    %v3752 = vpack.c.b16 %v2676, %v2672
    %v3753 = vpack.c.b16 %v2681, %v2677
    %v3754 = vpack.c.b16 %v2682, %v2678
    %v3755 = vpack.c.b16 %v2683, %v2679
    %v3756 = vpack.c.b16 %v2684, %v2680
    %v3757 = vpack.c.b16 %v2689, %v2685
    %v3758 = vpack.c.b16 %v2690, %v2686
    %v3759 = vpack.c.b16 %v2691, %v2687
    %v3760 = vpack.c.b16 %v2692, %v2688
    %v3761 = vpack.c.b16 %v2697, %v2693
    %v3762 = vpack.c.b16 %v2698, %v2694
    %v3763 = vpack.c.b16 %v2699, %v2695
    %v3764 = vpack.c.b16 %v2700, %v2696
    %v3765 = vpack.c.b16 %v2705, %v2701
    %v3766 = vpack.c.b16 %v2706, %v2702
    %v3767 = vpack.c.b16 %v2707, %v2703
    %v3768 = vpack.c.b16 %v2708, %v2704
    %v3769 = vpack.c.b16 %v2713, %v2709
    %v3770 = vpack.c.b16 %v2714, %v2710
    %v3771 = vpack.c.b16 %v2715, %v2711
    %v3772 = vpack.c.b16 %v2716, %v2712
    %v3773 = vpack.c.b16 %v2721, %v2717
    %v3774 = vpack.c.b16 %v2722, %v2718
    %v3775 = vpack.c.b16 %v2723, %v2719
    %v3776 = vpack.c.b16 %v2724, %v2720
    %v3777 = vpack.c.b16 %v2729, %v2725
    %v3778 = vpack.c.b16 %v2730, %v2726
    %v3779 = vpack.c.b16 %v2731, %v2727
    %v3780 = vpack.c.b16 %v2732, %v2728
    %v3781 = vpack.c.b16 %v2737, %v2733
    %v3782 = vpack.c.b16 %v2738, %v2734
    %v3783 = vpack.c.b16 %v2739, %v2735
    %v3784 = vpack.c.b16 %v2740, %v2736
    %v3785 = vpack.c.b16 %v2745, %v2741
    %v3786 = vpack.c.b16 %v2746, %v2742
    %v3787 = vpack.c.b16 %v2747, %v2743
    %v3788 = vpack.c.b16 %v2748, %v2744
    %v3789 = vpack.c.b16 %v2753, %v2749
    %v3790 = vpack.c.b16 %v2754, %v2750
    %v3791 = vpack.c.b16 %v2755, %v2751
    %v3792 = vpack.c.b16 %v2756, %v2752
    %v3793 = vpack.c.b16 %v2761, %v2757
    %v3794 = vpack.c.b16 %v2762, %v2758
    %v3795 = vpack.c.b16 %v2763, %v2759
    %v3796 = vpack.c.b16 %v2764, %v2760
    %v3797 = vpack.c.b16 %v2769, %v2765
    %v3798 = vpack.c.b16 %v2770, %v2766
    %v3799 = vpack.c.b16 %v2771, %v2767
    %v3800 = vpack.c.b16 %v2772, %v2768
    %v3801 = vpack.c.b16 %v2777, %v2773
    %v3802 = vpack.c.b16 %v2778, %v2774
    %v3803 = vpack.c.b16 %v2779, %v2775
    %v3804 = vpack.c.b16 %v2780, %v2776
    %v3805 = vpack.c.b16 %v2785, %v2781
    %v3806 = vpack.c.b16 %v2786, %v2782
    %v3807 = vpack.c.b16 %v2787, %v2783
    %v3808 = vpack.c.b16 %v2788, %v2784
    %v3809 = vpack.c.b16 %v2793, %v2789
    %v3810 = vpack.c.b16 %v2794, %v2790
    %v3811 = vpack.c.b16 %v2795, %v2791
    %v3812 = vpack.c.b16 %v2796, %v2792
    %v3813 = vpack.c.b16 %v2801, %v2797
    %v3814 = vpack.c.b16 %v2802, %v2798
    %v3815 = vpack.c.b16 %v2803, %v2799
    %v3816 = vpack.c.b16 %v2804, %v2800
    %v3817 = vpack.c.b16 %v2809, %v2805
    %v3818 = vpack.c.b16 %v2810, %v2806
    %v3819 = vpack.c.b16 %v2811, %v2807
    %v3820 = vpack.c.b16 %v2812, %v2808
    %v3821 = vpack.c.b16 %v2817, %v2813
    %v3822 = vpack.c.b16 %v2818, %v2814
    %v3823 = vpack.c.b16 %v2819, %v2815
    %v3824 = vpack.c.b16 %v2820, %v2816
    %v3825 = vpack.c.b16 %v2825, %v2821
    %v3826 = vpack.c.b16 %v2826, %v2822
    %v3827 = vpack.c.b16 %v2827, %v2823
    %v3828 = vpack.c.b16 %v2828, %v2824
    %v3829 = vpack.c.b16 %v2833, %v2829
    %v3830 = vpack.c.b16 %v2834, %v2830
    %v3831 = vpack.c.b16 %v2835, %v2831
    %v3832 = vpack.c.b16 %v2836, %v2832
    %v3833 = vpack.c.b16 %v2841, %v2837
    %v3834 = vpack.c.b16 %v2842, %v2838
    %v3835 = vpack.c.b16 %v2843, %v2839
    %v3836 = vpack.c.b16 %v2844, %v2840
    %v3837 = vpack.c.b16 %v2849, %v2845
    %v3838 = vpack.c.b16 %v2850, %v2846
    %v3839 = vpack.c.b16 %v2851, %v2847
    %v3840 = vpack.c.b16 %v2852, %v2848
    %v3841 = vpack.c.b16 %v2857, %v2853
    %v3842 = vpack.c.b16 %v2858, %v2854
    %v3843 = vpack.c.b16 %v2859, %v2855
    %v3844 = vpack.c.b16 %v2860, %v2856
    %v3845 = vpack.c.b16 %v2865, %v2861
    %v3846 = vpack.c.b16 %v2866, %v2862
    %v3847 = vpack.c.b16 %v2867, %v2863
    %v3848 = vpack.c.b16 %v2868, %v2864
    %v3849 = vpack.c.b16 %v2873, %v2869
    %v3850 = vpack.c.b16 %v2874, %v2870
    %v3851 = vpack.c.b16 %v2875, %v2871
    %v3852 = vpack.c.b16 %v2876, %v2872
    %v3853 = vpack.c.b16 %v2881, %v2877
    %v3854 = vpack.c.b16 %v2882, %v2878
    %v3855 = vpack.c.b16 %v2883, %v2879
    %v3856 = vpack.c.b16 %v2884, %v2880
    %v3857 = vpack.c.b16 %v2889, %v2885
    %v3858 = vpack.c.b16 %v2890, %v2886
    %v3859 = vpack.c.b16 %v2891, %v2887
    %v3860 = vpack.c.b16 %v2892, %v2888
    %v3861 = vpack.c.b16 %v2897, %v2893
    %v3862 = vpack.c.b16 %v2898, %v2894
    %v3863 = vpack.c.b16 %v2899, %v2895
    %v3864 = vpack.c.b16 %v2900, %v2896
    %v3865 = vpack.c.b16 %v2905, %v2901
    %v3866 = vpack.c.b16 %v2906, %v2902
    %v3867 = vpack.c.b16 %v2907, %v2903
    %v3868 = vpack.c.b16 %v2908, %v2904
    %v3869 = vpack.c.b16 %v2913, %v2909
    %v3870 = vpack.c.b16 %v2914, %v2910
    %v3871 = vpack.c.b16 %v2915, %v2911
    %v3872 = vpack.c.b16 %v2916, %v2912
    %v3873 = vpack.c.b16 %v2921, %v2917
    %v3874 = vpack.c.b16 %v2922, %v2918
    %v3875 = vpack.c.b16 %v2923, %v2919
    %v3876 = vpack.c.b16 %v2924, %v2920
    %v3877 = vpack.c.b16 %v2929, %v2925
    %v3878 = vpack.c.b16 %v2930, %v2926
    %v3879 = vpack.c.b16 %v2931, %v2927
    %v3880 = vpack.c.b16 %v2932, %v2928
    %v3881 = vpack.c.b16 %v2937, %v2933
    %v3882 = vpack.c.b16 %v2938, %v2934
    %v3883 = vpack.c.b16 %v2939, %v2935
    %v3884 = vpack.c.b16 %v2940, %v2936
    %v3885 = vpack.c.b16 %v2945, %v2941
    %v3886 = vpack.c.b16 %v2946, %v2942
    %v3887 = vpack.c.b16 %v2947, %v2943
    %v3888 = vpack.c.b16 %v2948, %v2944
    %v3889 = vpack.c.b16 %v2953, %v2949
    %v3890 = vpack.c.b16 %v2954, %v2950
    %v3891 = vpack.c.b16 %v2955, %v2951
    %v3892 = vpack.c.b16 %v2956, %v2952
    %v3893 = vpack.c.b16 %v2961, %v2957
    %v3894 = vpack.c.b16 %v2962, %v2958
    %v3895 = vpack.c.b16 %v2963, %v2959
    %v3896 = vpack.c.b16 %v2964, %v2960
    %v3897 = vpack.c.b16 %v2969, %v2965
    %v3898 = vpack.c.b16 %v2970, %v2966
    %v3899 = vpack.c.b16 %v2971, %v2967
    %v3900 = vpack.c.b16 %v2972, %v2968
    %v3901 = vpack.c.b16 %v2977, %v2973
    %v3902 = vpack.c.b16 %v2978, %v2974
    %v3903 = vpack.c.b16 %v2979, %v2975
    %v3904 = vpack.c.b16 %v2980, %v2976
    %v3905 = vpack.c.b16 %v2985, %v2981
    %v3906 = vpack.c.b16 %v2986, %v2982
    %v3907 = vpack.c.b16 %v2987, %v2983
    %v3908 = vpack.c.b16 %v2988, %v2984
    %v3909 = vpack.c.b16 %v2993, %v2989
    %v3910 = vpack.c.b16 %v2994, %v2990
    %v3911 = vpack.c.b16 %v2995, %v2991
    %v3912 = vpack.c.b16 %v2996, %v2992
    %v3913 = vpack.c.b16 %v3001, %v2997
    %v3914 = vpack.c.b16 %v3002, %v2998
    %v3915 = vpack.c.b16 %v3003, %v2999
    %v3916 = vpack.c.b16 %v3004, %v3000
    %v3917 = vpack.c.b16 %v3009, %v3005
    %v3918 = vpack.c.b16 %v3010, %v3006
    %v3919 = vpack.c.b16 %v3011, %v3007
    %v3920 = vpack.c.b16 %v3012, %v3008
    %v3921 = vpack.c.b16 %v3017, %v3013
    %v3922 = vpack.c.b16 %v3018, %v3014
    %v3923 = vpack.c.b16 %v3019, %v3015
    %v3924 = vpack.c.b16 %v3020, %v3016
    %v3925 = vpack.c.b16 %v3025, %v3021
    %v3926 = vpack.c.b16 %v3026, %v3022
    %v3927 = vpack.c.b16 %v3027, %v3023
    %v3928 = vpack.c.b16 %v3028, %v3024
    %v3929 = vpack.c.b16 %v3033, %v3029
    %v3930 = vpack.c.b16 %v3034, %v3030
    %v3931 = vpack.c.b16 %v3035, %v3031
    %v3932 = vpack.c.b16 %v3036, %v3032
    %v3933 = vpack.c.b16 %v3041, %v3037
    %v3934 = vpack.c.b16 %v3042, %v3038
    %v3935 = vpack.c.b16 %v3043, %v3039
    %v3936 = vpack.c.b16 %v3044, %v3040
    %v3937 = vpack.c.b16 %v3049, %v3045
    %v3938 = vpack.c.b16 %v3050, %v3046
    %v3939 = vpack.c.b16 %v3051, %v3047
    %v3940 = vpack.c.b16 %v3052, %v3048
    %v3941 = vpack.c.b16 %v3057, %v3053
    %v3942 = vpack.c.b16 %v3058, %v3054
    %v3943 = vpack.c.b16 %v3059, %v3055
    %v3944 = vpack.c.b16 %v3060, %v3056
    %v3945 = vpack.c.b16 %v3065, %v3061
    %v3946 = vpack.c.b16 %v3066, %v3062
    %v3947 = vpack.c.b16 %v3067, %v3063
    %v3948 = vpack.c.b16 %v3068, %v3064
    %v3949 = vpack.c.b16 %v3073, %v3069
    %v3950 = vpack.c.b16 %v3074, %v3070
    %v3951 = vpack.c.b16 %v3075, %v3071
    %v3952 = vpack.c.b16 %v3076, %v3072
    %v3953 = vpack.c.b16 %v3081, %v3077
    %v3954 = vpack.c.b16 %v3082, %v3078
    %v3955 = vpack.c.b16 %v3083, %v3079
    %v3956 = vpack.c.b16 %v3084, %v3080
    %v3957 = vpack.c.b16 %v3089, %v3085
    %v3958 = vpack.c.b16 %v3090, %v3086
    %v3959 = vpack.c.b16 %v3091, %v3087
    %v3960 = vpack.c.b16 %v3092, %v3088
    %v3961 = vpack.c.b16 %v3097, %v3093
    %v3962 = vpack.c.b16 %v3098, %v3094
    %v3963 = vpack.c.b16 %v3099, %v3095
    %v3964 = vpack.c.b16 %v3100, %v3096
    %v3965 = vpack.c.b16 %v3105, %v3101
    %v3966 = vpack.c.b16 %v3106, %v3102
    %v3967 = vpack.c.b16 %v3107, %v3103
    %v3968 = vpack.c.b16 %v3108, %v3104
    %v3969 = vpack.c.b16 %v3113, %v3109
    %v3970 = vpack.c.b16 %v3114, %v3110
    %v3971 = vpack.c.b16 %v3115, %v3111
    %v3972 = vpack.c.b16 %v3116, %v3112
    %v3973 = vpack.c.b16 %v3121, %v3117
    %v3974 = vpack.c.b16 %v3122, %v3118
    %v3975 = vpack.c.b16 %v3123, %v3119
    %v3976 = vpack.c.b16 %v3124, %v3120
    %v3977 = vpack.c.b16 %v3129, %v3125
    %v3978 = vpack.c.b16 %v3130, %v3126
    %v3979 = vpack.c.b16 %v3131, %v3127
    %v3980 = vpack.c.b16 %v3132, %v3128
    %v3981 = vpack.c.b16 %v3137, %v3133
    %v3982 = vpack.c.b16 %v3138, %v3134
    %v3983 = vpack.c.b16 %v3139, %v3135
    %v3984 = vpack.c.b16 %v3140, %v3136
    %v3985 = vpack.c.b16 %v3145, %v3141
    %v3986 = vpack.c.b16 %v3146, %v3142
    %v3987 = vpack.c.b16 %v3147, %v3143
    %v3988 = vpack.c.b16 %v3148, %v3144
    %v3989 = vpack.c.b16 %v3153, %v3149
    %v3990 = vpack.c.b16 %v3154, %v3150
    %v3991 = vpack.c.b16 %v3155, %v3151
    %v3992 = vpack.c.b16 %v3156, %v3152
    %v3993 = vpack.c.b16 %v3161, %v3157
    %v3994 = vpack.c.b16 %v3162, %v3158
    %v3995 = vpack.c.b16 %v3163, %v3159
    %v3996 = vpack.c.b16 %v3164, %v3160
    %v3997 = vpack.c.b16 %v3169, %v3165
    %v3998 = vpack.c.b16 %v3170, %v3166
    %v3999 = vpack.c.b16 %v3171, %v3167
    %v4000 = vpack.c.b16 %v3172, %v3168
    %v4001 = vpack.c.b16 %v3177, %v3173
    %v4002 = vpack.c.b16 %v3178, %v3174
    %v4003 = vpack.c.b16 %v3179, %v3175
    %v4004 = vpack.c.b16 %v3180, %v3176
    %v4005 = vpack.c.b16 %v3185, %v3181
    %v4006 = vpack.c.b16 %v3186, %v3182
    %v4007 = vpack.c.b16 %v3187, %v3183
    %v4008 = vpack.c.b16 %v3188, %v3184
    %v4009 = vpack.c.b16 %v3193, %v3189
    %v4010 = vpack.c.b16 %v3194, %v3190
    %v4011 = vpack.c.b16 %v3195, %v3191
    %v4012 = vpack.c.b16 %v3196, %v3192
    %v4013 = vpack.c.b16 %v3201, %v3197
    %v4014 = vpack.c.b16 %v3202, %v3198
    %v4015 = vpack.c.b16 %v3203, %v3199
    %v4016 = vpack.c.b16 %v3204, %v3200
    %v4017 = vpack.c.b16 %v3209, %v3205
    %v4018 = vpack.c.b16 %v3210, %v3206
    %v4019 = vpack.c.b16 %v3211, %v3207
    %v4020 = vpack.c.b16 %v3212, %v3208
    %v4021 = vpack.c.b16 %v3217, %v3213
    %v4022 = vpack.c.b16 %v3218, %v3214
    %v4023 = vpack.c.b16 %v3219, %v3215
    %v4024 = vpack.c.b16 %v3220, %v3216
    %v4025 = vpack.c.b16 %v3225, %v3221
    %v4026 = vpack.c.b16 %v3226, %v3222
    %v4027 = vpack.c.b16 %v3227, %v3223
    %v4028 = vpack.c.b16 %v3228, %v3224
    %v4029 = vpack.c.b16 %v3233, %v3229
    %v4030 = vpack.c.b16 %v3234, %v3230
    %v4031 = vpack.c.b16 %v3235, %v3231
    %v4032 = vpack.c.b16 %v3236, %v3232
    %v4033 = vpack.c.b16 %v3241, %v3237
    %v4034 = vpack.c.b16 %v3242, %v3238
    %v4035 = vpack.c.b16 %v3243, %v3239
    %v4036 = vpack.c.b16 %v3244, %v3240
    %v4037 = vpack.c.b16 %v3249, %v3245
    %v4038 = vpack.c.b16 %v3250, %v3246
    %v4039 = vpack.c.b16 %v3251, %v3247
    %v4040 = vpack.c.b16 %v3252, %v3248
    %v4041 = vpack.c.b16 %v3257, %v3253
    %v4042 = vpack.c.b16 %v3258, %v3254
    %v4043 = vpack.c.b16 %v3259, %v3255
    %v4044 = vpack.c.b16 %v3260, %v3256
    %v4045 = vpack.c.b16 %v3265, %v3261
    %v4046 = vpack.c.b16 %v3266, %v3262
    %v4047 = vpack.c.b16 %v3267, %v3263
    %v4048 = vpack.c.b16 %v3268, %v3264
    %v4049 = vpack.c.b16 %v3273, %v3269
    %v4050 = vpack.c.b16 %v3274, %v3270
    %v4051 = vpack.c.b16 %v3275, %v3271
    %v4052 = vpack.c.b16 %v3276, %v3272
    %v4053 = vpack.c.b16 %v3281, %v3277
    %v4054 = vpack.c.b16 %v3282, %v3278
    %v4055 = vpack.c.b16 %v3283, %v3279
    %v4056 = vpack.c.b16 %v3284, %v3280
    %v4057 = vpack.c.b16 %v3289, %v3285
    %v4058 = vpack.c.b16 %v3290, %v3286
    %v4059 = vpack.c.b16 %v3291, %v3287
    %v4060 = vpack.c.b16 %v3292, %v3288
    %4829 = vmatpush.bf16.msra.mxu0 %v3321
    %4830 = vmatpush.bf16.msra.mxu0 %v3317
    %4831 = vmatpush.bf16.msra.mxu0 %v3313
    %4832 = vmatpush.bf16.msra.mxu0 %v3309
    %4833 = vmatpush.bf16.msra.mxu0 %v3305
    %4834 = vmatpush.bf16.msra.mxu0 %v3301
    %4835 = vmatpush.bf16.msra.mxu0 %v3297
    %4836 = vmatpush.bf16.msra.mxu0 %v3293
    %4837 = vmatmul.bf16.gmra.mxu0 %v187
    %v4838 = vpop.f32.mrf.mxu0
    %v4839 = vadd.f32 %v981, %v4838
    %v4840 = vpop.f32.mrf.mxu0
    %4841 = vdwg.mxu0
    %4842 = vmatpush.bf16.msra.mxu0 %v3353
    %4843 = vmatpush.bf16.msra.mxu0 %v3349
    %4844 = vmatpush.bf16.msra.mxu0 %v3345
    %4845 = vmatpush.bf16.msra.mxu0 %v3341
    %4846 = vmatpush.bf16.msra.mxu0 %v3337
    %4847 = vmatpush.bf16.msra.mxu0 %v3333
    %4848 = vmatpush.bf16.msra.mxu0 %v3329
    %4849 = vmatpush.bf16.msra.mxu0 %v3325
    %4850 = vmatmul.bf16.gmra.mxu0 %v188
    %v4851 = vpop.f32.mrf.mxu0
    %v4852 = vadd.f32 %v4839, %v4851
    %v4853 = vpop.f32.mrf.mxu0
    %4854 = vdwg.mxu0
    %4855 = vmatpush.bf16.msra.mxu0 %v3385
    %4856 = vmatpush.bf16.msra.mxu0 %v3381
    %4857 = vmatpush.bf16.msra.mxu0 %v3377
    %4858 = vmatpush.bf16.msra.mxu0 %v3373
    %4859 = vmatpush.bf16.msra.mxu0 %v3369
    %4860 = vmatpush.bf16.msra.mxu0 %v3365
    %4861 = vmatpush.bf16.msra.mxu0 %v3361
    %4862 = vmatpush.bf16.msra.mxu0 %v3357
    %4863 = vmatmul.bf16.gmra.mxu0 %v189
    %v4864 = vpop.f32.mrf.mxu0
    %v4865 = vadd.f32 %v4852, %v4864
    %v4866 = vpop.f32.mrf.mxu0
    %4867 = vdwg.mxu0
    %4868 = vmatpush.bf16.msra.mxu0 %v3417
    %4869 = vmatpush.bf16.msra.mxu0 %v3413
    %4870 = vmatpush.bf16.msra.mxu0 %v3409
    %4871 = vmatpush.bf16.msra.mxu0 %v3405
    %4872 = vmatpush.bf16.msra.mxu0 %v3401
    %4873 = vmatpush.bf16.msra.mxu0 %v3397
    %4874 = vmatpush.bf16.msra.mxu0 %v3393
    %4875 = vmatpush.bf16.msra.mxu0 %v3389
    %4876 = vmatmul.bf16.gmra.mxu0 %v190
    %v4877 = vpop.f32.mrf.mxu0
    %v4878 = vadd.f32 %v4865, %v4877
    %v4879 = vpop.f32.mrf.mxu0
    %4880 = vdwg.mxu0
    %4881 = vmatpush.bf16.msra.mxu0 %v3449
    %4882 = vmatpush.bf16.msra.mxu0 %v3445
    %4883 = vmatpush.bf16.msra.mxu0 %v3441
    %4884 = vmatpush.bf16.msra.mxu0 %v3437
    %4885 = vmatpush.bf16.msra.mxu0 %v3433
    %4886 = vmatpush.bf16.msra.mxu0 %v3429
    %4887 = vmatpush.bf16.msra.mxu0 %v3425
    %4888 = vmatpush.bf16.msra.mxu0 %v3421
    %4889 = vmatmul.bf16.gmra.mxu0 %v191
    %v4890 = vpop.f32.mrf.mxu0
    %v4891 = vadd.f32 %v4878, %v4890
    %v4892 = vpop.f32.mrf.mxu0
    %4893 = vdwg.mxu0
    %4894 = vmatpush.bf16.msra.mxu0 %v3481
    %4895 = vmatpush.bf16.msra.mxu0 %v3477
    %4896 = vmatpush.bf16.msra.mxu0 %v3473
    %4897 = vmatpush.bf16.msra.mxu0 %v3469
    %4898 = vmatpush.bf16.msra.mxu0 %v3465
    %4899 = vmatpush.bf16.msra.mxu0 %v3461
    %4900 = vmatpush.bf16.msra.mxu0 %v3457
    %4901 = vmatpush.bf16.msra.mxu0 %v3453
    %4902 = vmatmul.bf16.gmra.mxu0 %v192
    %v4903 = vpop.f32.mrf.mxu0
    %v4904 = vadd.f32 %v4891, %v4903
    %v4905 = vpop.f32.mrf.mxu0
    %4906 = vdwg.mxu0
    %4907 = vmatpush.bf16.msra.mxu0 %v3513
    %4908 = vmatpush.bf16.msra.mxu0 %v3509
    %4909 = vmatpush.bf16.msra.mxu0 %v3505
    %4910 = vmatpush.bf16.msra.mxu0 %v3501
    %4911 = vmatpush.bf16.msra.mxu0 %v3497
    %4912 = vmatpush.bf16.msra.mxu0 %v3493
    %4913 = vmatpush.bf16.msra.mxu0 %v3489
    %4914 = vmatpush.bf16.msra.mxu0 %v3485
    %4915 = vmatmul.bf16.gmra.mxu0 %v193
    %v4916 = vpop.f32.mrf.mxu0
    %v4917 = vadd.f32 %v4904, %v4916
    %v4918 = vpop.f32.mrf.mxu0
    %4919 = vdwg.mxu0
    %4920 = vmatpush.bf16.msra.mxu0 %v3545
    %4921 = vmatpush.bf16.msra.mxu0 %v3541
    %4922 = vmatpush.bf16.msra.mxu0 %v3537
    %4923 = vmatpush.bf16.msra.mxu0 %v3533
    %4924 = vmatpush.bf16.msra.mxu0 %v3529
    %4925 = vmatpush.bf16.msra.mxu0 %v3525
    %4926 = vmatpush.bf16.msra.mxu0 %v3521
    %4927 = vmatpush.bf16.msra.mxu0 %v3517
    %4928 = vmatmul.bf16.gmra.mxu0 %v194
    %v4929 = vpop.f32.mrf.mxu0
    %v4930 = vadd.f32 %v4917, %v4929
    %v4931 = vpop.f32.mrf.mxu0
    %4932 = vdwg.mxu0
    %4933 = vmatpush.bf16.msra.mxu0 %v3577
    %4934 = vmatpush.bf16.msra.mxu0 %v3573
    %4935 = vmatpush.bf16.msra.mxu0 %v3569
    %4936 = vmatpush.bf16.msra.mxu0 %v3565
    %4937 = vmatpush.bf16.msra.mxu0 %v3561
    %4938 = vmatpush.bf16.msra.mxu0 %v3557
    %4939 = vmatpush.bf16.msra.mxu0 %v3553
    %4940 = vmatpush.bf16.msra.mxu0 %v3549
    %4941 = vmatmul.bf16.gmra.mxu0 %v195
    %v4942 = vpop.f32.mrf.mxu0
    %v4943 = vadd.f32 %v4930, %v4942
    %v4944 = vpop.f32.mrf.mxu0
    %4945 = vdwg.mxu0
    %4946 = vmatpush.bf16.msra.mxu0 %v3609
    %4947 = vmatpush.bf16.msra.mxu0 %v3605
    %4948 = vmatpush.bf16.msra.mxu0 %v3601
    %4949 = vmatpush.bf16.msra.mxu0 %v3597
    %4950 = vmatpush.bf16.msra.mxu0 %v3593
    %4951 = vmatpush.bf16.msra.mxu0 %v3589
    %4952 = vmatpush.bf16.msra.mxu0 %v3585
    %4953 = vmatpush.bf16.msra.mxu0 %v3581
    %4954 = vmatmul.bf16.gmra.mxu0 %v196
    %v4955 = vpop.f32.mrf.mxu0
    %v4956 = vadd.f32 %v4943, %v4955
    %v4957 = vpop.f32.mrf.mxu0
    %4958 = vdwg.mxu0
    %4959 = vmatpush.bf16.msra.mxu0 %v3641
    %4960 = vmatpush.bf16.msra.mxu0 %v3637
    %4961 = vmatpush.bf16.msra.mxu0 %v3633
    %4962 = vmatpush.bf16.msra.mxu0 %v3629
    %4963 = vmatpush.bf16.msra.mxu0 %v3625
    %4964 = vmatpush.bf16.msra.mxu0 %v3621
    %4965 = vmatpush.bf16.msra.mxu0 %v3617
    %4966 = vmatpush.bf16.msra.mxu0 %v3613
    %4967 = vmatmul.bf16.gmra.mxu0 %v197
    %v4968 = vpop.f32.mrf.mxu0
    %v4969 = vadd.f32 %v4956, %v4968
    %v4970 = vpop.f32.mrf.mxu0
    %4971 = vdwg.mxu0
    %4972 = vmatpush.bf16.msra.mxu0 %v3673
    %4973 = vmatpush.bf16.msra.mxu0 %v3669
    %4974 = vmatpush.bf16.msra.mxu0 %v3665
    %4975 = vmatpush.bf16.msra.mxu0 %v3661
    %4976 = vmatpush.bf16.msra.mxu0 %v3657
    %4977 = vmatpush.bf16.msra.mxu0 %v3653
    %4978 = vmatpush.bf16.msra.mxu0 %v3649
    %4979 = vmatpush.bf16.msra.mxu0 %v3645
    %4980 = vmatmul.bf16.gmra.mxu0 %v198
    %v4981 = vpop.f32.mrf.mxu0
    %v4982 = vadd.f32 %v4969, %v4981
    %v4983 = vpop.f32.mrf.mxu0
    %4984 = vdwg.mxu0
    %4985 = vmatpush.bf16.msra.mxu0 %v3705
    %4986 = vmatpush.bf16.msra.mxu0 %v3701
    %4987 = vmatpush.bf16.msra.mxu0 %v3697
    %4988 = vmatpush.bf16.msra.mxu0 %v3693
    %4989 = vmatpush.bf16.msra.mxu0 %v3689
    %4990 = vmatpush.bf16.msra.mxu0 %v3685
    %4991 = vmatpush.bf16.msra.mxu0 %v3681
    %4992 = vmatpush.bf16.msra.mxu0 %v3677
    %4993 = vmatmul.bf16.gmra.mxu0 %v199
    %v4994 = vpop.f32.mrf.mxu0
    %v4995 = vadd.f32 %v4982, %v4994
    %v4996 = vpop.f32.mrf.mxu0
    %4997 = vdwg.mxu0
    %4998 = vmatpush.bf16.msra.mxu0 %v3737
    %4999 = vmatpush.bf16.msra.mxu0 %v3733
    %5000 = vmatpush.bf16.msra.mxu0 %v3729
    %5001 = vmatpush.bf16.msra.mxu0 %v3725
    %5002 = vmatpush.bf16.msra.mxu0 %v3721
    %5003 = vmatpush.bf16.msra.mxu0 %v3717
    %5004 = vmatpush.bf16.msra.mxu0 %v3713
    %5005 = vmatpush.bf16.msra.mxu0 %v3709
    %5006 = vmatmul.bf16.gmra.mxu0 %v200
    %v5007 = vpop.f32.mrf.mxu0
    %v5008 = vadd.f32 %v4995, %v5007
    %v5009 = vpop.f32.mrf.mxu0
    %5010 = vdwg.mxu0
    %5011 = vmatpush.bf16.msra.mxu0 %v3769
    %5012 = vmatpush.bf16.msra.mxu0 %v3765
    %5013 = vmatpush.bf16.msra.mxu0 %v3761
    %5014 = vmatpush.bf16.msra.mxu0 %v3757
    %5015 = vmatpush.bf16.msra.mxu0 %v3753
    %5016 = vmatpush.bf16.msra.mxu0 %v3749
    %5017 = vmatpush.bf16.msra.mxu0 %v3745
    %5018 = vmatpush.bf16.msra.mxu0 %v3741
    %5019 = vmatmul.bf16.gmra.mxu0 %v201
    %v5020 = vpop.f32.mrf.mxu0
    %v5021 = vadd.f32 %v5008, %v5020
    %v5022 = vpop.f32.mrf.mxu0
    %5023 = vdwg.mxu0
    %5024 = vmatpush.bf16.msra.mxu0 %v3801
    %5025 = vmatpush.bf16.msra.mxu0 %v3797
    %5026 = vmatpush.bf16.msra.mxu0 %v3793
    %5027 = vmatpush.bf16.msra.mxu0 %v3789
    %5028 = vmatpush.bf16.msra.mxu0 %v3785
    %5029 = vmatpush.bf16.msra.mxu0 %v3781
    %5030 = vmatpush.bf16.msra.mxu0 %v3777
    %5031 = vmatpush.bf16.msra.mxu0 %v3773
    %5032 = vmatmul.bf16.gmra.mxu0 %v202
    %v5033 = vpop.f32.mrf.mxu0
    %v5034 = vadd.f32 %v5021, %v5033
    %v5035 = vpop.f32.mrf.mxu0
    %5036 = vdwg.mxu0
    %5037 = vmatpush.bf16.msra.mxu0 %v3833
    %5038 = vmatpush.bf16.msra.mxu0 %v3829
    %5039 = vmatpush.bf16.msra.mxu0 %v3825
    %5040 = vmatpush.bf16.msra.mxu0 %v3821
    %5041 = vmatpush.bf16.msra.mxu0 %v3817
    %5042 = vmatpush.bf16.msra.mxu0 %v3813
    %5043 = vmatpush.bf16.msra.mxu0 %v3809
    %5044 = vmatpush.bf16.msra.mxu0 %v3805
    %5045 = vmatmul.bf16.gmra.mxu0 %v203
    %v5046 = vpop.f32.mrf.mxu0
    %v5047 = vadd.f32 %v5034, %v5046
    %v5048 = vpop.f32.mrf.mxu0
    %5049 = vdwg.mxu0
    %5050 = vmatpush.bf16.msra.mxu0 %v3865
    %5051 = vmatpush.bf16.msra.mxu0 %v3861
    %5052 = vmatpush.bf16.msra.mxu0 %v3857
    %5053 = vmatpush.bf16.msra.mxu0 %v3853
    %5054 = vmatpush.bf16.msra.mxu0 %v3849
    %5055 = vmatpush.bf16.msra.mxu0 %v3845
    %5056 = vmatpush.bf16.msra.mxu0 %v3841
    %5057 = vmatpush.bf16.msra.mxu0 %v3837
    %5058 = vmatmul.bf16.gmra.mxu0 %v204
    %v5059 = vpop.f32.mrf.mxu0
    %v5060 = vadd.f32 %v5047, %v5059
    %v5061 = vpop.f32.mrf.mxu0
    %5062 = vdwg.mxu0
    %5063 = vmatpush.bf16.msra.mxu0 %v3897
    %5064 = vmatpush.bf16.msra.mxu0 %v3893
    %5065 = vmatpush.bf16.msra.mxu0 %v3889
    %5066 = vmatpush.bf16.msra.mxu0 %v3885
    %5067 = vmatpush.bf16.msra.mxu0 %v3881
    %5068 = vmatpush.bf16.msra.mxu0 %v3877
    %5069 = vmatpush.bf16.msra.mxu0 %v3873
    %5070 = vmatpush.bf16.msra.mxu0 %v3869
    %5071 = vmatmul.bf16.gmra.mxu0 %v205
    %v5072 = vpop.f32.mrf.mxu0
    %v5073 = vadd.f32 %v5060, %v5072
    %v5074 = vpop.f32.mrf.mxu0
    %5075 = vdwg.mxu0
    %5076 = vmatpush.bf16.msra.mxu0 %v3929
    %5077 = vmatpush.bf16.msra.mxu0 %v3925
    %5078 = vmatpush.bf16.msra.mxu0 %v3921
    %5079 = vmatpush.bf16.msra.mxu0 %v3917
    %5080 = vmatpush.bf16.msra.mxu0 %v3913
    %5081 = vmatpush.bf16.msra.mxu0 %v3909
    %5082 = vmatpush.bf16.msra.mxu0 %v3905
    %5083 = vmatpush.bf16.msra.mxu0 %v3901
    %5084 = vmatmul.bf16.gmra.mxu0 %v206
    %v5085 = vpop.f32.mrf.mxu0
    %v5086 = vadd.f32 %v5073, %v5085
    %v5087 = vpop.f32.mrf.mxu0
    %5088 = vdwg.mxu0
    %5089 = vmatpush.bf16.msra.mxu0 %v3961
    %5090 = vmatpush.bf16.msra.mxu0 %v3957
    %5091 = vmatpush.bf16.msra.mxu0 %v3953
    %5092 = vmatpush.bf16.msra.mxu0 %v3949
    %5093 = vmatpush.bf16.msra.mxu0 %v3945
    %5094 = vmatpush.bf16.msra.mxu0 %v3941
    %5095 = vmatpush.bf16.msra.mxu0 %v3937
    %5096 = vmatpush.bf16.msra.mxu0 %v3933
    %5097 = vmatmul.bf16.gmra.mxu0 %v207
    %v5098 = vpop.f32.mrf.mxu0
    %v5099 = vadd.f32 %v5086, %v5098
    %v5100 = vpop.f32.mrf.mxu0
    %5101 = vdwg.mxu0
    %5102 = vmatpush.bf16.msra.mxu0 %v3993
    %5103 = vmatpush.bf16.msra.mxu0 %v3989
    %5104 = vmatpush.bf16.msra.mxu0 %v3985
    %5105 = vmatpush.bf16.msra.mxu0 %v3981
    %5106 = vmatpush.bf16.msra.mxu0 %v3977
    %5107 = vmatpush.bf16.msra.mxu0 %v3973
    %5108 = vmatpush.bf16.msra.mxu0 %v3969
    %5109 = vmatpush.bf16.msra.mxu0 %v3965
    %5110 = vmatmul.bf16.gmra.mxu0 %v208
    %v5111 = vpop.f32.mrf.mxu0
    %v5112 = vadd.f32 %v5099, %v5111
    %v5113 = vpop.f32.mrf.mxu0
    %5114 = vdwg.mxu0
    %5115 = vmatpush.bf16.msra.mxu0 %v4025
    %5116 = vmatpush.bf16.msra.mxu0 %v4021
    %5117 = vmatpush.bf16.msra.mxu0 %v4017
    %5118 = vmatpush.bf16.msra.mxu0 %v4013
    %5119 = vmatpush.bf16.msra.mxu0 %v4009
    %5120 = vmatpush.bf16.msra.mxu0 %v4005
    %5121 = vmatpush.bf16.msra.mxu0 %v4001
    %5122 = vmatpush.bf16.msra.mxu0 %v3997
    %5123 = vmatmul.bf16.gmra.mxu0 %v209
    %v5124 = vpop.f32.mrf.mxu0
    %v5125 = vadd.f32 %v5112, %v5124
    %v5126 = vpop.f32.mrf.mxu0
    %5127 = vdwg.mxu0
    %5128 = vmatpush.bf16.msra.mxu0 %v4057
    %5129 = vmatpush.bf16.msra.mxu0 %v4053
    %5130 = vmatpush.bf16.msra.mxu0 %v4049
    %5131 = vmatpush.bf16.msra.mxu0 %v4045
    %5132 = vmatpush.bf16.msra.mxu0 %v4041
    %5133 = vmatpush.bf16.msra.mxu0 %v4037
    %5134 = vmatpush.bf16.msra.mxu0 %v4033
    %5135 = vmatpush.bf16.msra.mxu0 %v4029
    %5136 = vmatmul.bf16.gmra.mxu0 %v210
    %v5137 = vpop.f32.mrf.mxu0
    %v5138 = vadd.f32 %v5125, %v5137
    %v5139 = vpop.f32.mrf.mxu0
    %5140 = vdwg.mxu0
    %5141 = vmatpush.bf16.msra.mxu0 %v3322
    %5142 = vmatpush.bf16.msra.mxu0 %v3318
    %5143 = vmatpush.bf16.msra.mxu0 %v3314
    %5144 = vmatpush.bf16.msra.mxu0 %v3310
    %5145 = vmatpush.bf16.msra.mxu0 %v3306
    %5146 = vmatpush.bf16.msra.mxu0 %v3302
    %5147 = vmatpush.bf16.msra.mxu0 %v3298
    %5148 = vmatpush.bf16.msra.mxu0 %v3294
    %5149 = vmatmul.bf16.gmra.mxu0 %v187
    %v5150 = vpop.f32.mrf.mxu0
    %v5151 = vadd.f32 %v982, %v5150
    %v5152 = vpop.f32.mrf.mxu0
    %5153 = vdwg.mxu0
    %5154 = vmatpush.bf16.msra.mxu0 %v3354
    %5155 = vmatpush.bf16.msra.mxu0 %v3350
    %5156 = vmatpush.bf16.msra.mxu0 %v3346
    %5157 = vmatpush.bf16.msra.mxu0 %v3342
    %5158 = vmatpush.bf16.msra.mxu0 %v3338
    %5159 = vmatpush.bf16.msra.mxu0 %v3334
    %5160 = vmatpush.bf16.msra.mxu0 %v3330
    %5161 = vmatpush.bf16.msra.mxu0 %v3326
    %5162 = vmatmul.bf16.gmra.mxu0 %v188
    %v5163 = vpop.f32.mrf.mxu0
    %v5164 = vadd.f32 %v5151, %v5163
    %v5165 = vpop.f32.mrf.mxu0
    %5166 = vdwg.mxu0
    %5167 = vmatpush.bf16.msra.mxu0 %v3386
    %5168 = vmatpush.bf16.msra.mxu0 %v3382
    %5169 = vmatpush.bf16.msra.mxu0 %v3378
    %5170 = vmatpush.bf16.msra.mxu0 %v3374
    %5171 = vmatpush.bf16.msra.mxu0 %v3370
    %5172 = vmatpush.bf16.msra.mxu0 %v3366
    %5173 = vmatpush.bf16.msra.mxu0 %v3362
    %5174 = vmatpush.bf16.msra.mxu0 %v3358
    %5175 = vmatmul.bf16.gmra.mxu0 %v189
    %v5176 = vpop.f32.mrf.mxu0
    %v5177 = vadd.f32 %v5164, %v5176
    %v5178 = vpop.f32.mrf.mxu0
    %5179 = vdwg.mxu0
    %5180 = vmatpush.bf16.msra.mxu0 %v3418
    %5181 = vmatpush.bf16.msra.mxu0 %v3414
    %5182 = vmatpush.bf16.msra.mxu0 %v3410
    %5183 = vmatpush.bf16.msra.mxu0 %v3406
    %5184 = vmatpush.bf16.msra.mxu0 %v3402
    %5185 = vmatpush.bf16.msra.mxu0 %v3398
    %5186 = vmatpush.bf16.msra.mxu0 %v3394
    %5187 = vmatpush.bf16.msra.mxu0 %v3390
    %5188 = vmatmul.bf16.gmra.mxu0 %v190
    %v5189 = vpop.f32.mrf.mxu0
    %v5190 = vadd.f32 %v5177, %v5189
    %v5191 = vpop.f32.mrf.mxu0
    %5192 = vdwg.mxu0
    %5193 = vmatpush.bf16.msra.mxu0 %v3450
    %5194 = vmatpush.bf16.msra.mxu0 %v3446
    %5195 = vmatpush.bf16.msra.mxu0 %v3442
    %5196 = vmatpush.bf16.msra.mxu0 %v3438
    %5197 = vmatpush.bf16.msra.mxu0 %v3434
    %5198 = vmatpush.bf16.msra.mxu0 %v3430
    %5199 = vmatpush.bf16.msra.mxu0 %v3426
    %5200 = vmatpush.bf16.msra.mxu0 %v3422
    %5201 = vmatmul.bf16.gmra.mxu0 %v191
    %v5202 = vpop.f32.mrf.mxu0
    %v5203 = vadd.f32 %v5190, %v5202
    %v5204 = vpop.f32.mrf.mxu0
    %5205 = vdwg.mxu0
    %5206 = vmatpush.bf16.msra.mxu0 %v3482
    %5207 = vmatpush.bf16.msra.mxu0 %v3478
    %5208 = vmatpush.bf16.msra.mxu0 %v3474
    %5209 = vmatpush.bf16.msra.mxu0 %v3470
    %5210 = vmatpush.bf16.msra.mxu0 %v3466
    %5211 = vmatpush.bf16.msra.mxu0 %v3462
    %5212 = vmatpush.bf16.msra.mxu0 %v3458
    %5213 = vmatpush.bf16.msra.mxu0 %v3454
    %5214 = vmatmul.bf16.gmra.mxu0 %v192
    %v5215 = vpop.f32.mrf.mxu0
    %v5216 = vadd.f32 %v5203, %v5215
    %v5217 = vpop.f32.mrf.mxu0
    %5218 = vdwg.mxu0
    %5219 = vmatpush.bf16.msra.mxu0 %v3514
    %5220 = vmatpush.bf16.msra.mxu0 %v3510
    %5221 = vmatpush.bf16.msra.mxu0 %v3506
    %5222 = vmatpush.bf16.msra.mxu0 %v3502
    %5223 = vmatpush.bf16.msra.mxu0 %v3498
    %5224 = vmatpush.bf16.msra.mxu0 %v3494
    %5225 = vmatpush.bf16.msra.mxu0 %v3490
    %5226 = vmatpush.bf16.msra.mxu0 %v3486
    %5227 = vmatmul.bf16.gmra.mxu0 %v193
    %v5228 = vpop.f32.mrf.mxu0
    %v5229 = vadd.f32 %v5216, %v5228
    %v5230 = vpop.f32.mrf.mxu0
    %5231 = vdwg.mxu0
    %5232 = vmatpush.bf16.msra.mxu0 %v3546
    %5233 = vmatpush.bf16.msra.mxu0 %v3542
    %5234 = vmatpush.bf16.msra.mxu0 %v3538
    %5235 = vmatpush.bf16.msra.mxu0 %v3534
    %5236 = vmatpush.bf16.msra.mxu0 %v3530
    %5237 = vmatpush.bf16.msra.mxu0 %v3526
    %5238 = vmatpush.bf16.msra.mxu0 %v3522
    %5239 = vmatpush.bf16.msra.mxu0 %v3518
    %5240 = vmatmul.bf16.gmra.mxu0 %v194
    %v5241 = vpop.f32.mrf.mxu0
    %v5242 = vadd.f32 %v5229, %v5241
    %v5243 = vpop.f32.mrf.mxu0
    %5244 = vdwg.mxu0
    %5245 = vmatpush.bf16.msra.mxu0 %v3578
    %5246 = vmatpush.bf16.msra.mxu0 %v3574
    %5247 = vmatpush.bf16.msra.mxu0 %v3570
    %5248 = vmatpush.bf16.msra.mxu0 %v3566
    %5249 = vmatpush.bf16.msra.mxu0 %v3562
    %5250 = vmatpush.bf16.msra.mxu0 %v3558
    %5251 = vmatpush.bf16.msra.mxu0 %v3554
    %5252 = vmatpush.bf16.msra.mxu0 %v3550
    %5253 = vmatmul.bf16.gmra.mxu0 %v195
    %v5254 = vpop.f32.mrf.mxu0
    %v5255 = vadd.f32 %v5242, %v5254
    %v5256 = vpop.f32.mrf.mxu0
    %5257 = vdwg.mxu0
    %5258 = vmatpush.bf16.msra.mxu0 %v3610
    %5259 = vmatpush.bf16.msra.mxu0 %v3606
    %5260 = vmatpush.bf16.msra.mxu0 %v3602
    %5261 = vmatpush.bf16.msra.mxu0 %v3598
    %5262 = vmatpush.bf16.msra.mxu0 %v3594
    %5263 = vmatpush.bf16.msra.mxu0 %v3590
    %5264 = vmatpush.bf16.msra.mxu0 %v3586
    %5265 = vmatpush.bf16.msra.mxu0 %v3582
    %5266 = vmatmul.bf16.gmra.mxu0 %v196
    %v5267 = vpop.f32.mrf.mxu0
    %v5268 = vadd.f32 %v5255, %v5267
    %v5269 = vpop.f32.mrf.mxu0
    %5270 = vdwg.mxu0
    %5271 = vmatpush.bf16.msra.mxu0 %v3642
    %5272 = vmatpush.bf16.msra.mxu0 %v3638
    %5273 = vmatpush.bf16.msra.mxu0 %v3634
    %5274 = vmatpush.bf16.msra.mxu0 %v3630
    %5275 = vmatpush.bf16.msra.mxu0 %v3626
    %5276 = vmatpush.bf16.msra.mxu0 %v3622
    %5277 = vmatpush.bf16.msra.mxu0 %v3618
    %5278 = vmatpush.bf16.msra.mxu0 %v3614
    %5279 = vmatmul.bf16.gmra.mxu0 %v197
    %v5280 = vpop.f32.mrf.mxu0
    %v5281 = vadd.f32 %v5268, %v5280
    %v5282 = vpop.f32.mrf.mxu0
    %5283 = vdwg.mxu0
    %5284 = vmatpush.bf16.msra.mxu0 %v3674
    %5285 = vmatpush.bf16.msra.mxu0 %v3670
    %5286 = vmatpush.bf16.msra.mxu0 %v3666
    %5287 = vmatpush.bf16.msra.mxu0 %v3662
    %5288 = vmatpush.bf16.msra.mxu0 %v3658
    %5289 = vmatpush.bf16.msra.mxu0 %v3654
    %5290 = vmatpush.bf16.msra.mxu0 %v3650
    %5291 = vmatpush.bf16.msra.mxu0 %v3646
    %5292 = vmatmul.bf16.gmra.mxu0 %v198
    %v5293 = vpop.f32.mrf.mxu0
    %v5294 = vadd.f32 %v5281, %v5293
    %v5295 = vpop.f32.mrf.mxu0
    %5296 = vdwg.mxu0
    %5297 = vmatpush.bf16.msra.mxu0 %v3706
    %5298 = vmatpush.bf16.msra.mxu0 %v3702
    %5299 = vmatpush.bf16.msra.mxu0 %v3698
    %5300 = vmatpush.bf16.msra.mxu0 %v3694
    %5301 = vmatpush.bf16.msra.mxu0 %v3690
    %5302 = vmatpush.bf16.msra.mxu0 %v3686
    %5303 = vmatpush.bf16.msra.mxu0 %v3682
    %5304 = vmatpush.bf16.msra.mxu0 %v3678
    %5305 = vmatmul.bf16.gmra.mxu0 %v199
    %v5306 = vpop.f32.mrf.mxu0
    %v5307 = vadd.f32 %v5294, %v5306
    %v5308 = vpop.f32.mrf.mxu0
    %5309 = vdwg.mxu0
    %5310 = vmatpush.bf16.msra.mxu0 %v3738
    %5311 = vmatpush.bf16.msra.mxu0 %v3734
    %5312 = vmatpush.bf16.msra.mxu0 %v3730
    %5313 = vmatpush.bf16.msra.mxu0 %v3726
    %5314 = vmatpush.bf16.msra.mxu0 %v3722
    %5315 = vmatpush.bf16.msra.mxu0 %v3718
    %5316 = vmatpush.bf16.msra.mxu0 %v3714
    %5317 = vmatpush.bf16.msra.mxu0 %v3710
    %5318 = vmatmul.bf16.gmra.mxu0 %v200
    %v5319 = vpop.f32.mrf.mxu0
    %v5320 = vadd.f32 %v5307, %v5319
    %v5321 = vpop.f32.mrf.mxu0
    %5322 = vdwg.mxu0
    %5323 = vmatpush.bf16.msra.mxu0 %v3770
    %5324 = vmatpush.bf16.msra.mxu0 %v3766
    %5325 = vmatpush.bf16.msra.mxu0 %v3762
    %5326 = vmatpush.bf16.msra.mxu0 %v3758
    %5327 = vmatpush.bf16.msra.mxu0 %v3754
    %5328 = vmatpush.bf16.msra.mxu0 %v3750
    %5329 = vmatpush.bf16.msra.mxu0 %v3746
    %5330 = vmatpush.bf16.msra.mxu0 %v3742
    %5331 = vmatmul.bf16.gmra.mxu0 %v201
    %v5332 = vpop.f32.mrf.mxu0
    %v5333 = vadd.f32 %v5320, %v5332
    %v5334 = vpop.f32.mrf.mxu0
    %5335 = vdwg.mxu0
    %5336 = vmatpush.bf16.msra.mxu0 %v3802
    %5337 = vmatpush.bf16.msra.mxu0 %v3798
    %5338 = vmatpush.bf16.msra.mxu0 %v3794
    %5339 = vmatpush.bf16.msra.mxu0 %v3790
    %5340 = vmatpush.bf16.msra.mxu0 %v3786
    %5341 = vmatpush.bf16.msra.mxu0 %v3782
    %5342 = vmatpush.bf16.msra.mxu0 %v3778
    %5343 = vmatpush.bf16.msra.mxu0 %v3774
    %5344 = vmatmul.bf16.gmra.mxu0 %v202
    %v5345 = vpop.f32.mrf.mxu0
    %v5346 = vadd.f32 %v5333, %v5345
    %v5347 = vpop.f32.mrf.mxu0
    %5348 = vdwg.mxu0
    %5349 = vmatpush.bf16.msra.mxu0 %v3834
    %5350 = vmatpush.bf16.msra.mxu0 %v3830
    %5351 = vmatpush.bf16.msra.mxu0 %v3826
    %5352 = vmatpush.bf16.msra.mxu0 %v3822
    %5353 = vmatpush.bf16.msra.mxu0 %v3818
    %5354 = vmatpush.bf16.msra.mxu0 %v3814
    %5355 = vmatpush.bf16.msra.mxu0 %v3810
    %5356 = vmatpush.bf16.msra.mxu0 %v3806
    %5357 = vmatmul.bf16.gmra.mxu0 %v203
    %v5358 = vpop.f32.mrf.mxu0
    %v5359 = vadd.f32 %v5346, %v5358
    %v5360 = vpop.f32.mrf.mxu0
    %5361 = vdwg.mxu0
    %5362 = vmatpush.bf16.msra.mxu0 %v3866
    %5363 = vmatpush.bf16.msra.mxu0 %v3862
    %5364 = vmatpush.bf16.msra.mxu0 %v3858
    %5365 = vmatpush.bf16.msra.mxu0 %v3854
    %5366 = vmatpush.bf16.msra.mxu0 %v3850
    %5367 = vmatpush.bf16.msra.mxu0 %v3846
    %5368 = vmatpush.bf16.msra.mxu0 %v3842
    %5369 = vmatpush.bf16.msra.mxu0 %v3838
    %5370 = vmatmul.bf16.gmra.mxu0 %v204
    %v5371 = vpop.f32.mrf.mxu0
    %v5372 = vadd.f32 %v5359, %v5371
    %v5373 = vpop.f32.mrf.mxu0
    %5374 = vdwg.mxu0
    %5375 = vmatpush.bf16.msra.mxu0 %v3898
    %5376 = vmatpush.bf16.msra.mxu0 %v3894
    %5377 = vmatpush.bf16.msra.mxu0 %v3890
    %5378 = vmatpush.bf16.msra.mxu0 %v3886
    %5379 = vmatpush.bf16.msra.mxu0 %v3882
    %5380 = vmatpush.bf16.msra.mxu0 %v3878
    %5381 = vmatpush.bf16.msra.mxu0 %v3874
    %5382 = vmatpush.bf16.msra.mxu0 %v3870
    %5383 = vmatmul.bf16.gmra.mxu0 %v205
    %v5384 = vpop.f32.mrf.mxu0
    %v5385 = vadd.f32 %v5372, %v5384
    %v5386 = vpop.f32.mrf.mxu0
    %5387 = vdwg.mxu0
    %5388 = vmatpush.bf16.msra.mxu0 %v3930
    %5389 = vmatpush.bf16.msra.mxu0 %v3926
    %5390 = vmatpush.bf16.msra.mxu0 %v3922
    %5391 = vmatpush.bf16.msra.mxu0 %v3918
    %5392 = vmatpush.bf16.msra.mxu0 %v3914
    %5393 = vmatpush.bf16.msra.mxu0 %v3910
    %5394 = vmatpush.bf16.msra.mxu0 %v3906
    %5395 = vmatpush.bf16.msra.mxu0 %v3902
    %5396 = vmatmul.bf16.gmra.mxu0 %v206
    %v5397 = vpop.f32.mrf.mxu0
    %v5398 = vadd.f32 %v5385, %v5397
    %v5399 = vpop.f32.mrf.mxu0
    %5400 = vdwg.mxu0
    %5401 = vmatpush.bf16.msra.mxu0 %v3962
    %5402 = vmatpush.bf16.msra.mxu0 %v3958
    %5403 = vmatpush.bf16.msra.mxu0 %v3954
    %5404 = vmatpush.bf16.msra.mxu0 %v3950
    %5405 = vmatpush.bf16.msra.mxu0 %v3946
    %5406 = vmatpush.bf16.msra.mxu0 %v3942
    %5407 = vmatpush.bf16.msra.mxu0 %v3938
    %5408 = vmatpush.bf16.msra.mxu0 %v3934
    %5409 = vmatmul.bf16.gmra.mxu0 %v207
    %v5410 = vpop.f32.mrf.mxu0
    %v5411 = vadd.f32 %v5398, %v5410
    %v5412 = vpop.f32.mrf.mxu0
    %5413 = vdwg.mxu0
    %5414 = vmatpush.bf16.msra.mxu0 %v3994
    %5415 = vmatpush.bf16.msra.mxu0 %v3990
    %5416 = vmatpush.bf16.msra.mxu0 %v3986
    %5417 = vmatpush.bf16.msra.mxu0 %v3982
    %5418 = vmatpush.bf16.msra.mxu0 %v3978
    %5419 = vmatpush.bf16.msra.mxu0 %v3974
    %5420 = vmatpush.bf16.msra.mxu0 %v3970
    %5421 = vmatpush.bf16.msra.mxu0 %v3966
    %5422 = vmatmul.bf16.gmra.mxu0 %v208
    %v5423 = vpop.f32.mrf.mxu0
    %v5424 = vadd.f32 %v5411, %v5423
    %v5425 = vpop.f32.mrf.mxu0
    %5426 = vdwg.mxu0
    %5427 = vmatpush.bf16.msra.mxu0 %v4026
    %5428 = vmatpush.bf16.msra.mxu0 %v4022
    %5429 = vmatpush.bf16.msra.mxu0 %v4018
    %5430 = vmatpush.bf16.msra.mxu0 %v4014
    %5431 = vmatpush.bf16.msra.mxu0 %v4010
    %5432 = vmatpush.bf16.msra.mxu0 %v4006
    %5433 = vmatpush.bf16.msra.mxu0 %v4002
    %5434 = vmatpush.bf16.msra.mxu0 %v3998
    %5435 = vmatmul.bf16.gmra.mxu0 %v209
    %v5436 = vpop.f32.mrf.mxu0
    %v5437 = vadd.f32 %v5424, %v5436
    %v5438 = vpop.f32.mrf.mxu0
    %5439 = vdwg.mxu0
    %5440 = vmatpush.bf16.msra.mxu0 %v4058
    %5441 = vmatpush.bf16.msra.mxu0 %v4054
    %5442 = vmatpush.bf16.msra.mxu0 %v4050
    %5443 = vmatpush.bf16.msra.mxu0 %v4046
    %5444 = vmatpush.bf16.msra.mxu0 %v4042
    %5445 = vmatpush.bf16.msra.mxu0 %v4038
    %5446 = vmatpush.bf16.msra.mxu0 %v4034
    %5447 = vmatpush.bf16.msra.mxu0 %v4030
    %5448 = vmatmul.bf16.gmra.mxu0 %v210
    %v5449 = vpop.f32.mrf.mxu0
    %v5450 = vadd.f32 %v5437, %v5449
    %v5451 = vpop.f32.mrf.mxu0
    %5452 = vdwg.mxu0
    %5453 = vmatpush.bf16.msra.mxu0 %v3323
    %5454 = vmatpush.bf16.msra.mxu0 %v3319
    %5455 = vmatpush.bf16.msra.mxu0 %v3315
    %5456 = vmatpush.bf16.msra.mxu0 %v3311
    %5457 = vmatpush.bf16.msra.mxu0 %v3307
    %5458 = vmatpush.bf16.msra.mxu0 %v3303
    %5459 = vmatpush.bf16.msra.mxu0 %v3299
    %5460 = vmatpush.bf16.msra.mxu0 %v3295
    %5461 = vmatmul.bf16.gmra.mxu0 %v187
    %v5462 = vpop.f32.mrf.mxu0
    %v5463 = vadd.f32 %v983, %v5462
    %v5464 = vpop.f32.mrf.mxu0
    %5465 = vdwg.mxu0
    %5466 = vmatpush.bf16.msra.mxu0 %v3355
    %5467 = vmatpush.bf16.msra.mxu0 %v3351
    %5468 = vmatpush.bf16.msra.mxu0 %v3347
    %5469 = vmatpush.bf16.msra.mxu0 %v3343
    %5470 = vmatpush.bf16.msra.mxu0 %v3339
    %5471 = vmatpush.bf16.msra.mxu0 %v3335
    %5472 = vmatpush.bf16.msra.mxu0 %v3331
    %5473 = vmatpush.bf16.msra.mxu0 %v3327
    %5474 = vmatmul.bf16.gmra.mxu0 %v188
    %v5475 = vpop.f32.mrf.mxu0
    %v5476 = vadd.f32 %v5463, %v5475
    %v5477 = vpop.f32.mrf.mxu0
    %5478 = vdwg.mxu0
    %5479 = vmatpush.bf16.msra.mxu0 %v3387
    %5480 = vmatpush.bf16.msra.mxu0 %v3383
    %5481 = vmatpush.bf16.msra.mxu0 %v3379
    %5482 = vmatpush.bf16.msra.mxu0 %v3375
    %5483 = vmatpush.bf16.msra.mxu0 %v3371
    %5484 = vmatpush.bf16.msra.mxu0 %v3367
    %5485 = vmatpush.bf16.msra.mxu0 %v3363
    %5486 = vmatpush.bf16.msra.mxu0 %v3359
    %5487 = vmatmul.bf16.gmra.mxu0 %v189
    %v5488 = vpop.f32.mrf.mxu0
    %v5489 = vadd.f32 %v5476, %v5488
    %v5490 = vpop.f32.mrf.mxu0
    %5491 = vdwg.mxu0
    %5492 = vmatpush.bf16.msra.mxu0 %v3419
    %5493 = vmatpush.bf16.msra.mxu0 %v3415
    %5494 = vmatpush.bf16.msra.mxu0 %v3411
    %5495 = vmatpush.bf16.msra.mxu0 %v3407
    %5496 = vmatpush.bf16.msra.mxu0 %v3403
    %5497 = vmatpush.bf16.msra.mxu0 %v3399
    %5498 = vmatpush.bf16.msra.mxu0 %v3395
    %5499 = vmatpush.bf16.msra.mxu0 %v3391
    %5500 = vmatmul.bf16.gmra.mxu0 %v190
    %v5501 = vpop.f32.mrf.mxu0
    %v5502 = vadd.f32 %v5489, %v5501
    %v5503 = vpop.f32.mrf.mxu0
    %5504 = vdwg.mxu0
    %5505 = vmatpush.bf16.msra.mxu0 %v3451
    %5506 = vmatpush.bf16.msra.mxu0 %v3447
    %5507 = vmatpush.bf16.msra.mxu0 %v3443
    %5508 = vmatpush.bf16.msra.mxu0 %v3439
    %5509 = vmatpush.bf16.msra.mxu0 %v3435
    %5510 = vmatpush.bf16.msra.mxu0 %v3431
    %5511 = vmatpush.bf16.msra.mxu0 %v3427
    %5512 = vmatpush.bf16.msra.mxu0 %v3423
    %5513 = vmatmul.bf16.gmra.mxu0 %v191
    %v5514 = vpop.f32.mrf.mxu0
    %v5515 = vadd.f32 %v5502, %v5514
    %v5516 = vpop.f32.mrf.mxu0
    %5517 = vdwg.mxu0
    %5518 = vmatpush.bf16.msra.mxu0 %v3483
    %5519 = vmatpush.bf16.msra.mxu0 %v3479
    %5520 = vmatpush.bf16.msra.mxu0 %v3475
    %5521 = vmatpush.bf16.msra.mxu0 %v3471
    %5522 = vmatpush.bf16.msra.mxu0 %v3467
    %5523 = vmatpush.bf16.msra.mxu0 %v3463
    %5524 = vmatpush.bf16.msra.mxu0 %v3459
    %5525 = vmatpush.bf16.msra.mxu0 %v3455
    %5526 = vmatmul.bf16.gmra.mxu0 %v192
    %v5527 = vpop.f32.mrf.mxu0
    %v5528 = vadd.f32 %v5515, %v5527
    %v5529 = vpop.f32.mrf.mxu0
    %5530 = vdwg.mxu0
    %5531 = vmatpush.bf16.msra.mxu0 %v3515
    %5532 = vmatpush.bf16.msra.mxu0 %v3511
    %5533 = vmatpush.bf16.msra.mxu0 %v3507
    %5534 = vmatpush.bf16.msra.mxu0 %v3503
    %5535 = vmatpush.bf16.msra.mxu0 %v3499
    %5536 = vmatpush.bf16.msra.mxu0 %v3495
    %5537 = vmatpush.bf16.msra.mxu0 %v3491
    %5538 = vmatpush.bf16.msra.mxu0 %v3487
    %5539 = vmatmul.bf16.gmra.mxu0 %v193
    %v5540 = vpop.f32.mrf.mxu0
    %v5541 = vadd.f32 %v5528, %v5540
    %v5542 = vpop.f32.mrf.mxu0
    %5543 = vdwg.mxu0
    %5544 = vmatpush.bf16.msra.mxu0 %v3547
    %5545 = vmatpush.bf16.msra.mxu0 %v3543
    %5546 = vmatpush.bf16.msra.mxu0 %v3539
    %5547 = vmatpush.bf16.msra.mxu0 %v3535
    %5548 = vmatpush.bf16.msra.mxu0 %v3531
    %5549 = vmatpush.bf16.msra.mxu0 %v3527
    %5550 = vmatpush.bf16.msra.mxu0 %v3523
    %5551 = vmatpush.bf16.msra.mxu0 %v3519
    %5552 = vmatmul.bf16.gmra.mxu0 %v194
    %v5553 = vpop.f32.mrf.mxu0
    %v5554 = vadd.f32 %v5541, %v5553
    %v5555 = vpop.f32.mrf.mxu0
    %5556 = vdwg.mxu0
    %5557 = vmatpush.bf16.msra.mxu0 %v3579
    %5558 = vmatpush.bf16.msra.mxu0 %v3575
    %5559 = vmatpush.bf16.msra.mxu0 %v3571
    %5560 = vmatpush.bf16.msra.mxu0 %v3567
    %5561 = vmatpush.bf16.msra.mxu0 %v3563
    %5562 = vmatpush.bf16.msra.mxu0 %v3559
    %5563 = vmatpush.bf16.msra.mxu0 %v3555
    %5564 = vmatpush.bf16.msra.mxu0 %v3551
    %5565 = vmatmul.bf16.gmra.mxu0 %v195
    %v5566 = vpop.f32.mrf.mxu0
    %v5567 = vadd.f32 %v5554, %v5566
    %v5568 = vpop.f32.mrf.mxu0
    %5569 = vdwg.mxu0
    %5570 = vmatpush.bf16.msra.mxu0 %v3611
    %5571 = vmatpush.bf16.msra.mxu0 %v3607
    %5572 = vmatpush.bf16.msra.mxu0 %v3603
    %5573 = vmatpush.bf16.msra.mxu0 %v3599
    %5574 = vmatpush.bf16.msra.mxu0 %v3595
    %5575 = vmatpush.bf16.msra.mxu0 %v3591
    %5576 = vmatpush.bf16.msra.mxu0 %v3587
    %5577 = vmatpush.bf16.msra.mxu0 %v3583
    %5578 = vmatmul.bf16.gmra.mxu0 %v196
    %v5579 = vpop.f32.mrf.mxu0
    %v5580 = vadd.f32 %v5567, %v5579
    %v5581 = vpop.f32.mrf.mxu0
    %5582 = vdwg.mxu0
    %5583 = vmatpush.bf16.msra.mxu0 %v3643
    %5584 = vmatpush.bf16.msra.mxu0 %v3639
    %5585 = vmatpush.bf16.msra.mxu0 %v3635
    %5586 = vmatpush.bf16.msra.mxu0 %v3631
    %5587 = vmatpush.bf16.msra.mxu0 %v3627
    %5588 = vmatpush.bf16.msra.mxu0 %v3623
    %5589 = vmatpush.bf16.msra.mxu0 %v3619
    %5590 = vmatpush.bf16.msra.mxu0 %v3615
    %5591 = vmatmul.bf16.gmra.mxu0 %v197
    %v5592 = vpop.f32.mrf.mxu0
    %v5593 = vadd.f32 %v5580, %v5592
    %v5594 = vpop.f32.mrf.mxu0
    %5595 = vdwg.mxu0
    %5596 = vmatpush.bf16.msra.mxu0 %v3675
    %5597 = vmatpush.bf16.msra.mxu0 %v3671
    %5598 = vmatpush.bf16.msra.mxu0 %v3667
    %5599 = vmatpush.bf16.msra.mxu0 %v3663
    %5600 = vmatpush.bf16.msra.mxu0 %v3659
    %5601 = vmatpush.bf16.msra.mxu0 %v3655
    %5602 = vmatpush.bf16.msra.mxu0 %v3651
    %5603 = vmatpush.bf16.msra.mxu0 %v3647
    %5604 = vmatmul.bf16.gmra.mxu0 %v198
    %v5605 = vpop.f32.mrf.mxu0
    %v5606 = vadd.f32 %v5593, %v5605
    %v5607 = vpop.f32.mrf.mxu0
    %5608 = vdwg.mxu0
    %5609 = vmatpush.bf16.msra.mxu0 %v3707
    %5610 = vmatpush.bf16.msra.mxu0 %v3703
    %5611 = vmatpush.bf16.msra.mxu0 %v3699
    %5612 = vmatpush.bf16.msra.mxu0 %v3695
    %5613 = vmatpush.bf16.msra.mxu0 %v3691
    %5614 = vmatpush.bf16.msra.mxu0 %v3687
    %5615 = vmatpush.bf16.msra.mxu0 %v3683
    %5616 = vmatpush.bf16.msra.mxu0 %v3679
    %5617 = vmatmul.bf16.gmra.mxu0 %v199
    %v5618 = vpop.f32.mrf.mxu0
    %v5619 = vadd.f32 %v5606, %v5618
    %v5620 = vpop.f32.mrf.mxu0
    %5621 = vdwg.mxu0
    %5622 = vmatpush.bf16.msra.mxu0 %v3739
    %5623 = vmatpush.bf16.msra.mxu0 %v3735
    %5624 = vmatpush.bf16.msra.mxu0 %v3731
    %5625 = vmatpush.bf16.msra.mxu0 %v3727
    %5626 = vmatpush.bf16.msra.mxu0 %v3723
    %5627 = vmatpush.bf16.msra.mxu0 %v3719
    %5628 = vmatpush.bf16.msra.mxu0 %v3715
    %5629 = vmatpush.bf16.msra.mxu0 %v3711
    %5630 = vmatmul.bf16.gmra.mxu0 %v200
    %v5631 = vpop.f32.mrf.mxu0
    %v5632 = vadd.f32 %v5619, %v5631
    %v5633 = vpop.f32.mrf.mxu0
    %5634 = vdwg.mxu0
    %5635 = vmatpush.bf16.msra.mxu0 %v3771
    %5636 = vmatpush.bf16.msra.mxu0 %v3767
    %5637 = vmatpush.bf16.msra.mxu0 %v3763
    %5638 = vmatpush.bf16.msra.mxu0 %v3759
    %5639 = vmatpush.bf16.msra.mxu0 %v3755
    %5640 = vmatpush.bf16.msra.mxu0 %v3751
    %5641 = vmatpush.bf16.msra.mxu0 %v3747
    %5642 = vmatpush.bf16.msra.mxu0 %v3743
    %5643 = vmatmul.bf16.gmra.mxu0 %v201
    %v5644 = vpop.f32.mrf.mxu0
    %v5645 = vadd.f32 %v5632, %v5644
    %v5646 = vpop.f32.mrf.mxu0
    %5647 = vdwg.mxu0
    %5648 = vmatpush.bf16.msra.mxu0 %v3803
    %5649 = vmatpush.bf16.msra.mxu0 %v3799
    %5650 = vmatpush.bf16.msra.mxu0 %v3795
    %5651 = vmatpush.bf16.msra.mxu0 %v3791
    %5652 = vmatpush.bf16.msra.mxu0 %v3787
    %5653 = vmatpush.bf16.msra.mxu0 %v3783
    %5654 = vmatpush.bf16.msra.mxu0 %v3779
    %5655 = vmatpush.bf16.msra.mxu0 %v3775
    %5656 = vmatmul.bf16.gmra.mxu0 %v202
    %v5657 = vpop.f32.mrf.mxu0
    %v5658 = vadd.f32 %v5645, %v5657
    %v5659 = vpop.f32.mrf.mxu0
    %5660 = vdwg.mxu0
    %5661 = vmatpush.bf16.msra.mxu0 %v3835
    %5662 = vmatpush.bf16.msra.mxu0 %v3831
    %5663 = vmatpush.bf16.msra.mxu0 %v3827
    %5664 = vmatpush.bf16.msra.mxu0 %v3823
    %5665 = vmatpush.bf16.msra.mxu0 %v3819
    %5666 = vmatpush.bf16.msra.mxu0 %v3815
    %5667 = vmatpush.bf16.msra.mxu0 %v3811
    %5668 = vmatpush.bf16.msra.mxu0 %v3807
    %5669 = vmatmul.bf16.gmra.mxu0 %v203
    %v5670 = vpop.f32.mrf.mxu0
    %v5671 = vadd.f32 %v5658, %v5670
    %v5672 = vpop.f32.mrf.mxu0
    %5673 = vdwg.mxu0
    %5674 = vmatpush.bf16.msra.mxu0 %v3867
    %5675 = vmatpush.bf16.msra.mxu0 %v3863
    %5676 = vmatpush.bf16.msra.mxu0 %v3859
    %5677 = vmatpush.bf16.msra.mxu0 %v3855
    %5678 = vmatpush.bf16.msra.mxu0 %v3851
    %5679 = vmatpush.bf16.msra.mxu0 %v3847
    %5680 = vmatpush.bf16.msra.mxu0 %v3843
    %5681 = vmatpush.bf16.msra.mxu0 %v3839
    %5682 = vmatmul.bf16.gmra.mxu0 %v204
    %v5683 = vpop.f32.mrf.mxu0
    %v5684 = vadd.f32 %v5671, %v5683
    %v5685 = vpop.f32.mrf.mxu0
    %5686 = vdwg.mxu0
    %5687 = vmatpush.bf16.msra.mxu0 %v3899
    %5688 = vmatpush.bf16.msra.mxu0 %v3895
    %5689 = vmatpush.bf16.msra.mxu0 %v3891
    %5690 = vmatpush.bf16.msra.mxu0 %v3887
    %5691 = vmatpush.bf16.msra.mxu0 %v3883
    %5692 = vmatpush.bf16.msra.mxu0 %v3879
    %5693 = vmatpush.bf16.msra.mxu0 %v3875
    %5694 = vmatpush.bf16.msra.mxu0 %v3871
    %5695 = vmatmul.bf16.gmra.mxu0 %v205
    %v5696 = vpop.f32.mrf.mxu0
    %v5697 = vadd.f32 %v5684, %v5696
    %v5698 = vpop.f32.mrf.mxu0
    %5699 = vdwg.mxu0
    %5700 = vmatpush.bf16.msra.mxu0 %v3931
    %5701 = vmatpush.bf16.msra.mxu0 %v3927
    %5702 = vmatpush.bf16.msra.mxu0 %v3923
    %5703 = vmatpush.bf16.msra.mxu0 %v3919
    %5704 = vmatpush.bf16.msra.mxu0 %v3915
    %5705 = vmatpush.bf16.msra.mxu0 %v3911
    %5706 = vmatpush.bf16.msra.mxu0 %v3907
    %5707 = vmatpush.bf16.msra.mxu0 %v3903
    %5708 = vmatmul.bf16.gmra.mxu0 %v206
    %v5709 = vpop.f32.mrf.mxu0
    %v5710 = vadd.f32 %v5697, %v5709
    %v5711 = vpop.f32.mrf.mxu0
    %5712 = vdwg.mxu0
    %5713 = vmatpush.bf16.msra.mxu0 %v3963
    %5714 = vmatpush.bf16.msra.mxu0 %v3959
    %5715 = vmatpush.bf16.msra.mxu0 %v3955
    %5716 = vmatpush.bf16.msra.mxu0 %v3951
    %5717 = vmatpush.bf16.msra.mxu0 %v3947
    %5718 = vmatpush.bf16.msra.mxu0 %v3943
    %5719 = vmatpush.bf16.msra.mxu0 %v3939
    %5720 = vmatpush.bf16.msra.mxu0 %v3935
    %5721 = vmatmul.bf16.gmra.mxu0 %v207
    %v5722 = vpop.f32.mrf.mxu0
    %v5723 = vadd.f32 %v5710, %v5722
    %v5724 = vpop.f32.mrf.mxu0
    %5725 = vdwg.mxu0
    %5726 = vmatpush.bf16.msra.mxu0 %v3995
    %5727 = vmatpush.bf16.msra.mxu0 %v3991
    %5728 = vmatpush.bf16.msra.mxu0 %v3987
    %5729 = vmatpush.bf16.msra.mxu0 %v3983
    %5730 = vmatpush.bf16.msra.mxu0 %v3979
    %5731 = vmatpush.bf16.msra.mxu0 %v3975
    %5732 = vmatpush.bf16.msra.mxu0 %v3971
    %5733 = vmatpush.bf16.msra.mxu0 %v3967
    %5734 = vmatmul.bf16.gmra.mxu0 %v208
    %v5735 = vpop.f32.mrf.mxu0
    %v5736 = vadd.f32 %v5723, %v5735
    %v5737 = vpop.f32.mrf.mxu0
    %5738 = vdwg.mxu0
    %5739 = vmatpush.bf16.msra.mxu0 %v4027
    %5740 = vmatpush.bf16.msra.mxu0 %v4023
    %5741 = vmatpush.bf16.msra.mxu0 %v4019
    %5742 = vmatpush.bf16.msra.mxu0 %v4015
    %5743 = vmatpush.bf16.msra.mxu0 %v4011
    %5744 = vmatpush.bf16.msra.mxu0 %v4007
    %5745 = vmatpush.bf16.msra.mxu0 %v4003
    %5746 = vmatpush.bf16.msra.mxu0 %v3999
    %5747 = vmatmul.bf16.gmra.mxu0 %v209
    %v5748 = vpop.f32.mrf.mxu0
    %v5749 = vadd.f32 %v5736, %v5748
    %v5750 = vpop.f32.mrf.mxu0
    %5751 = vdwg.mxu0
    %5752 = vmatpush.bf16.msra.mxu0 %v4059
    %5753 = vmatpush.bf16.msra.mxu0 %v4055
    %5754 = vmatpush.bf16.msra.mxu0 %v4051
    %5755 = vmatpush.bf16.msra.mxu0 %v4047
    %5756 = vmatpush.bf16.msra.mxu0 %v4043
    %5757 = vmatpush.bf16.msra.mxu0 %v4039
    %5758 = vmatpush.bf16.msra.mxu0 %v4035
    %5759 = vmatpush.bf16.msra.mxu0 %v4031
    %5760 = vmatmul.bf16.gmra.mxu0 %v210
    %v5761 = vpop.f32.mrf.mxu0
    %v5762 = vadd.f32 %v5749, %v5761
    %v5763 = vpop.f32.mrf.mxu0
    %5764 = vdwg.mxu0
    %5765 = vmatpush.bf16.msra.mxu0 %v3324
    %5766 = vmatpush.bf16.msra.mxu0 %v3320
    %5767 = vmatpush.bf16.msra.mxu0 %v3316
    %5768 = vmatpush.bf16.msra.mxu0 %v3312
    %5769 = vmatpush.bf16.msra.mxu0 %v3308
    %5770 = vmatpush.bf16.msra.mxu0 %v3304
    %5771 = vmatpush.bf16.msra.mxu0 %v3300
    %5772 = vmatpush.bf16.msra.mxu0 %v3296
    %5773 = vmatmul.bf16.gmra.mxu0 %v187
    %v5774 = vpop.f32.mrf.mxu0
    %v5775 = vadd.f32 %v984, %v5774
    %v5776 = vpop.f32.mrf.mxu0
    %5777 = vdwg.mxu0
    %5778 = vmatpush.bf16.msra.mxu0 %v3356
    %5779 = vmatpush.bf16.msra.mxu0 %v3352
    %5780 = vmatpush.bf16.msra.mxu0 %v3348
    %5781 = vmatpush.bf16.msra.mxu0 %v3344
    %5782 = vmatpush.bf16.msra.mxu0 %v3340
    %5783 = vmatpush.bf16.msra.mxu0 %v3336
    %5784 = vmatpush.bf16.msra.mxu0 %v3332
    %5785 = vmatpush.bf16.msra.mxu0 %v3328
    %5786 = vmatmul.bf16.gmra.mxu0 %v188
    %v5787 = vpop.f32.mrf.mxu0
    %v5788 = vadd.f32 %v5775, %v5787
    %v5789 = vpop.f32.mrf.mxu0
    %5790 = vdwg.mxu0
    %5791 = vmatpush.bf16.msra.mxu0 %v3388
    %5792 = vmatpush.bf16.msra.mxu0 %v3384
    %5793 = vmatpush.bf16.msra.mxu0 %v3380
    %5794 = vmatpush.bf16.msra.mxu0 %v3376
    %5795 = vmatpush.bf16.msra.mxu0 %v3372
    %5796 = vmatpush.bf16.msra.mxu0 %v3368
    %5797 = vmatpush.bf16.msra.mxu0 %v3364
    %5798 = vmatpush.bf16.msra.mxu0 %v3360
    %5799 = vmatmul.bf16.gmra.mxu0 %v189
    %v5800 = vpop.f32.mrf.mxu0
    %v5801 = vadd.f32 %v5788, %v5800
    %v5802 = vpop.f32.mrf.mxu0
    %5803 = vdwg.mxu0
    %5804 = vmatpush.bf16.msra.mxu0 %v3420
    %5805 = vmatpush.bf16.msra.mxu0 %v3416
    %5806 = vmatpush.bf16.msra.mxu0 %v3412
    %5807 = vmatpush.bf16.msra.mxu0 %v3408
    %5808 = vmatpush.bf16.msra.mxu0 %v3404
    %5809 = vmatpush.bf16.msra.mxu0 %v3400
    %5810 = vmatpush.bf16.msra.mxu0 %v3396
    %5811 = vmatpush.bf16.msra.mxu0 %v3392
    %5812 = vmatmul.bf16.gmra.mxu0 %v190
    %v5813 = vpop.f32.mrf.mxu0
    %v5814 = vadd.f32 %v5801, %v5813
    %v5815 = vpop.f32.mrf.mxu0
    %5816 = vdwg.mxu0
    %5817 = vmatpush.bf16.msra.mxu0 %v3452
    %5818 = vmatpush.bf16.msra.mxu0 %v3448
    %5819 = vmatpush.bf16.msra.mxu0 %v3444
    %5820 = vmatpush.bf16.msra.mxu0 %v3440
    %5821 = vmatpush.bf16.msra.mxu0 %v3436
    %5822 = vmatpush.bf16.msra.mxu0 %v3432
    %5823 = vmatpush.bf16.msra.mxu0 %v3428
    %5824 = vmatpush.bf16.msra.mxu0 %v3424
    %5825 = vmatmul.bf16.gmra.mxu0 %v191
    %v5826 = vpop.f32.mrf.mxu0
    %v5827 = vadd.f32 %v5814, %v5826
    %v5828 = vpop.f32.mrf.mxu0
    %5829 = vdwg.mxu0
    %5830 = vmatpush.bf16.msra.mxu0 %v3484
    %5831 = vmatpush.bf16.msra.mxu0 %v3480
    %5832 = vmatpush.bf16.msra.mxu0 %v3476
    %5833 = vmatpush.bf16.msra.mxu0 %v3472
    %5834 = vmatpush.bf16.msra.mxu0 %v3468
    %5835 = vmatpush.bf16.msra.mxu0 %v3464
    %5836 = vmatpush.bf16.msra.mxu0 %v3460
    %5837 = vmatpush.bf16.msra.mxu0 %v3456
    %5838 = vmatmul.bf16.gmra.mxu0 %v192
    %v5839 = vpop.f32.mrf.mxu0
    %v5840 = vadd.f32 %v5827, %v5839
    %v5841 = vpop.f32.mrf.mxu0
    %5842 = vdwg.mxu0
    %5843 = vmatpush.bf16.msra.mxu0 %v3516
    %5844 = vmatpush.bf16.msra.mxu0 %v3512
    %5845 = vmatpush.bf16.msra.mxu0 %v3508
    %5846 = vmatpush.bf16.msra.mxu0 %v3504
    %5847 = vmatpush.bf16.msra.mxu0 %v3500
    %5848 = vmatpush.bf16.msra.mxu0 %v3496
    %5849 = vmatpush.bf16.msra.mxu0 %v3492
    %5850 = vmatpush.bf16.msra.mxu0 %v3488
    %5851 = vmatmul.bf16.gmra.mxu0 %v193
    %v5852 = vpop.f32.mrf.mxu0
    %v5853 = vadd.f32 %v5840, %v5852
    %v5854 = vpop.f32.mrf.mxu0
    %5855 = vdwg.mxu0
    %5856 = vmatpush.bf16.msra.mxu0 %v3548
    %5857 = vmatpush.bf16.msra.mxu0 %v3544
    %5858 = vmatpush.bf16.msra.mxu0 %v3540
    %5859 = vmatpush.bf16.msra.mxu0 %v3536
    %5860 = vmatpush.bf16.msra.mxu0 %v3532
    %5861 = vmatpush.bf16.msra.mxu0 %v3528
    %5862 = vmatpush.bf16.msra.mxu0 %v3524
    %5863 = vmatpush.bf16.msra.mxu0 %v3520
    %5864 = vmatmul.bf16.gmra.mxu0 %v194
    %v5865 = vpop.f32.mrf.mxu0
    %v5866 = vadd.f32 %v5853, %v5865
    %v5867 = vpop.f32.mrf.mxu0
    %5868 = vdwg.mxu0
    %5869 = vmatpush.bf16.msra.mxu0 %v3580
    %5870 = vmatpush.bf16.msra.mxu0 %v3576
    %5871 = vmatpush.bf16.msra.mxu0 %v3572
    %5872 = vmatpush.bf16.msra.mxu0 %v3568
    %5873 = vmatpush.bf16.msra.mxu0 %v3564
    %5874 = vmatpush.bf16.msra.mxu0 %v3560
    %5875 = vmatpush.bf16.msra.mxu0 %v3556
    %5876 = vmatpush.bf16.msra.mxu0 %v3552
    %5877 = vmatmul.bf16.gmra.mxu0 %v195
    %v5878 = vpop.f32.mrf.mxu0
    %v5879 = vadd.f32 %v5866, %v5878
    %v5880 = vpop.f32.mrf.mxu0
    %5881 = vdwg.mxu0
    %5882 = vmatpush.bf16.msra.mxu0 %v3612
    %5883 = vmatpush.bf16.msra.mxu0 %v3608
    %5884 = vmatpush.bf16.msra.mxu0 %v3604
    %5885 = vmatpush.bf16.msra.mxu0 %v3600
    %5886 = vmatpush.bf16.msra.mxu0 %v3596
    %5887 = vmatpush.bf16.msra.mxu0 %v3592
    %5888 = vmatpush.bf16.msra.mxu0 %v3588
    %5889 = vmatpush.bf16.msra.mxu0 %v3584
    %5890 = vmatmul.bf16.gmra.mxu0 %v196
    %v5891 = vpop.f32.mrf.mxu0
    %v5892 = vadd.f32 %v5879, %v5891
    %v5893 = vpop.f32.mrf.mxu0
    %5894 = vdwg.mxu0
    %5895 = vmatpush.bf16.msra.mxu0 %v3644
    %5896 = vmatpush.bf16.msra.mxu0 %v3640
    %5897 = vmatpush.bf16.msra.mxu0 %v3636
    %5898 = vmatpush.bf16.msra.mxu0 %v3632
    %5899 = vmatpush.bf16.msra.mxu0 %v3628
    %5900 = vmatpush.bf16.msra.mxu0 %v3624
    %5901 = vmatpush.bf16.msra.mxu0 %v3620
    %5902 = vmatpush.bf16.msra.mxu0 %v3616
    %5903 = vmatmul.bf16.gmra.mxu0 %v197
    %v5904 = vpop.f32.mrf.mxu0
    %v5905 = vadd.f32 %v5892, %v5904
    %v5906 = vpop.f32.mrf.mxu0
    %5907 = vdwg.mxu0
    %5908 = vmatpush.bf16.msra.mxu0 %v3676
    %5909 = vmatpush.bf16.msra.mxu0 %v3672
    %5910 = vmatpush.bf16.msra.mxu0 %v3668
    %5911 = vmatpush.bf16.msra.mxu0 %v3664
    %5912 = vmatpush.bf16.msra.mxu0 %v3660
    %5913 = vmatpush.bf16.msra.mxu0 %v3656
    %5914 = vmatpush.bf16.msra.mxu0 %v3652
    %5915 = vmatpush.bf16.msra.mxu0 %v3648
    %5916 = vmatmul.bf16.gmra.mxu0 %v198
    %v5917 = vpop.f32.mrf.mxu0
    %v5918 = vadd.f32 %v5905, %v5917
    %v5919 = vpop.f32.mrf.mxu0
    %5920 = vdwg.mxu0
    %5921 = vmatpush.bf16.msra.mxu0 %v3708
    %5922 = vmatpush.bf16.msra.mxu0 %v3704
    %5923 = vmatpush.bf16.msra.mxu0 %v3700
    %5924 = vmatpush.bf16.msra.mxu0 %v3696
    %5925 = vmatpush.bf16.msra.mxu0 %v3692
    %5926 = vmatpush.bf16.msra.mxu0 %v3688
    %5927 = vmatpush.bf16.msra.mxu0 %v3684
    %5928 = vmatpush.bf16.msra.mxu0 %v3680
    %5929 = vmatmul.bf16.gmra.mxu0 %v199
    %v5930 = vpop.f32.mrf.mxu0
    %v5931 = vadd.f32 %v5918, %v5930
    %v5932 = vpop.f32.mrf.mxu0
    %5933 = vdwg.mxu0
    %5934 = vmatpush.bf16.msra.mxu0 %v3740
    %5935 = vmatpush.bf16.msra.mxu0 %v3736
    %5936 = vmatpush.bf16.msra.mxu0 %v3732
    %5937 = vmatpush.bf16.msra.mxu0 %v3728
    %5938 = vmatpush.bf16.msra.mxu0 %v3724
    %5939 = vmatpush.bf16.msra.mxu0 %v3720
    %5940 = vmatpush.bf16.msra.mxu0 %v3716
    %5941 = vmatpush.bf16.msra.mxu0 %v3712
    %5942 = vmatmul.bf16.gmra.mxu0 %v200
    %v5943 = vpop.f32.mrf.mxu0
    %v5944 = vadd.f32 %v5931, %v5943
    %v5945 = vpop.f32.mrf.mxu0
    %5946 = vdwg.mxu0
    %5947 = vmatpush.bf16.msra.mxu0 %v3772
    %5948 = vmatpush.bf16.msra.mxu0 %v3768
    %5949 = vmatpush.bf16.msra.mxu0 %v3764
    %5950 = vmatpush.bf16.msra.mxu0 %v3760
    %5951 = vmatpush.bf16.msra.mxu0 %v3756
    %5952 = vmatpush.bf16.msra.mxu0 %v3752
    %5953 = vmatpush.bf16.msra.mxu0 %v3748
    %5954 = vmatpush.bf16.msra.mxu0 %v3744
    %5955 = vmatmul.bf16.gmra.mxu0 %v201
    %v5956 = vpop.f32.mrf.mxu0
    %v5957 = vadd.f32 %v5944, %v5956
    %v5958 = vpop.f32.mrf.mxu0
    %5959 = vdwg.mxu0
    %5960 = vmatpush.bf16.msra.mxu0 %v3804
    %5961 = vmatpush.bf16.msra.mxu0 %v3800
    %5962 = vmatpush.bf16.msra.mxu0 %v3796
    %5963 = vmatpush.bf16.msra.mxu0 %v3792
    %5964 = vmatpush.bf16.msra.mxu0 %v3788
    %5965 = vmatpush.bf16.msra.mxu0 %v3784
    %5966 = vmatpush.bf16.msra.mxu0 %v3780
    %5967 = vmatpush.bf16.msra.mxu0 %v3776
    %5968 = vmatmul.bf16.gmra.mxu0 %v202
    %v5969 = vpop.f32.mrf.mxu0
    %v5970 = vadd.f32 %v5957, %v5969
    %v5971 = vpop.f32.mrf.mxu0
    %5972 = vdwg.mxu0
    %5973 = vmatpush.bf16.msra.mxu0 %v3836
    %5974 = vmatpush.bf16.msra.mxu0 %v3832
    %5975 = vmatpush.bf16.msra.mxu0 %v3828
    %5976 = vmatpush.bf16.msra.mxu0 %v3824
    %5977 = vmatpush.bf16.msra.mxu0 %v3820
    %5978 = vmatpush.bf16.msra.mxu0 %v3816
    %5979 = vmatpush.bf16.msra.mxu0 %v3812
    %5980 = vmatpush.bf16.msra.mxu0 %v3808
    %5981 = vmatmul.bf16.gmra.mxu0 %v203
    %v5982 = vpop.f32.mrf.mxu0
    %v5983 = vadd.f32 %v5970, %v5982
    %v5984 = vpop.f32.mrf.mxu0
    %5985 = vdwg.mxu0
    %5986 = vmatpush.bf16.msra.mxu0 %v3868
    %5987 = vmatpush.bf16.msra.mxu0 %v3864
    %5988 = vmatpush.bf16.msra.mxu0 %v3860
    %5989 = vmatpush.bf16.msra.mxu0 %v3856
    %5990 = vmatpush.bf16.msra.mxu0 %v3852
    %5991 = vmatpush.bf16.msra.mxu0 %v3848
    %5992 = vmatpush.bf16.msra.mxu0 %v3844
    %5993 = vmatpush.bf16.msra.mxu0 %v3840
    %5994 = vmatmul.bf16.gmra.mxu0 %v204
    %v5995 = vpop.f32.mrf.mxu0
    %v5996 = vadd.f32 %v5983, %v5995
    %v5997 = vpop.f32.mrf.mxu0
    %5998 = vdwg.mxu0
    %5999 = vmatpush.bf16.msra.mxu0 %v3900
    %6000 = vmatpush.bf16.msra.mxu0 %v3896
    %6001 = vmatpush.bf16.msra.mxu0 %v3892
    %6002 = vmatpush.bf16.msra.mxu0 %v3888
    %6003 = vmatpush.bf16.msra.mxu0 %v3884
    %6004 = vmatpush.bf16.msra.mxu0 %v3880
    %6005 = vmatpush.bf16.msra.mxu0 %v3876
    %6006 = vmatpush.bf16.msra.mxu0 %v3872
    %6007 = vmatmul.bf16.gmra.mxu0 %v205
    %v6008 = vpop.f32.mrf.mxu0
    %v6009 = vadd.f32 %v5996, %v6008
    %v6010 = vpop.f32.mrf.mxu0
    %6011 = vdwg.mxu0
    %6012 = vmatpush.bf16.msra.mxu0 %v3932
    %6013 = vmatpush.bf16.msra.mxu0 %v3928
    %6014 = vmatpush.bf16.msra.mxu0 %v3924
    %6015 = vmatpush.bf16.msra.mxu0 %v3920
    %6016 = vmatpush.bf16.msra.mxu0 %v3916
    %6017 = vmatpush.bf16.msra.mxu0 %v3912
    %6018 = vmatpush.bf16.msra.mxu0 %v3908
    %6019 = vmatpush.bf16.msra.mxu0 %v3904
    %6020 = vmatmul.bf16.gmra.mxu0 %v206
    %v6021 = vpop.f32.mrf.mxu0
    %v6022 = vadd.f32 %v6009, %v6021
    %v6023 = vpop.f32.mrf.mxu0
    %6024 = vdwg.mxu0
    %6025 = vmatpush.bf16.msra.mxu0 %v3964
    %6026 = vmatpush.bf16.msra.mxu0 %v3960
    %6027 = vmatpush.bf16.msra.mxu0 %v3956
    %6028 = vmatpush.bf16.msra.mxu0 %v3952
    %6029 = vmatpush.bf16.msra.mxu0 %v3948
    %6030 = vmatpush.bf16.msra.mxu0 %v3944
    %6031 = vmatpush.bf16.msra.mxu0 %v3940
    %6032 = vmatpush.bf16.msra.mxu0 %v3936
    %6033 = vmatmul.bf16.gmra.mxu0 %v207
    %v6034 = vpop.f32.mrf.mxu0
    %v6035 = vadd.f32 %v6022, %v6034
    %v6036 = vpop.f32.mrf.mxu0
    %6037 = vdwg.mxu0
    %6038 = vmatpush.bf16.msra.mxu0 %v3996
    %6039 = vmatpush.bf16.msra.mxu0 %v3992
    %6040 = vmatpush.bf16.msra.mxu0 %v3988
    %6041 = vmatpush.bf16.msra.mxu0 %v3984
    %6042 = vmatpush.bf16.msra.mxu0 %v3980
    %6043 = vmatpush.bf16.msra.mxu0 %v3976
    %6044 = vmatpush.bf16.msra.mxu0 %v3972
    %6045 = vmatpush.bf16.msra.mxu0 %v3968
    %6046 = vmatmul.bf16.gmra.mxu0 %v208
    %v6047 = vpop.f32.mrf.mxu0
    %v6048 = vadd.f32 %v6035, %v6047
    %v6049 = vpop.f32.mrf.mxu0
    %6050 = vdwg.mxu0
    %6051 = vmatpush.bf16.msra.mxu0 %v4028
    %6052 = vmatpush.bf16.msra.mxu0 %v4024
    %6053 = vmatpush.bf16.msra.mxu0 %v4020
    %6054 = vmatpush.bf16.msra.mxu0 %v4016
    %6055 = vmatpush.bf16.msra.mxu0 %v4012
    %6056 = vmatpush.bf16.msra.mxu0 %v4008
    %6057 = vmatpush.bf16.msra.mxu0 %v4004
    %6058 = vmatpush.bf16.msra.mxu0 %v4000
    %6059 = vmatmul.bf16.gmra.mxu0 %v209
    %v6060 = vpop.f32.mrf.mxu0
    %v6061 = vadd.f32 %v6048, %v6060
    %v6062 = vpop.f32.mrf.mxu0
    %6063 = vdwg.mxu0
    %6064 = vmatpush.bf16.msra.mxu0 %v4060
    %6065 = vmatpush.bf16.msra.mxu0 %v4056
    %6066 = vmatpush.bf16.msra.mxu0 %v4052
    %6067 = vmatpush.bf16.msra.mxu0 %v4048
    %6068 = vmatpush.bf16.msra.mxu0 %v4044
    %6069 = vmatpush.bf16.msra.mxu0 %v4040
    %6070 = vmatpush.bf16.msra.mxu0 %v4036
    %6071 = vmatpush.bf16.msra.mxu0 %v4032
    %6072 = vmatmul.bf16.gmra.mxu0 %v210
    %v6073 = vpop.f32.mrf.mxu0
    %v6074 = vadd.f32 %v6061, %v6073
    %v6075 = vpop.f32.mrf.mxu0
    %6076 = vdwg.mxu0
    %v6077 = vmax.f32 %v5138, 0.0
    %v6078 = vmax.f32 %v5450, 0.0
    %v6079 = vmax.f32 %v5762, 0.0
    %v6080 = vmax.f32 %v6074, 0.0
    %v6081 = vpack.c.bf16 %v6077, %v6077
    %v6082 = vpack.c.bf16 %v6078, %v6078
    %v6083 = vpack.c.bf16 %v6079, %v6079
    %v6084 = vpack.c.bf16 %v6080, %v6080
    %v6085 = vld [vmem:[#allocation8] sm:$0xff]
    %v6086 = vld [vmem:[#allocation8 + $0x8] sm:$0xff]
    %v6087 = vld [vmem:[#allocation8 + $0x10] sm:$0xff]
    %v6088 = vld [vmem:[#allocation8 + $0x18] sm:$0xff]
    %v6089 = vld [vmem:[#allocation8 + $0x20] sm:$0xff]
    %v6090 = vld [vmem:[#allocation8 + $0x28] sm:$0xff]
    %v6091 = vld [vmem:[#allocation8 + $0x30] sm:$0xff]
    %v6092 = vld [vmem:[#allocation8 + $0x38] sm:$0xff]
    %v6093 = vld [vmem:[#allocation8 + $0x40] sm:$0xff]
    %v6094 = vld [vmem:[#allocation8 + $0x48] sm:$0xff]
    %v6095 = vld [vmem:[#allocation8 + $0x50] sm:$0xff]
    %v6096 = vld [vmem:[#allocation8 + $0x58] sm:$0xff]
    %v6097 = vld [vmem:[#allocation8 + $0x60] sm:$0xff]
    %v6098 = vld [vmem:[#allocation8 + $0x68] sm:$0xff]
    %v6099 = vld [vmem:[#allocation8 + $0x70] sm:$0xff]
    %v6100 = vld [vmem:[#allocation8 + $0x78] sm:$0xff]
    %v6101 = vld [vmem:[#allocation8 + $0x80] sm:$0xff]
    %v6102 = vld [vmem:[#allocation8 + $0x88] sm:$0xff]
    %v6103 = vld [vmem:[#allocation8 + $0x90] sm:$0xff]
    %v6104 = vld [vmem:[#allocation8 + $0x98] sm:$0xff]
    %v6105 = vld [vmem:[#allocation8 + $0xa0] sm:$0xff]
    %v6106 = vld [vmem:[#allocation8 + $0xa8] sm:$0xff]
    %v6107 = vld [vmem:[#allocation8 + $0xb0] sm:$0xff]
    %v6108 = vld [vmem:[#allocation8 + $0xb8] sm:$0xff]
    %v6109 = vld [vmem:[#allocation8 + $0xc0] sm:$0xff]
    %v6110 = vld [vmem:[#allocation8 + $0xc8] sm:$0xff]
    %v6111 = vld [vmem:[#allocation8 + $0xd0] sm:$0xff]
    %v6112 = vld [vmem:[#allocation8 + $0xd8] sm:$0xff]
    %v6113 = vld [vmem:[#allocation8 + $0xe0] sm:$0xff]
    %v6114 = vld [vmem:[#allocation8 + $0xe8] sm:$0xff]
    %v6115 = vld [vmem:[#allocation8 + $0xf0] sm:$0xff]
    %v6116 = vld [vmem:[#allocation8 + $0xf8] sm:$0xff]
    %v6117 = vld [vmem:[#allocation8 + $0x100] sm:$0xff]
    %v6118 = vld [vmem:[#allocation8 + $0x108] sm:$0xff]
    %v6119 = vld [vmem:[#allocation8 + $0x110] sm:$0xff]
    %v6120 = vld [vmem:[#allocation8 + $0x118] sm:$0xff]
    %v6121 = vld [vmem:[#allocation8 + $0x120] sm:$0xff]
    %v6122 = vld [vmem:[#allocation8 + $0x128] sm:$0xff]
    %v6123 = vld [vmem:[#allocation8 + $0x130] sm:$0xff]
    %v6124 = vld [vmem:[#allocation8 + $0x138] sm:$0xff]
    %v6125 = vld [vmem:[#allocation8 + $0x140] sm:$0xff]
    %v6126 = vld [vmem:[#allocation8 + $0x148] sm:$0xff]
    %v6127 = vld [vmem:[#allocation8 + $0x150] sm:$0xff]
    %v6128 = vld [vmem:[#allocation8 + $0x158] sm:$0xff]
    %v6129 = vld [vmem:[#allocation8 + $0x160] sm:$0xff]
    %v6130 = vld [vmem:[#allocation8 + $0x168] sm:$0xff]
    %v6131 = vld [vmem:[#allocation8 + $0x170] sm:$0xff]
    %v6132 = vld [vmem:[#allocation8 + $0x178] sm:$0xff]
    %v6133 = vld [vmem:[#allocation8 + $0x180] sm:$0xff]
    %v6134 = vld [vmem:[#allocation8 + $0x188] sm:$0xff]
    %v6135 = vld [vmem:[#allocation8 + $0x190] sm:$0xff]
    %v6136 = vld [vmem:[#allocation8 + $0x198] sm:$0xff]
    %v6137 = vld [vmem:[#allocation8 + $0x1a0] sm:$0xff]
    %v6138 = vld [vmem:[#allocation8 + $0x1a8] sm:$0xff]
    %v6139 = vld [vmem:[#allocation8 + $0x1b0] sm:$0xff]
    %v6140 = vld [vmem:[#allocation8 + $0x1b8] sm:$0xff]
    %v6141 = vld [vmem:[#allocation8 + $0x1c0] sm:$0xff]
    %v6142 = vld [vmem:[#allocation8 + $0x1c8] sm:$0xff]
    %v6143 = vld [vmem:[#allocation8 + $0x1d0] sm:$0xff]
    %v6144 = vld [vmem:[#allocation8 + $0x1d8] sm:$0xff]
    %v6145 = vld [vmem:[#allocation8 + $0x1e0] sm:$0xff]
    %v6146 = vld [vmem:[#allocation8 + $0x1e8] sm:$0xff]
    %v6147 = vld [vmem:[#allocation8 + $0x1f0] sm:$0xff]
    %v6148 = vld [vmem:[#allocation8 + $0x1f8] sm:$0xff]
    %v6149 = vld [vmem:[#allocation10] sm:$0x3]
    %v6151 = vperm.slane %v6149, 0
    %v6152 = vperm.slane %v6149, 1
    %v6219 = vunpack.c.l.b16 %v6085
    %v6220 = vunpack.c.h.b16 %v6085
    %v6221 = vunpack.c.l.b16 %v6086
    %v6222 = vunpack.c.h.b16 %v6086
    %v6223 = vunpack.c.l.b16 %v6087
    %v6224 = vunpack.c.h.b16 %v6087
    %v6225 = vunpack.c.l.b16 %v6088
    %v6226 = vunpack.c.h.b16 %v6088
    %v6227 = vunpack.c.l.b16 %v6089
    %v6228 = vunpack.c.h.b16 %v6089
    %v6229 = vunpack.c.l.b16 %v6090
    %v6230 = vunpack.c.h.b16 %v6090
    %v6231 = vunpack.c.l.b16 %v6091
    %v6232 = vunpack.c.h.b16 %v6091
    %v6233 = vunpack.c.l.b16 %v6092
    %v6234 = vunpack.c.h.b16 %v6092
    %v6235 = vunpack.c.l.b16 %v6093
    %v6236 = vunpack.c.h.b16 %v6093
    %v6237 = vunpack.c.l.b16 %v6094
    %v6238 = vunpack.c.h.b16 %v6094
    %v6239 = vunpack.c.l.b16 %v6095
    %v6240 = vunpack.c.h.b16 %v6095
    %v6241 = vunpack.c.l.b16 %v6096
    %v6242 = vunpack.c.h.b16 %v6096
    %v6243 = vunpack.c.l.b16 %v6097
    %v6244 = vunpack.c.h.b16 %v6097
    %v6245 = vunpack.c.l.b16 %v6098
    %v6246 = vunpack.c.h.b16 %v6098
    %v6247 = vunpack.c.l.b16 %v6099
    %v6248 = vunpack.c.h.b16 %v6099
    %v6249 = vunpack.c.l.b16 %v6100
    %v6250 = vunpack.c.h.b16 %v6100
    %v6251 = vunpack.c.l.b16 %v6101
    %v6252 = vunpack.c.h.b16 %v6101
    %v6253 = vunpack.c.l.b16 %v6102
    %v6254 = vunpack.c.h.b16 %v6102
    %v6255 = vunpack.c.l.b16 %v6103
    %v6256 = vunpack.c.h.b16 %v6103
    %v6257 = vunpack.c.l.b16 %v6104
    %v6258 = vunpack.c.h.b16 %v6104
    %v6259 = vunpack.c.l.b16 %v6105
    %v6260 = vunpack.c.h.b16 %v6105
    %v6261 = vunpack.c.l.b16 %v6106
    %v6262 = vunpack.c.h.b16 %v6106
    %v6263 = vunpack.c.l.b16 %v6107
    %v6264 = vunpack.c.h.b16 %v6107
    %v6265 = vunpack.c.l.b16 %v6108
    %v6266 = vunpack.c.h.b16 %v6108
    %v6267 = vunpack.c.l.b16 %v6109
    %v6268 = vunpack.c.h.b16 %v6109
    %v6269 = vunpack.c.l.b16 %v6110
    %v6270 = vunpack.c.h.b16 %v6110
    %v6271 = vunpack.c.l.b16 %v6111
    %v6272 = vunpack.c.h.b16 %v6111
    %v6273 = vunpack.c.l.b16 %v6112
    %v6274 = vunpack.c.h.b16 %v6112
    %v6275 = vunpack.c.l.b16 %v6113
    %v6276 = vunpack.c.h.b16 %v6113
    %v6277 = vunpack.c.l.b16 %v6114
    %v6278 = vunpack.c.h.b16 %v6114
    %v6279 = vunpack.c.l.b16 %v6115
    %v6280 = vunpack.c.h.b16 %v6115
    %v6281 = vunpack.c.l.b16 %v6116
    %v6282 = vunpack.c.h.b16 %v6116
    %v6283 = vunpack.c.l.b16 %v6117
    %v6284 = vunpack.c.h.b16 %v6117
    %v6285 = vunpack.c.l.b16 %v6118
    %v6286 = vunpack.c.h.b16 %v6118
    %v6287 = vunpack.c.l.b16 %v6119
    %v6288 = vunpack.c.h.b16 %v6119
    %v6289 = vunpack.c.l.b16 %v6120
    %v6290 = vunpack.c.h.b16 %v6120
    %v6291 = vunpack.c.l.b16 %v6121
    %v6292 = vunpack.c.h.b16 %v6121
    %v6293 = vunpack.c.l.b16 %v6122
    %v6294 = vunpack.c.h.b16 %v6122
    %v6295 = vunpack.c.l.b16 %v6123
    %v6296 = vunpack.c.h.b16 %v6123
    %v6297 = vunpack.c.l.b16 %v6124
    %v6298 = vunpack.c.h.b16 %v6124
    %v6299 = vunpack.c.l.b16 %v6125
    %v6300 = vunpack.c.h.b16 %v6125
    %v6301 = vunpack.c.l.b16 %v6126
    %v6302 = vunpack.c.h.b16 %v6126
    %v6303 = vunpack.c.l.b16 %v6127
    %v6304 = vunpack.c.h.b16 %v6127
    %v6305 = vunpack.c.l.b16 %v6128
    %v6306 = vunpack.c.h.b16 %v6128
    %v6307 = vunpack.c.l.b16 %v6129
    %v6308 = vunpack.c.h.b16 %v6129
    %v6309 = vunpack.c.l.b16 %v6130
    %v6310 = vunpack.c.h.b16 %v6130
    %v6311 = vunpack.c.l.b16 %v6131
    %v6312 = vunpack.c.h.b16 %v6131
    %v6313 = vunpack.c.l.b16 %v6132
    %v6314 = vunpack.c.h.b16 %v6132
    %v6315 = vunpack.c.l.b16 %v6133
    %v6316 = vunpack.c.h.b16 %v6133
    %v6317 = vunpack.c.l.b16 %v6134
    %v6318 = vunpack.c.h.b16 %v6134
    %v6319 = vunpack.c.l.b16 %v6135
    %v6320 = vunpack.c.h.b16 %v6135
    %v6321 = vunpack.c.l.b16 %v6136
    %v6322 = vunpack.c.h.b16 %v6136
    %v6323 = vunpack.c.l.b16 %v6137
    %v6324 = vunpack.c.h.b16 %v6137
    %v6325 = vunpack.c.l.b16 %v6138
    %v6326 = vunpack.c.h.b16 %v6138
    %v6327 = vunpack.c.l.b16 %v6139
    %v6328 = vunpack.c.h.b16 %v6139
    %v6329 = vunpack.c.l.b16 %v6140
    %v6330 = vunpack.c.h.b16 %v6140
    %v6331 = vunpack.c.l.b16 %v6141
    %v6332 = vunpack.c.h.b16 %v6141
    %v6333 = vunpack.c.l.b16 %v6142
    %v6334 = vunpack.c.h.b16 %v6142
    %v6335 = vunpack.c.l.b16 %v6143
    %v6336 = vunpack.c.h.b16 %v6143
    %v6337 = vunpack.c.l.b16 %v6144
    %v6338 = vunpack.c.h.b16 %v6144
    %v6339 = vunpack.c.l.b16 %v6145
    %v6340 = vunpack.c.h.b16 %v6145
    %v6341 = vunpack.c.l.b16 %v6146
    %v6342 = vunpack.c.h.b16 %v6146
    %v6343 = vunpack.c.l.b16 %v6147
    %v6344 = vunpack.c.h.b16 %v6147
    %v6345 = vunpack.c.l.b16 %v6148
    %v6346 = vunpack.c.h.b16 %v6148
    %v6347 = vpack.c.b16 %v6221, %v6219
    %v6348 = vpack.c.b16 %v6222, %v6220
    %v6349 = vpack.c.b16 %v6225, %v6223
    %v6350 = vpack.c.b16 %v6226, %v6224
    %v6351 = vpack.c.b16 %v6229, %v6227
    %v6352 = vpack.c.b16 %v6230, %v6228
    %v6353 = vpack.c.b16 %v6233, %v6231
    %v6354 = vpack.c.b16 %v6234, %v6232
    %v6355 = vpack.c.b16 %v6237, %v6235
    %v6356 = vpack.c.b16 %v6238, %v6236
    %v6357 = vpack.c.b16 %v6241, %v6239
    %v6358 = vpack.c.b16 %v6242, %v6240
    %v6359 = vpack.c.b16 %v6245, %v6243
    %v6360 = vpack.c.b16 %v6246, %v6244
    %v6361 = vpack.c.b16 %v6249, %v6247
    %v6362 = vpack.c.b16 %v6250, %v6248
    %v6363 = vpack.c.b16 %v6253, %v6251
    %v6364 = vpack.c.b16 %v6254, %v6252
    %v6365 = vpack.c.b16 %v6257, %v6255
    %v6366 = vpack.c.b16 %v6258, %v6256
    %v6367 = vpack.c.b16 %v6261, %v6259
    %v6368 = vpack.c.b16 %v6262, %v6260
    %v6369 = vpack.c.b16 %v6265, %v6263
    %v6370 = vpack.c.b16 %v6266, %v6264
    %v6371 = vpack.c.b16 %v6269, %v6267
    %v6372 = vpack.c.b16 %v6270, %v6268
    %v6373 = vpack.c.b16 %v6273, %v6271
    %v6374 = vpack.c.b16 %v6274, %v6272
    %v6375 = vpack.c.b16 %v6277, %v6275
    %v6376 = vpack.c.b16 %v6278, %v6276
    %v6377 = vpack.c.b16 %v6281, %v6279
    %v6378 = vpack.c.b16 %v6282, %v6280
    %v6379 = vpack.c.b16 %v6285, %v6283
    %v6380 = vpack.c.b16 %v6286, %v6284
    %v6381 = vpack.c.b16 %v6289, %v6287
    %v6382 = vpack.c.b16 %v6290, %v6288
    %v6383 = vpack.c.b16 %v6293, %v6291
    %v6384 = vpack.c.b16 %v6294, %v6292
    %v6385 = vpack.c.b16 %v6297, %v6295
    %v6386 = vpack.c.b16 %v6298, %v6296
    %v6387 = vpack.c.b16 %v6301, %v6299
    %v6388 = vpack.c.b16 %v6302, %v6300
    %v6389 = vpack.c.b16 %v6305, %v6303
    %v6390 = vpack.c.b16 %v6306, %v6304
    %v6391 = vpack.c.b16 %v6309, %v6307
    %v6392 = vpack.c.b16 %v6310, %v6308
    %v6393 = vpack.c.b16 %v6313, %v6311
    %v6394 = vpack.c.b16 %v6314, %v6312
    %v6395 = vpack.c.b16 %v6317, %v6315
    %v6396 = vpack.c.b16 %v6318, %v6316
    %v6397 = vpack.c.b16 %v6321, %v6319
    %v6398 = vpack.c.b16 %v6322, %v6320
    %v6399 = vpack.c.b16 %v6325, %v6323
    %v6400 = vpack.c.b16 %v6326, %v6324
    %v6401 = vpack.c.b16 %v6329, %v6327
    %v6402 = vpack.c.b16 %v6330, %v6328
    %v6403 = vpack.c.b16 %v6333, %v6331
    %v6404 = vpack.c.b16 %v6334, %v6332
    %v6405 = vpack.c.b16 %v6337, %v6335
    %v6406 = vpack.c.b16 %v6338, %v6336
    %v6407 = vpack.c.b16 %v6341, %v6339
    %v6408 = vpack.c.b16 %v6342, %v6340
    %v6409 = vpack.c.b16 %v6345, %v6343
    %v6410 = vpack.c.b16 %v6346, %v6344
    %6475 = vmatpush.bf16.msra.mxu0 %v6361
    %6476 = vmatpush.bf16.msra.mxu0 %v6359
    %6477 = vmatpush.bf16.msra.mxu0 %v6357
    %6478 = vmatpush.bf16.msra.mxu0 %v6355
    %6479 = vmatpush.bf16.msra.mxu0 %v6353
    %6480 = vmatpush.bf16.msra.mxu0 %v6351
    %6481 = vmatpush.bf16.msra.mxu0 %v6349
    %6482 = vmatpush.bf16.msra.mxu0 %v6347
    %6483 = vmatmul.bf16.gmra.mxu0 %v6081
    %v6484 = vpop.f32.mrf.mxu0
    %v6485 = vadd.f32 %v6151, %v6484
    %v6486 = vpop.f32.mrf.mxu0
    %6487 = vdwg.mxu0
    %6488 = vmatpush.bf16.msra.mxu0 %v6377
    %6489 = vmatpush.bf16.msra.mxu0 %v6375
    %6490 = vmatpush.bf16.msra.mxu0 %v6373
    %6491 = vmatpush.bf16.msra.mxu0 %v6371
    %6492 = vmatpush.bf16.msra.mxu0 %v6369
    %6493 = vmatpush.bf16.msra.mxu0 %v6367
    %6494 = vmatpush.bf16.msra.mxu0 %v6365
    %6495 = vmatpush.bf16.msra.mxu0 %v6363
    %6496 = vmatmul.bf16.gmra.mxu0 %v6082
    %v6497 = vpop.f32.mrf.mxu0
    %v6498 = vadd.f32 %v6485, %v6497
    %v6499 = vpop.f32.mrf.mxu0
    %6500 = vdwg.mxu0
    %6501 = vmatpush.bf16.msra.mxu0 %v6393
    %6502 = vmatpush.bf16.msra.mxu0 %v6391
    %6503 = vmatpush.bf16.msra.mxu0 %v6389
    %6504 = vmatpush.bf16.msra.mxu0 %v6387
    %6505 = vmatpush.bf16.msra.mxu0 %v6385
    %6506 = vmatpush.bf16.msra.mxu0 %v6383
    %6507 = vmatpush.bf16.msra.mxu0 %v6381
    %6508 = vmatpush.bf16.msra.mxu0 %v6379
    %6509 = vmatmul.bf16.gmra.mxu0 %v6083
    %v6510 = vpop.f32.mrf.mxu0
    %v6511 = vadd.f32 %v6498, %v6510
    %v6512 = vpop.f32.mrf.mxu0
    %6513 = vdwg.mxu0
    %6514 = vmatpush.bf16.msra.mxu0 %v6409
    %6515 = vmatpush.bf16.msra.mxu0 %v6407
    %6516 = vmatpush.bf16.msra.mxu0 %v6405
    %6517 = vmatpush.bf16.msra.mxu0 %v6403
    %6518 = vmatpush.bf16.msra.mxu0 %v6401
    %6519 = vmatpush.bf16.msra.mxu0 %v6399
    %6520 = vmatpush.bf16.msra.mxu0 %v6397
    %6521 = vmatpush.bf16.msra.mxu0 %v6395
    %6522 = vmatmul.bf16.gmra.mxu0 %v6084
    %v6523 = vpop.f32.mrf.mxu0
    %v6524 = vadd.f32 %v6511, %v6523
    %v6525 = vpop.f32.mrf.mxu0
    %6526 = vdwg.mxu0
    %6527 = vmatpush.bf16.msra.mxu0 %v6362
    %6528 = vmatpush.bf16.msra.mxu0 %v6360
    %6529 = vmatpush.bf16.msra.mxu0 %v6358
    %6530 = vmatpush.bf16.msra.mxu0 %v6356
    %6531 = vmatpush.bf16.msra.mxu0 %v6354
    %6532 = vmatpush.bf16.msra.mxu0 %v6352
    %6533 = vmatpush.bf16.msra.mxu0 %v6350
    %6534 = vmatpush.bf16.msra.mxu0 %v6348
    %6535 = vmatmul.bf16.gmra.mxu0 %v6081
    %v6536 = vpop.f32.mrf.mxu0
    %v6537 = vadd.f32 %v6152, %v6536
    %v6538 = vpop.f32.mrf.mxu0
    %6539 = vdwg.mxu0
    %6540 = vmatpush.bf16.msra.mxu0 %v6378
    %6541 = vmatpush.bf16.msra.mxu0 %v6376
    %6542 = vmatpush.bf16.msra.mxu0 %v6374
    %6543 = vmatpush.bf16.msra.mxu0 %v6372
    %6544 = vmatpush.bf16.msra.mxu0 %v6370
    %6545 = vmatpush.bf16.msra.mxu0 %v6368
    %6546 = vmatpush.bf16.msra.mxu0 %v6366
    %6547 = vmatpush.bf16.msra.mxu0 %v6364
    %6548 = vmatmul.bf16.gmra.mxu0 %v6082
    %v6549 = vpop.f32.mrf.mxu0
    %v6550 = vadd.f32 %v6537, %v6549
    %v6551 = vpop.f32.mrf.mxu0
    %6552 = vdwg.mxu0
    %6553 = vmatpush.bf16.msra.mxu0 %v6394
    %6554 = vmatpush.bf16.msra.mxu0 %v6392
    %6555 = vmatpush.bf16.msra.mxu0 %v6390
    %6556 = vmatpush.bf16.msra.mxu0 %v6388
    %6557 = vmatpush.bf16.msra.mxu0 %v6386
    %6558 = vmatpush.bf16.msra.mxu0 %v6384
    %6559 = vmatpush.bf16.msra.mxu0 %v6382
    %6560 = vmatpush.bf16.msra.mxu0 %v6380
    %6561 = vmatmul.bf16.gmra.mxu0 %v6083
    %v6562 = vpop.f32.mrf.mxu0
    %v6563 = vadd.f32 %v6550, %v6562
    %v6564 = vpop.f32.mrf.mxu0
    %6565 = vdwg.mxu0
    %6566 = vmatpush.bf16.msra.mxu0 %v6410
    %6567 = vmatpush.bf16.msra.mxu0 %v6408
    %6568 = vmatpush.bf16.msra.mxu0 %v6406
    %6569 = vmatpush.bf16.msra.mxu0 %v6404
    %6570 = vmatpush.bf16.msra.mxu0 %v6402
    %6571 = vmatpush.bf16.msra.mxu0 %v6400
    %6572 = vmatpush.bf16.msra.mxu0 %v6398
    %6573 = vmatpush.bf16.msra.mxu0 %v6396
    %6574 = vmatmul.bf16.gmra.mxu0 %v6084
    %v6575 = vpop.f32.mrf.mxu0
    %v6576 = vadd.f32 %v6563, %v6575
    %v6577 = vpop.f32.mrf.mxu0
    %6578 = vdwg.mxu0
    %v6579 = vmax.f32 %v6524, 0.0
    %v6580 = vmax.f32 %v6576, 0.0
    %v6581 = vpack.c.bf16 %v6579, %v6579
    %v6582 = vpack.c.bf16 %v6580, %v6580
    %v6583 = vld [vmem:[#allocation11] sm:$0xf]
    %v6584 = vld [vmem:[#allocation11 + $0x4] sm:$0xf]
    %v6585 = vld [vmem:[#allocation11 + $0x8] sm:$0xf]
    %v6586 = vld [vmem:[#allocation11 + $0xc] sm:$0xf]
    %v6587 = vld [vmem:[#allocation11 + $0x10] sm:$0xf]
    %v6588 = vld [vmem:[#allocation11 + $0x14] sm:$0xf]
    %v6589 = vld [vmem:[#allocation11 + $0x18] sm:$0xf]
    %v6590 = vld [vmem:[#allocation11 + $0x1c] sm:$0xf]
    %v6591 = vld [vmem:[#allocation11 + $0x20] sm:$0xf]
    %v6592 = vld [vmem:[#allocation11 + $0x24] sm:$0xf]
    %v6593 = vld [vmem:[#allocation11 + $0x28] sm:$0xf]
    %v6594 = vld [vmem:[#allocation11 + $0x2c] sm:$0xf]
    %v6595 = vld [vmem:[#allocation11 + $0x30] sm:$0xf]
    %v6596 = vld [vmem:[#allocation11 + $0x34] sm:$0xf]
    %v6597 = vld [vmem:[#allocation11 + $0x38] sm:$0xf]
    %v6598 = vld [vmem:[#allocation11 + $0x3c] sm:$0xf]
    %v6599 = vld [vmem:[#allocation11 + $0x40] sm:$0xf]
    %v6600 = vld [vmem:[#allocation11 + $0x44] sm:$0xf]
    %v6601 = vld [vmem:[#allocation11 + $0x48] sm:$0xf]
    %v6602 = vld [vmem:[#allocation11 + $0x4c] sm:$0xf]
    %v6603 = vld [vmem:[#allocation11 + $0x50] sm:$0xf]
    %v6604 = vld [vmem:[#allocation11 + $0x54] sm:$0xf]
    %v6605 = vld [vmem:[#allocation11 + $0x58] sm:$0xf]
    %v6606 = vld [vmem:[#allocation11 + $0x5c] sm:$0xf]
    %v6607 = vld [vmem:[#allocation11 + $0x60] sm:$0xf]
    %v6608 = vld [vmem:[#allocation11 + $0x64] sm:$0xf]
    %v6609 = vld [vmem:[#allocation11 + $0x68] sm:$0xf]
    %v6610 = vld [vmem:[#allocation11 + $0x6c] sm:$0xf]
    %v6611 = vld [vmem:[#allocation11 + $0x70] sm:$0xf]
    %v6612 = vld [vmem:[#allocation11 + $0x74] sm:$0xf]
    %v6613 = vld [vmem:[#allocation11 + $0x78] sm:$0xf]
    %v6614 = vld [vmem:[#allocation11 + $0x7c] sm:$0xf]
    %v6615 = vld [vmem:[#allocation13] sm:$0x1]
    %v6617 = vperm.slane %v6615, 0
    %v6651 = vunpack.c.l.b16 %v6583
    %v6652 = vunpack.c.l.b16 %v6584
    %v6653 = vunpack.c.l.b16 %v6585
    %v6654 = vunpack.c.l.b16 %v6586
    %v6655 = vunpack.c.l.b16 %v6587
    %v6656 = vunpack.c.l.b16 %v6588
    %v6657 = vunpack.c.l.b16 %v6589
    %v6658 = vunpack.c.l.b16 %v6590
    %v6659 = vunpack.c.l.b16 %v6591
    %v6660 = vunpack.c.l.b16 %v6592
    %v6661 = vunpack.c.l.b16 %v6593
    %v6662 = vunpack.c.l.b16 %v6594
    %v6663 = vunpack.c.l.b16 %v6595
    %v6664 = vunpack.c.l.b16 %v6596
    %v6665 = vunpack.c.l.b16 %v6597
    %v6666 = vunpack.c.l.b16 %v6598
    %v6667 = vunpack.c.l.b16 %v6599
    %v6668 = vunpack.c.l.b16 %v6600
    %v6669 = vunpack.c.l.b16 %v6601
    %v6670 = vunpack.c.l.b16 %v6602
    %v6671 = vunpack.c.l.b16 %v6603
    %v6672 = vunpack.c.l.b16 %v6604
    %v6673 = vunpack.c.l.b16 %v6605
    %v6674 = vunpack.c.l.b16 %v6606
    %v6675 = vunpack.c.l.b16 %v6607
    %v6676 = vunpack.c.l.b16 %v6608
    %v6677 = vunpack.c.l.b16 %v6609
    %v6678 = vunpack.c.l.b16 %v6610
    %v6679 = vunpack.c.l.b16 %v6611
    %v6680 = vunpack.c.l.b16 %v6612
    %v6681 = vunpack.c.l.b16 %v6613
    %v6682 = vunpack.c.l.b16 %v6614
    %v6683 = vpack.c.b16 %v6652, %v6651
    %v6684 = vpack.c.b16 %v6654, %v6653
    %v6685 = vpack.c.b16 %v6656, %v6655
    %v6686 = vpack.c.b16 %v6658, %v6657
    %v6687 = vpack.c.b16 %v6660, %v6659
    %v6688 = vpack.c.b16 %v6662, %v6661
    %v6689 = vpack.c.b16 %v6664, %v6663
    %v6690 = vpack.c.b16 %v6666, %v6665
    %v6691 = vpack.c.b16 %v6668, %v6667
    %v6692 = vpack.c.b16 %v6670, %v6669
    %v6693 = vpack.c.b16 %v6672, %v6671
    %v6694 = vpack.c.b16 %v6674, %v6673
    %v6695 = vpack.c.b16 %v6676, %v6675
    %v6696 = vpack.c.b16 %v6678, %v6677
    %v6697 = vpack.c.b16 %v6680, %v6679
    %v6698 = vpack.c.b16 %v6682, %v6681
    %6715 = vmatpush.bf16.msra.mxu0 %v6690
    %6716 = vmatpush.bf16.msra.mxu0 %v6689
    %6717 = vmatpush.bf16.msra.mxu0 %v6688
    %6718 = vmatpush.bf16.msra.mxu0 %v6687
    %6719 = vmatpush.bf16.msra.mxu0 %v6686
    %6720 = vmatpush.bf16.msra.mxu0 %v6685
    %6721 = vmatpush.bf16.msra.mxu0 %v6684
    %6722 = vmatpush.bf16.msra.mxu0 %v6683
    %6723 = vmatmul.bf16.gmra.mxu0 %v6581
    %v6724 = vpop.f32.mrf.mxu0
    %v6725 = vadd.f32 %v6617, %v6724
    %v6726 = vpop.f32.mrf.mxu0
    %6727 = vdwg.mxu0
    %6728 = vmatpush.bf16.msra.mxu0 %v6698
    %6729 = vmatpush.bf16.msra.mxu0 %v6697
    %6730 = vmatpush.bf16.msra.mxu0 %v6696
    %6731 = vmatpush.bf16.msra.mxu0 %v6695
    %6732 = vmatpush.bf16.msra.mxu0 %v6694
    %6733 = vmatpush.bf16.msra.mxu0 %v6693
    %6734 = vmatpush.bf16.msra.mxu0 %v6692
    %6735 = vmatpush.bf16.msra.mxu0 %v6691
    %6736 = vmatmul.bf16.gmra.mxu0 %v6582
    %v6737 = vpop.f32.mrf.mxu0
    %v6738 = vadd.f32 %v6725, %v6737
    %v6739 = vpop.f32.mrf.mxu0
    %6740 = vdwg.mxu0
    %v6741 = vmax.f32 %v6738, 0.0
    %v6742 = vpack.c.bf16 %v6741, %v6741
    %v6743 = vld [vmem:[#allocation14] sm:$0xf]
    %v6744 = vld [vmem:[#allocation14 + $0x4] sm:$0xf]
    %v6745 = vld [vmem:[#allocation14 + $0x8] sm:$0xf]
    %v6746 = vld [vmem:[#allocation14 + $0xc] sm:$0xf]
    %v6747 = vld [vmem:[#allocation14 + $0x10] sm:$0xf]
    %v6748 = vld [vmem:[#allocation14 + $0x14] sm:$0xf]
    %v6749 = vld [vmem:[#allocation14 + $0x18] sm:$0xf]
    %v6750 = vld [vmem:[#allocation14 + $0x1c] sm:$0xf]
    %v6751 = vld [vmem:[#allocation14 + $0x20] sm:$0xf]
    %v6752 = vld [vmem:[#allocation14 + $0x24] sm:$0xf]
    %v6753 = vld [vmem:[#allocation14 + $0x28] sm:$0xf]
    %v6754 = vld [vmem:[#allocation14 + $0x2c] sm:$0xf]
    %v6755 = vld [vmem:[#allocation14 + $0x30] sm:$0xf]
    %v6756 = vld [vmem:[#allocation14 + $0x34] sm:$0xf]
    %v6757 = vld [vmem:[#allocation14 + $0x38] sm:$0xf]
    %v6758 = vld [vmem:[#allocation14 + $0x3c] sm:$0xf]
    %v6759 = vld [vmem:[#allocation16] sm:$0x1]
    %v6761 = vperm.slane %v6759, 0
    %v6779 = vunpack.c.l.b16 %v6743
    %v6780 = vunpack.c.l.b16 %v6744
    %v6781 = vunpack.c.l.b16 %v6745
    %v6782 = vunpack.c.l.b16 %v6746
    %v6783 = vunpack.c.l.b16 %v6747
    %v6784 = vunpack.c.l.b16 %v6748
    %v6785 = vunpack.c.l.b16 %v6749
    %v6786 = vunpack.c.l.b16 %v6750
    %v6787 = vunpack.c.l.b16 %v6751
    %v6788 = vunpack.c.l.b16 %v6752
    %v6789 = vunpack.c.l.b16 %v6753
    %v6790 = vunpack.c.l.b16 %v6754
    %v6791 = vunpack.c.l.b16 %v6755
    %v6792 = vunpack.c.l.b16 %v6756
    %v6793 = vunpack.c.l.b16 %v6757
    %v6794 = vunpack.c.l.b16 %v6758
    %v6795 = vpack.c.b16 %v6780, %v6779
    %v6796 = vpack.c.b16 %v6782, %v6781
    %v6797 = vpack.c.b16 %v6784, %v6783
    %v6798 = vpack.c.b16 %v6786, %v6785
    %v6799 = vpack.c.b16 %v6788, %v6787
    %v6800 = vpack.c.b16 %v6790, %v6789
    %v6801 = vpack.c.b16 %v6792, %v6791
    %v6802 = vpack.c.b16 %v6794, %v6793
    %6811 = vmatpush.bf16.msra.mxu0 %v6802
    %6812 = vmatpush.bf16.msra.mxu0 %v6801
    %6813 = vmatpush.bf16.msra.mxu0 %v6800
    %6814 = vmatpush.bf16.msra.mxu0 %v6799
    %6815 = vmatpush.bf16.msra.mxu0 %v6798
    %6816 = vmatpush.bf16.msra.mxu0 %v6797
    %6817 = vmatpush.bf16.msra.mxu0 %v6796
    %6818 = vmatpush.bf16.msra.mxu0 %v6795
    %6819 = vmatmul.bf16.gmra.mxu0 %v6742
    %v6820 = vpop.f32.mrf.mxu0
    %v6821 = vadd.f32 %v6761, %v6820
    %v6822 = vpop.f32.mrf.mxu0
    %6823 = vdwg.mxu0
    %6824 = vst [vmem:[#allocation17] sm:$0xff] %v6821
    // Predicated region
    $region74: #{tpu_custom_call.1} parent=1 // pred_check
      _
    $region75: #{tpu_custom_call.1} parent=1 // pred_check_branch
      %6826 = sbr.rel (0) target = $region77
    $region76: #{tpu_custom_call.1} parent=1 // pred_region
      %6828 = vsyncadd [#allocation4], 0
      %s6830 = sshll.u32 [#allocation17], 4
      %s6831 = int_to_ptr.vmem [resolvable:$true] %s6830
      %s6832 = sshll.u32 %s9, 4
      %s6833 = int_to_ptr.hbm [resolvable:$true] %s6832
      %6835 = dma.vmem_to_hbm [thread:$0]  %s6831, 128, %s6833, [#allocation4]
    $region77: #{tpu_custom_call.1} parent=1 // pred_fallthru
      _
    // Predicated region
    $region78: #{tpu_custom_call.1} parent=1 // pred_check
      _
    $region79: #{tpu_custom_call.1} parent=1 // pred_check_branch
      %6837 = sbr.rel (0) target = $region81
    $region80: #{tpu_custom_call.1} parent=1 // pred_region
      %6839 = dma.done [#allocation4], 128
    $region81: #{tpu_custom_call.1} parent=1 // pred_fallthru
      _
    %6840 = vsyncpa [#allocation3], 1
    %6841 = vsyncpa [#allocation6], 1
    %6842 = vsyncpa [#allocation9], 1
    %6843 = vsyncpa [#allocation12], 1
    %6844 = vsyncpa [#allocation15], 1
    %6845 = vsyncpa [#allocation4], 1

</llo_original>
